<compile_context>
chip_gen: v5e
topology: v5e:2x2
jax: 0.10.0
libtpu: 0.0.40
codegen_flags: <defaults>
</compile_context>

<pallas_src>
import functools

import numpy as np
import jax
import jax.numpy as jnp
from jax import lax
from jax.experimental import pallas as pl
from jax.experimental.pallas import tpu as pltpu

BN_EPS = 1e-5


# ----------------------------------------------------------------------------
# Host-side helpers for the bilinear upsample (align_corners=False).
# ----------------------------------------------------------------------------
def bilinear_matrix(in_size, out_size):
    """PyTorch F.interpolate(mode='bilinear', align_corners=False) weights."""
    scale = in_size / out_size
    A = np.zeros((out_size, in_size), np.float32)
    for o in range(out_size):
        src = (o + 0.5) * scale - 0.5
        if src < 0.0:
            src = 0.0
        i0 = min(int(np.floor(src)), in_size - 1)
        i1 = min(i0 + 1, in_size - 1)
        w1 = src - i0
        A[o, i0] += 1.0 - w1
        A[o, i1] += w1
    return A


def build_ah_tiles(H, scale, tile_h):
    """Per-H-tile interpolation matrices over the tile's (TH+2)-row conv buffer.

    Buffer row j of tile i holds the conv output of global row i*TH - 1 + j;
    out-of-range rows keep zero weight (edge clamping is baked in)."""
    A = bilinear_matrix(H, H * scale)                     # (H*scale, H)
    nT = H // tile_h
    R = tile_h + 2
    tiles = np.zeros((nT, tile_h * scale, R), np.float32)
    for i in range(nT):
        row0 = i * tile_h * scale
        for oo in range(tile_h * scale):
            for r in range(H):
                w = A[row0 + oo, r]
                if w != 0.0:
                    j = r - (i * tile_h - 1)
                    assert 0 <= j < R, (i, oo, r)
                    tiles[i, oo, j] += w
    return tiles


def _phase_taps(scale):
    """For output column w2 = scale*k + p:
         out[:, w2] = w0 * t[:, clamp(k+d0)] + w1 * t[:, clamp(k+d0+1)]
       (matches align_corners=False; edge clamp handled by clamped shifts)."""
    taps = []
    for p in range(scale):
        src = (p + 0.5) / scale - 0.5
        d0 = int(np.floor(src))                           # -1 or 0
        w1 = float(src - d0)
        taps.append((d0, 1.0 - w1, w1))
    return taps


# ----------------------------------------------------------------------------
# Fused kernel.  One (batch, H-row-tile) pair per grid step.
# ----------------------------------------------------------------------------
def _segmenthead_kernel(*refs, TH, W, Cin, Cmid, Cout, scale):
    f32, bf16 = jnp.float32, jnp.bfloat16
    if scale is None:
        (xm_ref, xt_ref, xb_ref, s1_ref, b1_ref, w1_ref, s2_ref, b2_ref,
         w2_ref, cb_ref, o_ref, xpad_ref, col_ref) = refs
        ah_ref = None
        R, r0 = TH, 1            # conv rows computed / row offset into xpad
    else:
        (xm_ref, xt_ref, xb_ref, s1_ref, b1_ref, w1_ref, s2_ref, b2_ref,
         w2_ref, cb_ref, ah_ref, o_ref, xpad_ref, col_ref) = refs
        R, r0 = TH + 2, 0        # +1 halo conv row each side for the H-interp

    ti = pl.program_id(1)
    n_t = pl.num_programs(1)
    PH = TH + 4                  # xpad rows: 2-row halo above and below

    def bn1_relu_bf16(v):        # BN1 folded + ReLU in f32, single cast to bf16
        return jnp.maximum(v.astype(f32) * s1_ref[...] + b1_ref[...],
                           0.0).astype(bf16)

    # ---- assemble padded BN1+ReLU activation tile (bf16) -------------------
    # xpad row m  <->  global activation row  ti*TH - 2 + m.
    # Conv W zero-padding: columns 0 and W+1 are always real padding.
    xpad_ref[:, 0:1, :] = jnp.zeros((PH, 1, Cin), bf16)
    xpad_ref[:, W + 1:W + 2, :] = jnp.zeros((PH, 1, Cin), bf16)
    # main tile rows
    xpad_ref[2:2 + TH, 1:W + 1, :] = bn1_relu_bf16(xm_ref[0])

    # top 2-row halo: zero padding on the first tile, neighbour rows otherwise
    @pl.when(ti == 0)
    def _():
        xpad_ref[0:2, 1:W + 1, :] = jnp.zeros((2, W, Cin), bf16)

    @pl.when(ti > 0)
    def _():
        xpad_ref[0:2, 1:W + 1, :] = bn1_relu_bf16(xt_ref[0])

    # bottom 2-row halo
    @pl.when(ti == n_t - 1)
    def _():
        xpad_ref[2 + TH:PH, 1:W + 1, :] = jnp.zeros((2, W, Cin), bf16)

    @pl.when(ti < n_t - 1)
    def _():
        xpad_ref[2 + TH:PH, 1:W + 1, :] = bn1_relu_bf16(xb_ref[0])

    # ---- 3x3 conv: single im2col matmul, K = 9*Cin --------------------------
    # TODO(synk): split into 3 row-tap slabs (K=3*Cin, accumulating) if the
    #             slab dominates VMEM at production channel counts (v7x).
    for tap in range(9):
        dh, dw = tap // 3, tap % 3
        col_ref[:, :, tap * Cin:(tap + 1) * Cin] = (
            xpad_ref[r0 + dh:r0 + dh + R, dw:dw + W, :])
    col = col_ref[...].reshape(R * W, 9 * Cin)            # leading-dim merge
    y = jnp.dot(col, w1_ref[...], preferred_element_type=f32)   # (R*W, Cmid)

    # ---- BN2 (folded) + ReLU (f32), then 1x1 conv (+bias) -------------------
    h = jnp.maximum(y * s2_ref[...] + b2_ref[...], 0.0)
    out2 = (jnp.dot(h.astype(bf16), w2_ref[...], preferred_element_type=f32)
            + cb_ref[...])                                # (R*W, Cout) f32

    if scale is None:
        # No upsample: lane-dense store, full f32 precision (no identity matmuls).
        o_ref[0] = out2.reshape(TH, W * Cout).astype(o_ref.dtype)
        return

    # ---- fused bilinear upsample --------------------------------------------
    # W direction: 2-tap VPU lerp per output phase (no kron weight matrix).
    t3 = out2.reshape(R, W, Cout)                         # leading-dim split
    t_m1 = jnp.concatenate([t3[:, :1, :], t3[:, :W - 1, :]], axis=1)   # clamp L
    t_p1 = jnp.concatenate([t3[:, 1:, :], t3[:, W - 1:, :]], axis=1)   # clamp R
    phases = []
    for d0, w0, w1 in _phase_taps(scale):
        a = t_m1 if d0 < 0 else t3
        b = t3 if d0 < 0 else t_p1
        phases.append(a if w1 == 0.0 else (w0 * a + w1 * b))
    # Interleave phases onto the lane axis: lane = (scale*k + p)*Cout + c.
    up_w = jnp.concatenate(phases, axis=-1).reshape(R, W * scale * Cout)

    # H direction: small per-tile matmul with the halo-aware bilinear matrix.
    res = jnp.dot(ah_ref[0], up_w.astype(bf16), preferred_element_type=f32)
    o_ref[0] = res.astype(o_ref.dtype)                    # (TH*s, W2*Cout)


def segmenthead_core(x_nhwc, s1, b1, w1_im2col, s2, b2, w2, cbias,
                     ah_tiles, *, scale, tile_h):
    N, H, W, Cin = x_nhwc.shape
    Cmid = w1_im2col.shape[1]
    Cout = w2.shape[1]
    TH = tile_h
    assert H % TH == 0 and TH % 2 == 0, (H, TH)
    nT = H // TH
    half = TH // 2
    R = TH + 2 if scale is not None else TH

    kernel = functools.partial(_segmenthead_kernel, TH=TH, W=W, Cin=Cin,
                               Cmid=Cmid, Cout=Cout, scale=scale)

    in_specs = [
        # main rows of the tile
        pl.BlockSpec((1, TH, W, Cin), lambda b, i: (b, i, 0, 0)),
        # 2-row halo above (clamped block index; ignored when ti == 0)
        pl.BlockSpec((1, 2, W, Cin),
                     lambda b, i: (b, jnp.maximum(i * half - 1, 0), 0, 0)),
        # 2-row halo below (clamped; ignored on the last tile)
        pl.BlockSpec((1, 2, W, Cin),
                     lambda b, i: (b, jnp.minimum((i + 1) * half, H // 2 - 1),
                                   0, 0)),
        pl.BlockSpec((1, Cin), lambda b, i: (0, 0)),            # s1
        pl.BlockSpec((1, Cin), lambda b, i: (0, 0)),            # b1
        pl.BlockSpec((9 * Cin, Cmid), lambda b, i: (0, 0)),     # w1 im2col bf16
        pl.BlockSpec((1, Cmid), lambda b, i: (0, 0)),           # s2
        pl.BlockSpec((1, Cmid), lambda b, i: (0, 0)),           # b2
        pl.BlockSpec((Cmid, Cout), lambda b, i: (0, 0)),        # w2 bf16
        pl.BlockSpec((1, Cout), lambda b, i: (0, 0)),           # conv2 bias
    ]
    args = [x_nhwc, x_nhwc, x_nhwc, s1, b1, w1_im2col, s2, b2, w2, cbias]

    if scale is None:
        out_shape = jax.ShapeDtypeStruct((N, H, W * Cout), jnp.float32)
        out_specs = pl.BlockSpec((1, TH, W * Cout), lambda b, i: (b, i, 0))
    else:
        in_specs.append(pl.BlockSpec((1, TH * scale, TH + 2),
                                     lambda b, i: (i, 0, 0)))   # per-tile Ah
        args.append(ah_tiles)
        out_shape = jax.ShapeDtypeStruct((N, H * scale, W * scale * Cout),
                                         jnp.float32)
        out_specs = pl.BlockSpec((1, TH * scale, W * scale * Cout),
                                 lambda b, i: (b, i, 0))

    return pl.pallas_call(
        kernel,
        out_shape=out_shape,
        grid=(N, nT),
        in_specs=in_specs,
        out_specs=out_specs,
        scratch_shapes=[
            pltpu.VMEM((TH + 4, W + 2, Cin), jnp.bfloat16),   # padded acts (bf16)
            pltpu.VMEM((R, W, 9 * Cin), jnp.bfloat16),        # im2col slab
        ],
        compiler_params=pltpu.CompilerParams(
            # both axes independent -> v7x can shard row tiles across its 2 TCs
            dimension_semantics=("parallel", "parallel"),
            # explicit scoped-VMEM budget (v5e default is only 16 MiB)
            vmem_limit_bytes=32 * 1024 * 1024,
        ),
    )(*args)


# ----------------------------------------------------------------------------
# Parameter init (inference-mode BN folded), wrapper, pure-JAX reference.
# ----------------------------------------------------------------------------
def init_params(key, inplanes, interplanes, outplanes):
    ks = jax.random.split(key, 11)
    gamma1 = 1.0 + 0.1 * jax.random.normal(ks[0], (inplanes,), jnp.float32)
    beta1 = 0.1 * jax.random.normal(ks[1], (inplanes,), jnp.float32)
    mean1 = 0.1 * jax.random.normal(ks[2], (inplanes,), jnp.float32)
    var1 = jnp.abs(jax.random.normal(ks[3], (inplanes,), jnp.float32)) + 0.5
    gamma2 = 1.0 + 0.1 * jax.random.normal(ks[4], (interplanes,), jnp.float32)
    beta2 = 0.1 * jax.random.normal(ks[5], (interplanes,), jnp.float32)
    mean2 = 0.1 * jax.random.normal(ks[6], (interplanes,), jnp.float32)
    var2 = jnp.abs(jax.random.normal(ks[7], (interplanes,), jnp.float32)) + 0.5
    w1_hwio = 0.1 * jax.random.normal(ks[8], (3, 3, inplanes, interplanes),
                                      jnp.float32)
    w2 = 0.1 * jax.random.normal(ks[9], (interplanes, outplanes), jnp.float32)
    cbias = 0.1 * jax.random.normal(ks[10], (outplanes,), jnp.float32)

    s1 = gamma1 / jnp.sqrt(var1 + BN_EPS)
    b1 = beta1 - mean1 * s1
    s2 = gamma2 / jnp.sqrt(var2 + BN_EPS)
    b2 = beta2 - mean2 * s2
    return dict(
        s1=s1.reshape(1, -1), b1=b1.reshape(1, -1),
        s2=s2.reshape(1, -1), b2=b2.reshape(1, -1),
        w1_hwio=w1_hwio,
        w1_im2col=w1_hwio.reshape(9 * inplanes, interplanes).astype(jnp.bfloat16),
        w2=w2, w2_bf16=w2.astype(jnp.bfloat16),
        cbias=cbias.reshape(1, -1),
    )


def _pick_tile_h(H):
    for th in (32, 16, 8, 4, 2):
        if th <= H and H % th == 0:
            return th
    raise ValueError(f"H={H} must have an even divisor >= 2")


def segmenthead_forward(x_nchw, p, scale_factor=None, tile_h=None):
    N, Cin, H, W = x_nchw.shape
    Cout = p["w2"].shape[1]
    x_nhwc = jnp.transpose(x_nchw, (0, 2, 3, 1)).astype(jnp.float32)
    if tile_h is None:
        tile_h = _pick_tile_h(H)

    ah_tiles = None
    if scale_factor is not None:
        ah_tiles = jnp.asarray(build_ah_tiles(H, scale_factor, tile_h),
                               jnp.bfloat16)

    out = segmenthead_core(x_nhwc, p["s1"], p["b1"], p["w1_im2col"], p["s2"],
                           p["b2"], p["w2_bf16"], p["cbias"], ah_tiles,
                           scale=scale_factor, tile_h=tile_h)
    s = scale_factor or 1
    out = out.reshape(N, H * s, W * s, Cout)     # free: same row-major bytes
    return jnp.transpose(out, (0, 3, 1, 2))      # back to NCHW


def reference_forward(x_nchw, p, scale_factor=None):
    x = jnp.transpose(x_nchw, (0, 2, 3, 1)).astype(jnp.float32)
    a1 = jnp.maximum(x * p["s1"][0] + p["b1"][0], 0.0)
    y = lax.conv_general_dilated(a1, p["w1_hwio"], (1, 1), "SAME",
                                 dimension_numbers=("NHWC", "HWIO", "NHWC"))
    a2 = jnp.maximum(y * p["s2"][0] + p["b2"][0], 0.0)
    out = jnp.einsum("nhwc,co->nhwo", a2, p["w2"]) + p["cbias"][0]
    out = jnp.transpose(out, (0, 3, 1, 2))
    if scale_factor is not None:
        H, W = out.shape[2], out.shape[3]
        Ah = jnp.asarray(bilinear_matrix(H, H * scale_factor))
        Aw = jnp.asarray(bilinear_matrix(W, W * scale_factor))
        out = jnp.einsum("Hh,nchw->ncHw", Ah, out)
        out = jnp.einsum("Ww,nchw->nchW", Aw, out)
    return out


if __name__ == "__main__":
    # segmenthead(inplanes=8, interplanes=16, outplanes=4, scale_factor=2)
    N, Cin, H, W = 2, 8, 16, 16
    Cmid, Cout = 16, 4
    scale_factor = 2

    key = jax.random.PRNGKey(0)
    kx, kp = jax.random.split(key)
    x_nchw = jax.random.normal(kx, (N, Cin, H, W), jnp.float32)
    params = init_params(kp, Cin, Cmid, Cout)

    # Upsample path, 4 row tiles per image (exercises first/interior/last tiles).
    out = jax.block_until_ready(
        segmenthead_forward(x_nchw, params, scale_factor, tile_h=4))
    ref = jax.block_until_ready(reference_forward(x_nchw, params, scale_factor))
    assert out.shape == (N, Cout, H * scale_factor, W * scale_factor), out.shape
    # Tolerance reflects bf16 MXU operands (f32 accumulation) vs. an all-f32 ref.
    np.testing.assert_allclose(np.asarray(out), np.asarray(ref),
                               rtol=3e-2, atol=3e-2)

    # No-upsample path (upsample section skipped entirely at trace time).
    out0 = jax.block_until_ready(
        segmenthead_forward(x_nchw, params, None, tile_h=8))
    ref0 = jax.block_until_ready(reference_forward(x_nchw, params, None))
    assert out0.shape == (N, Cout, H, W), out0.shape
    np.testing.assert_allclose(np.asarray(out0), np.asarray(ref0),
                               rtol=3e-2, atol=3e-2)

    print("KERNEL_OK")
</pallas_src>

<mosaic_0001>
module attributes {stable_mosaic.version = 11 : i64} {
  func.func @_segmenthead_kernel(%arg0: i32, %arg1: i32, %arg2: memref<1x4x16x8xf32, #tpu.memory_space<vmem>>, %arg3: memref<1x2x16x8xf32, #tpu.memory_space<vmem>>, %arg4: memref<1x2x16x8xf32, #tpu.memory_space<vmem>>, %arg5: memref<1x8xf32, #tpu.memory_space<vmem>>, %arg6: memref<1x8xf32, #tpu.memory_space<vmem>>, %arg7: memref<72x16xbf16, #tpu.memory_space<vmem>>, %arg8: memref<1x16xf32, #tpu.memory_space<vmem>>, %arg9: memref<1x16xf32, #tpu.memory_space<vmem>>, %arg10: memref<16x4xbf16, #tpu.memory_space<vmem>>, %arg11: memref<1x4xf32, #tpu.memory_space<vmem>>, %arg12: memref<1x8x6xbf16, #tpu.memory_space<vmem>>, %arg13: memref<1x8x128xf32, #tpu.memory_space<vmem>>, %arg14: memref<8x18x8xbf16, #tpu.memory_space<vmem>>, %arg15: memref<6x16x72xbf16, #tpu.memory_space<vmem>>) attributes {dimension_semantics = [#tpu.dimension_semantics<parallel>, #tpu.dimension_semantics<parallel>], iteration_bounds = array<i64: 2, 4>, scalar_prefetch = 0 : i64, scratch_operands = 2 : i64, tpu.core_type = #tpu.core_type<tc>, window_params = [{transform_indices = @transform_0, window_bounds = array<i64: 1, 4, 16, 8>}, {transform_indices = @transform_1, window_bounds = array<i64: 1, 2, 16, 8>}, {transform_indices = @transform_2, window_bounds = array<i64: 1, 2, 16, 8>}, {pipeline_mode = #tpu.pipeline_mode<synchronous>, transform_indices = @transform_3, window_bounds = array<i64: 1, 8>}, {pipeline_mode = #tpu.pipeline_mode<synchronous>, transform_indices = @transform_4, window_bounds = array<i64: 1, 8>}, {pipeline_mode = #tpu.pipeline_mode<synchronous>, transform_indices = @transform_5, window_bounds = array<i64: 72, 16>}, {pipeline_mode = #tpu.pipeline_mode<synchronous>, transform_indices = @transform_6, window_bounds = array<i64: 1, 16>}, {pipeline_mode = #tpu.pipeline_mode<synchronous>, transform_indices = @transform_7, window_bounds = array<i64: 1, 16>}, {pipeline_mode = #tpu.pipeline_mode<synchronous>, transform_indices = @transform_8, window_bounds = array<i64: 16, 4>}, {pipeline_mode = #tpu.pipeline_mode<synchronous>, transform_indices = @transform_9, window_bounds = array<i64: 1, 4>}, {transform_indices = @transform_10, window_bounds = array<i64: 1, 8, 6>}, {transform_indices = @transform_11, window_bounds = array<i64: 1, 8, 128>}]} {
    %cst = arith.constant 0.000000e+00 : bf16
    %0 = vector.broadcast %cst : bf16 to vector<8x1x8xbf16>
    %c0 = arith.constant 0 : index
    %c0_0 = arith.constant 0 : index
    %c0_1 = arith.constant 0 : index
    %1 = vector.load %arg14[%c0, %c0_0, %c0_1] : memref<8x18x8xbf16, #tpu.memory_space<vmem>>, vector<8x1x8xbf16>
    tpu.vector_store %arg14[%c0, %c0_0, %c0_1], %0 {strides = array<i32>} : memref<8x18x8xbf16, #tpu.memory_space<vmem>>, vector<8x1x8xbf16>,
    %cst_2 = arith.constant 0.000000e+00 : bf16
    %2 = vector.broadcast %cst_2 : bf16 to vector<8x1x8xbf16>
    %c0_3 = arith.constant 0 : index
    %c17 = arith.constant 17 : index
    %c0_4 = arith.constant 0 : index
    %3 = vector.load %arg14[%c0_3, %c17, %c0_4] : memref<8x18x8xbf16, #tpu.memory_space<vmem>>, vector<8x1x8xbf16>
    tpu.vector_store %arg14[%c0_3, %c17, %c0_4], %2 {strides = array<i32>} : memref<8x18x8xbf16, #tpu.memory_space<vmem>>, vector<8x1x8xbf16>,
    %c0_5 = arith.constant 0 : index
    %c0_6 = arith.constant 0 : index
    %c0_7 = arith.constant 0 : index
    %c0_8 = arith.constant 0 : index
    %4 = vector.load %arg2[%c0_5, %c0_6, %c0_7, %c0_8] : memref<1x4x16x8xf32, #tpu.memory_space<vmem>>, vector<1x4x16x8xf32>
    %5 = vector.shape_cast %4 : vector<1x4x16x8xf32> to vector<4x16x8xf32>
    %c0_9 = arith.constant 0 : index
    %c0_10 = arith.constant 0 : index
    %6 = vector.load %arg5[%c0_9, %c0_10] : memref<1x8xf32, #tpu.memory_space<vmem>>, vector<1x8xf32>
    %7 = vector.shape_cast %6 : vector<1x8xf32> to vector<1x1x8xf32>
    %8 = vector.broadcast %7 : vector<1x1x8xf32> to vector<4x16x8xf32>
    %9 = arith.mulf %5, %8 : vector<4x16x8xf32>
    %c0_11 = arith.constant 0 : index
    %c0_12 = arith.constant 0 : index
    %10 = vector.load %arg6[%c0_11, %c0_12] : memref<1x8xf32, #tpu.memory_space<vmem>>, vector<1x8xf32>
    %11 = vector.shape_cast %10 : vector<1x8xf32> to vector<1x1x8xf32>
    %12 = vector.broadcast %11 : vector<1x1x8xf32> to vector<4x16x8xf32>
    %13 = arith.addf %9, %12 : vector<4x16x8xf32>
    %cst_13 = arith.constant 0.000000e+00 : f32
    %14 = vector.broadcast %cst_13 : f32 to vector<4x16x8xf32>
    %15 = arith.maximumf %13, %14 : vector<4x16x8xf32>
    %16 = arith.truncf %15 : vector<4x16x8xf32> to vector<4x16x8xbf16>
    %c2 = arith.constant 2 : index
    %c1 = arith.constant 1 : index
    %c0_14 = arith.constant 0 : index
    %17 = vector.load %arg14[%c2, %c1, %c0_14] : memref<8x18x8xbf16, #tpu.memory_space<vmem>>, vector<4x16x8xbf16>
    tpu.vector_store %arg14[%c2, %c1, %c0_14], %16 {strides = array<i32>} : memref<8x18x8xbf16, #tpu.memory_space<vmem>>, vector<4x16x8xbf16>,
    %c0_i32 = arith.constant 0 : i32
    %18 = arith.cmpi eq, %arg1, %c0_i32 : i32
    %19 = arith.extui %18 : i1 to i32
    %c0_i32_15 = arith.constant 0 : i32
    %20 = arith.cmpi ne, %19, %c0_i32_15 : i32
    scf.if %20 {
      %cst_94 = arith.constant 0.000000e+00 : bf16
      %92 = vector.broadcast %cst_94 : bf16 to vector<2x16x8xbf16>
      %c0_95 = arith.constant 0 : index
      %c1_96 = arith.constant 1 : index
      %c0_97 = arith.constant 0 : index
      %93 = vector.load %arg14[%c0_95, %c1_96, %c0_97] : memref<8x18x8xbf16, #tpu.memory_space<vmem>>, vector<2x16x8xbf16>
      tpu.vector_store %arg14[%c0_95, %c1_96, %c0_97], %92 {strides = array<i32>} : memref<8x18x8xbf16, #tpu.memory_space<vmem>>, vector<2x16x8xbf16>,
    } else {
    }
    %c0_i32_16 = arith.constant 0 : i32
    %21 = arith.cmpi sgt, %arg1, %c0_i32_16 : i32
    %22 = arith.extui %21 : i1 to i32
    %c0_i32_17 = arith.constant 0 : i32
    %23 = arith.cmpi ne, %22, %c0_i32_17 : i32
    scf.if %23 {
      %c0_94 = arith.constant 0 : index
      %c0_95 = arith.constant 0 : index
      %c0_96 = arith.constant 0 : index
      %c0_97 = arith.constant 0 : index
      %92 = vector.load %arg3[%c0_94, %c0_95, %c0_96, %c0_97] : memref<1x2x16x8xf32, #tpu.memory_space<vmem>>, vector<1x2x16x8xf32>
      %93 = vector.shape_cast %92 : vector<1x2x16x8xf32> to vector<2x16x8xf32>
      %c0_98 = arith.constant 0 : index
      %c0_99 = arith.constant 0 : index
      %94 = vector.load %arg5[%c0_98, %c0_99] : memref<1x8xf32, #tpu.memory_space<vmem>>, vector<1x8xf32>
      %95 = vector.shape_cast %94 : vector<1x8xf32> to vector<1x1x8xf32>
      %96 = vector.broadcast %95 : vector<1x1x8xf32> to vector<2x16x8xf32>
      %97 = arith.mulf %93, %96 : vector<2x16x8xf32>
      %c0_100 = arith.constant 0 : index
      %c0_101 = arith.constant 0 : index
      %98 = vector.load %arg6[%c0_100, %c0_101] : memref<1x8xf32, #tpu.memory_space<vmem>>, vector<1x8xf32>
      %99 = vector.shape_cast %98 : vector<1x8xf32> to vector<1x1x8xf32>
      %100 = vector.broadcast %99 : vector<1x1x8xf32> to vector<2x16x8xf32>
      %101 = arith.addf %97, %100 : vector<2x16x8xf32>
      %cst_102 = arith.constant 0.000000e+00 : f32
      %102 = vector.broadcast %cst_102 : f32 to vector<2x16x8xf32>
      %103 = arith.maximumf %101, %102 : vector<2x16x8xf32>
      %104 = arith.truncf %103 : vector<2x16x8xf32> to vector<2x16x8xbf16>
      %c0_103 = arith.constant 0 : index
      %c1_104 = arith.constant 1 : index
      %c0_105 = arith.constant 0 : index
      %105 = vector.load %arg14[%c0_103, %c1_104, %c0_105] : memref<8x18x8xbf16, #tpu.memory_space<vmem>>, vector<2x16x8xbf16>
      tpu.vector_store %arg14[%c0_103, %c1_104, %c0_105], %104 {strides = array<i32>} : memref<8x18x8xbf16, #tpu.memory_space<vmem>>, vector<2x16x8xbf16>,
    } else {
    }
    %c3_i32 = arith.constant 3 : i32
    %24 = arith.cmpi eq, %arg1, %c3_i32 : i32
    %25 = arith.extui %24 : i1 to i32
    %c0_i32_18 = arith.constant 0 : i32
    %26 = arith.cmpi ne, %25, %c0_i32_18 : i32
    scf.if %26 {
      %cst_94 = arith.constant 0.000000e+00 : bf16
      %92 = vector.broadcast %cst_94 : bf16 to vector<2x16x8xbf16>
      %c6 = arith.constant 6 : index
      %c1_95 = arith.constant 1 : index
      %c0_96 = arith.constant 0 : index
      %93 = vector.load %arg14[%c6, %c1_95, %c0_96] : memref<8x18x8xbf16, #tpu.memory_space<vmem>>, vector<2x16x8xbf16>
      tpu.vector_store %arg14[%c6, %c1_95, %c0_96], %92 {strides = array<i32>} : memref<8x18x8xbf16, #tpu.memory_space<vmem>>, vector<2x16x8xbf16>,
    } else {
    }
    %c3_i32_19 = arith.constant 3 : i32
    %27 = arith.cmpi slt, %arg1, %c3_i32_19 : i32
    %28 = arith.extui %27 : i1 to i32
    %c0_i32_20 = arith.constant 0 : i32
    %29 = arith.cmpi ne, %28, %c0_i32_20 : i32
    scf.if %29 {
      %c0_94 = arith.constant 0 : index
      %c0_95 = arith.constant 0 : index
      %c0_96 = arith.constant 0 : index
      %c0_97 = arith.constant 0 : index
      %92 = vector.load %arg4[%c0_94, %c0_95, %c0_96, %c0_97] : memref<1x2x16x8xf32, #tpu.memory_space<vmem>>, vector<1x2x16x8xf32>
      %93 = vector.shape_cast %92 : vector<1x2x16x8xf32> to vector<2x16x8xf32>
      %c0_98 = arith.constant 0 : index
      %c0_99 = arith.constant 0 : index
      %94 = vector.load %arg5[%c0_98, %c0_99] : memref<1x8xf32, #tpu.memory_space<vmem>>, vector<1x8xf32>
      %95 = vector.shape_cast %94 : vector<1x8xf32> to vector<1x1x8xf32>
      %96 = vector.broadcast %95 : vector<1x1x8xf32> to vector<2x16x8xf32>
      %97 = arith.mulf %93, %96 : vector<2x16x8xf32>
      %c0_100 = arith.constant 0 : index
      %c0_101 = arith.constant 0 : index
      %98 = vector.load %arg6[%c0_100, %c0_101] : memref<1x8xf32, #tpu.memory_space<vmem>>, vector<1x8xf32>
      %99 = vector.shape_cast %98 : vector<1x8xf32> to vector<1x1x8xf32>
      %100 = vector.broadcast %99 : vector<1x1x8xf32> to vector<2x16x8xf32>
      %101 = arith.addf %97, %100 : vector<2x16x8xf32>
      %cst_102 = arith.constant 0.000000e+00 : f32
      %102 = vector.broadcast %cst_102 : f32 to vector<2x16x8xf32>
      %103 = arith.maximumf %101, %102 : vector<2x16x8xf32>
      %104 = arith.truncf %103 : vector<2x16x8xf32> to vector<2x16x8xbf16>
      %c6 = arith.constant 6 : index
      %c1_103 = arith.constant 1 : index
      %c0_104 = arith.constant 0 : index
      %105 = vector.load %arg14[%c6, %c1_103, %c0_104] : memref<8x18x8xbf16, #tpu.memory_space<vmem>>, vector<2x16x8xbf16>
      tpu.vector_store %arg14[%c6, %c1_103, %c0_104], %104 {strides = array<i32>} : memref<8x18x8xbf16, #tpu.memory_space<vmem>>, vector<2x16x8xbf16>,
    } else {
    }
    %c0_21 = arith.constant 0 : index
    %c0_22 = arith.constant 0 : index
    %c0_23 = arith.constant 0 : index
    %30 = vector.load %arg14[%c0_21, %c0_22, %c0_23] : memref<8x18x8xbf16, #tpu.memory_space<vmem>>, vector<6x16x8xbf16>
    %c0_24 = arith.constant 0 : index
    %c0_25 = arith.constant 0 : index
    %c0_26 = arith.constant 0 : index
    %31 = vector.load %arg15[%c0_24, %c0_25, %c0_26] : memref<6x16x72xbf16, #tpu.memory_space<vmem>>, vector<6x16x8xbf16>
    tpu.vector_store %arg15[%c0_24, %c0_25, %c0_26], %30 {strides = array<i32>} : memref<6x16x72xbf16, #tpu.memory_space<vmem>>, vector<6x16x8xbf16>,
    %c0_27 = arith.constant 0 : index
    %c1_28 = arith.constant 1 : index
    %c0_29 = arith.constant 0 : index
    %32 = vector.load %arg14[%c0_27, %c1_28, %c0_29] : memref<8x18x8xbf16, #tpu.memory_space<vmem>>, vector<6x16x8xbf16>
    %c0_30 = arith.constant 0 : index
    %c0_31 = arith.constant 0 : index
    %c8 = arith.constant 8 : index
    %33 = vector.load %arg15[%c0_30, %c0_31, %c8] : memref<6x16x72xbf16, #tpu.memory_space<vmem>>, vector<6x16x8xbf16>
    tpu.vector_store %arg15[%c0_30, %c0_31, %c8], %32 {strides = array<i32>} : memref<6x16x72xbf16, #tpu.memory_space<vmem>>, vector<6x16x8xbf16>,
    %c0_32 = arith.constant 0 : index
    %c2_33 = arith.constant 2 : index
    %c0_34 = arith.constant 0 : index
    %34 = vector.load %arg14[%c0_32, %c2_33, %c0_34] : memref<8x18x8xbf16, #tpu.memory_space<vmem>>, vector<6x16x8xbf16>
    %c0_35 = arith.constant 0 : index
    %c0_36 = arith.constant 0 : index
    %c16 = arith.constant 16 : index
    %35 = vector.load %arg15[%c0_35, %c0_36, %c16] : memref<6x16x72xbf16, #tpu.memory_space<vmem>>, vector<6x16x8xbf16>
    tpu.vector_store %arg15[%c0_35, %c0_36, %c16], %34 {strides = array<i32>} : memref<6x16x72xbf16, #tpu.memory_space<vmem>>, vector<6x16x8xbf16>,
    %c1_37 = arith.constant 1 : index
    %c0_38 = arith.constant 0 : index
    %c0_39 = arith.constant 0 : index
    %36 = vector.load %arg14[%c1_37, %c0_38, %c0_39] : memref<8x18x8xbf16, #tpu.memory_space<vmem>>, vector<6x16x8xbf16>
    %c0_40 = arith.constant 0 : index
    %c0_41 = arith.constant 0 : index
    %c24 = arith.constant 24 : index
    %37 = vector.load %arg15[%c0_40, %c0_41, %c24] : memref<6x16x72xbf16, #tpu.memory_space<vmem>>, vector<6x16x8xbf16>
    tpu.vector_store %arg15[%c0_40, %c0_41, %c24], %36 {strides = array<i32>} : memref<6x16x72xbf16, #tpu.memory_space<vmem>>, vector<6x16x8xbf16>,
    %c1_42 = arith.constant 1 : index
    %c1_43 = arith.constant 1 : index
    %c0_44 = arith.constant 0 : index
    %38 = vector.load %arg14[%c1_42, %c1_43, %c0_44] : memref<8x18x8xbf16, #tpu.memory_space<vmem>>, vector<6x16x8xbf16>
    %c0_45 = arith.constant 0 : index
    %c0_46 = arith.constant 0 : index
    %c32 = arith.constant 32 : index
    %39 = vector.load %arg15[%c0_45, %c0_46, %c32] : memref<6x16x72xbf16, #tpu.memory_space<vmem>>, vector<6x16x8xbf16>
    tpu.vector_store %arg15[%c0_45, %c0_46, %c32], %38 {strides = array<i32>} : memref<6x16x72xbf16, #tpu.memory_space<vmem>>, vector<6x16x8xbf16>,
    %c1_47 = arith.constant 1 : index
    %c2_48 = arith.constant 2 : index
    %c0_49 = arith.constant 0 : index
    %40 = vector.load %arg14[%c1_47, %c2_48, %c0_49] : memref<8x18x8xbf16, #tpu.memory_space<vmem>>, vector<6x16x8xbf16>
    %c0_50 = arith.constant 0 : index
    %c0_51 = arith.constant 0 : index
    %c40 = arith.constant 40 : index
    %41 = vector.load %arg15[%c0_50, %c0_51, %c40] : memref<6x16x72xbf16, #tpu.memory_space<vmem>>, vector<6x16x8xbf16>
    tpu.vector_store %arg15[%c0_50, %c0_51, %c40], %40 {strides = array<i32>} : memref<6x16x72xbf16, #tpu.memory_space<vmem>>, vector<6x16x8xbf16>,
    %c2_52 = arith.constant 2 : index
    %c0_53 = arith.constant 0 : index
    %c0_54 = arith.constant 0 : index
    %42 = vector.load %arg14[%c2_52, %c0_53, %c0_54] : memref<8x18x8xbf16, #tpu.memory_space<vmem>>, vector<6x16x8xbf16>
    %c0_55 = arith.constant 0 : index
    %c0_56 = arith.constant 0 : index
    %c48 = arith.constant 48 : index
    %43 = vector.load %arg15[%c0_55, %c0_56, %c48] : memref<6x16x72xbf16, #tpu.memory_space<vmem>>, vector<6x16x8xbf16>
    tpu.vector_store %arg15[%c0_55, %c0_56, %c48], %42 {strides = array<i32>} : memref<6x16x72xbf16, #tpu.memory_space<vmem>>, vector<6x16x8xbf16>,
    %c2_57 = arith.constant 2 : index
    %c1_58 = arith.constant 1 : index
    %c0_59 = arith.constant 0 : index
    %44 = vector.load %arg14[%c2_57, %c1_58, %c0_59] : memref<8x18x8xbf16, #tpu.memory_space<vmem>>, vector<6x16x8xbf16>
    %c0_60 = arith.constant 0 : index
    %c0_61 = arith.constant 0 : index
    %c56 = arith.constant 56 : index
    %45 = vector.load %arg15[%c0_60, %c0_61, %c56] : memref<6x16x72xbf16, #tpu.memory_space<vmem>>, vector<6x16x8xbf16>
    tpu.vector_store %arg15[%c0_60, %c0_61, %c56], %44 {strides = array<i32>} : memref<6x16x72xbf16, #tpu.memory_space<vmem>>, vector<6x16x8xbf16>,
    %c2_62 = arith.constant 2 : index
    %c2_63 = arith.constant 2 : index
    %c0_64 = arith.constant 0 : index
    %46 = vector.load %arg14[%c2_62, %c2_63, %c0_64] : memref<8x18x8xbf16, #tpu.memory_space<vmem>>, vector<6x16x8xbf16>
    %c0_65 = arith.constant 0 : index
    %c0_66 = arith.constant 0 : index
    %c64 = arith.constant 64 : index
    %47 = vector.load %arg15[%c0_65, %c0_66, %c64] : memref<6x16x72xbf16, #tpu.memory_space<vmem>>, vector<6x16x8xbf16>
    tpu.vector_store %arg15[%c0_65, %c0_66, %c64], %46 {strides = array<i32>} : memref<6x16x72xbf16, #tpu.memory_space<vmem>>, vector<6x16x8xbf16>,
    %c0_67 = arith.constant 0 : index
    %c0_68 = arith.constant 0 : index
    %c0_69 = arith.constant 0 : index
    %48 = vector.load %arg15[%c0_67, %c0_68, %c0_69] : memref<6x16x72xbf16, #tpu.memory_space<vmem>>, vector<6x16x72xbf16>
    %49 = vector.shape_cast %48 : vector<6x16x72xbf16> to vector<96x72xbf16>
    %c0_70 = arith.constant 0 : index
    %c0_71 = arith.constant 0 : index
    %50 = vector.load %arg7[%c0_70, %c0_71] : memref<72x16xbf16, #tpu.memory_space<vmem>>, vector<72x16xbf16>
    %cst_72 = arith.constant dense<0.000000e+00> : vector<96x16xf32>
    %51 = tpu.matmul %49, %50, %cst_72 {dimension_numbers = #tpu.dot_dimension_numbers<[1], [0], [0], [1], [0, 0, 1, 1], [], []>} : vector<96x72xbf16>, vector<72x16xbf16>, vector<96x16xf32> -> vector<96x16xf32>
    %c0_73 = arith.constant 0 : index
    %c0_74 = arith.constant 0 : index
    %52 = vector.load %arg8[%c0_73, %c0_74] : memref<1x16xf32, #tpu.memory_space<vmem>>, vector<1x16xf32>
    %53 = vector.broadcast %52 : vector<1x16xf32> to vector<96x16xf32>
    %54 = arith.mulf %51, %53 : vector<96x16xf32>
    %c0_75 = arith.constant 0 : index
    %c0_76 = arith.constant 0 : index
    %55 = vector.load %arg9[%c0_75, %c0_76] : memref<1x16xf32, #tpu.memory_space<vmem>>, vector<1x16xf32>
    %56 = vector.broadcast %55 : vector<1x16xf32> to vector<96x16xf32>
    %57 = arith.addf %54, %56 : vector<96x16xf32>
    %cst_77 = arith.constant 0.000000e+00 : f32
    %58 = vector.broadcast %cst_77 : f32 to vector<96x16xf32>
    %59 = arith.maximumf %57, %58 : vector<96x16xf32>
    %60 = arith.truncf %59 : vector<96x16xf32> to vector<96x16xbf16>
    %c0_78 = arith.constant 0 : index
    %c0_79 = arith.constant 0 : index
    %61 = vector.load %arg10[%c0_78, %c0_79] : memref<16x4xbf16, #tpu.memory_space<vmem>>, vector<16x4xbf16>
    %cst_80 = arith.constant dense<0.000000e+00> : vector<96x4xf32>
    %62 = tpu.matmul %60, %61, %cst_80 {dimension_numbers = #tpu.dot_dimension_numbers<[1], [0], [0], [1], [0, 0, 1, 1], [], []>} : vector<96x16xbf16>, vector<16x4xbf16>, vector<96x4xf32> -> vector<96x4xf32>
    %c0_81 = arith.constant 0 : index
    %c0_82 = arith.constant 0 : index
    %63 = vector.load %arg11[%c0_81, %c0_82] : memref<1x4xf32, #tpu.memory_space<vmem>>, vector<1x4xf32>
    %64 = vector.broadcast %63 : vector<1x4xf32> to vector<96x4xf32>
    %65 = arith.addf %62, %64 : vector<96x4xf32>
    %66 = vector.shape_cast %65 : vector<96x4xf32> to vector<6x16x4xf32>
    %67 = vector.extract_strided_slice %66 {offsets = [0, 0, 0], sizes = [6, 1, 4], strides = [1, 1, 1]} : vector<6x16x4xf32> to vector<6x1x4xf32>
    %68 = vector.extract_strided_slice %66 {offsets = [0, 0, 0], sizes = [6, 15, 4], strides = [1, 1, 1]} : vector<6x16x4xf32> to vector<6x15x4xf32>
    %69 = tpu.concatenate %67, %68 in 1 : vector<6x1x4xf32>, vector<6x15x4xf32> -> vector<6x16x4xf32>
    %70 = vector.extract_strided_slice %66 {offsets = [0, 1, 0], sizes = [6, 15, 4], strides = [1, 1, 1]} : vector<6x16x4xf32> to vector<6x15x4xf32>
    %71 = vector.extract_strided_slice %66 {offsets = [0, 15, 0], sizes = [6, 1, 4], strides = [1, 1, 1]} : vector<6x16x4xf32> to vector<6x1x4xf32>
    %72 = tpu.concatenate %70, %71 in 1 : vector<6x15x4xf32>, vector<6x1x4xf32> -> vector<6x16x4xf32>
    %cst_83 = arith.constant 2.500000e-01 : f32
    %73 = vector.broadcast %cst_83 : f32 to vector<6x16x4xf32>
    %74 = arith.mulf %73, %69 : vector<6x16x4xf32>
    %cst_84 = arith.constant 7.500000e-01 : f32
    %75 = vector.broadcast %cst_84 : f32 to vector<6x16x4xf32>
    %76 = arith.mulf %75, %66 : vector<6x16x4xf32>
    %77 = arith.addf %74, %76 : vector<6x16x4xf32>
    %cst_85 = arith.constant 7.500000e-01 : f32
    %78 = vector.broadcast %cst_85 : f32 to vector<6x16x4xf32>
    %79 = arith.mulf %78, %66 : vector<6x16x4xf32>
    %cst_86 = arith.constant 2.500000e-01 : f32
    %80 = vector.broadcast %cst_86 : f32 to vector<6x16x4xf32>
    %81 = arith.mulf %80, %72 : vector<6x16x4xf32>
    %82 = arith.addf %79, %81 : vector<6x16x4xf32>
    %83 = tpu.concatenate %77, %82 in 2 : vector<6x16x4xf32>, vector<6x16x4xf32> -> vector<6x16x8xf32>
    %84 = vector.shape_cast %83 : vector<6x16x8xf32> to vector<6x128xf32>
    %c0_87 = arith.constant 0 : index
    %c0_88 = arith.constant 0 : index
    %c0_89 = arith.constant 0 : index
    %85 = vector.load %arg12[%c0_87, %c0_88, %c0_89] : memref<1x8x6xbf16, #tpu.memory_space<vmem>>, vector<1x8x6xbf16>
    %86 = vector.shape_cast %85 : vector<1x8x6xbf16> to vector<8x6xbf16>
    %87 = arith.truncf %84 : vector<6x128xf32> to vector<6x128xbf16>
    %cst_90 = arith.constant dense<0.000000e+00> : vector<8x128xf32>
    %88 = tpu.matmul %86, %87, %cst_90 {dimension_numbers = #tpu.dot_dimension_numbers<[1], [0], [0], [1], [0, 0, 1, 1], [], []>} : vector<8x6xbf16>, vector<6x128xbf16>, vector<8x128xf32> -> vector<8x128xf32>
    %c0_91 = arith.constant 0 : index
    %c0_92 = arith.constant 0 : index
    %c0_93 = arith.constant 0 : index
    %89 = vector.load %arg13[%c0_91, %c0_92, %c0_93] : memref<1x8x128xf32, #tpu.memory_space<vmem>>, vector<1x8x128xf32>
    %90 = vector.shape_cast %89 : vector<1x8x128xf32> to vector<8x128xf32>
    %91 = vector.shape_cast %88 : vector<8x128xf32> to vector<1x8x128xf32>
    tpu.vector_store %arg13[%c0_91, %c0_92, %c0_93], %91 {strides = array<i32>} : memref<1x8x128xf32, #tpu.memory_space<vmem>>, vector<1x8x128xf32>,
    return
  }
  func.func @transform_0(%arg0: i32, %arg1: i32) -> (i32, i32, i32, i32) {
    %c0_i32 = arith.constant 0 : i32
    %c0_i32_0 = arith.constant 0 : i32
    %c0_i32_1 = arith.constant 0 : i32
    return %arg0, %arg1, %c0_i32, %c0_i32_0 : i32, i32, i32, i32
  }
  func.func @transform_1(%arg0: i32, %arg1: i32) -> (i32, i32, i32, i32) {
    %c2_i32 = arith.constant 2 : i32
    %0 = arith.muli %arg1, %c2_i32 : i32
    %c1_i32 = arith.constant 1 : i32
    %1 = arith.subi %0, %c1_i32 : i32
    %c0_i32 = arith.constant 0 : i32
    %2 = arith.maxsi %1, %c0_i32 : i32
    %c0_i32_0 = arith.constant 0 : i32
    %c0_i32_1 = arith.constant 0 : i32
    %c0_i32_2 = arith.constant 0 : i32
    return %arg0, %2, %c0_i32_0, %c0_i32_1 : i32, i32, i32, i32
  }
  func.func @transform_2(%arg0: i32, %arg1: i32) -> (i32, i32, i32, i32) {
    %c1_i32 = arith.constant 1 : i32
    %0 = arith.addi %arg1, %c1_i32 : i32
    %c2_i32 = arith.constant 2 : i32
    %1 = arith.muli %0, %c2_i32 : i32
    %c7_i32 = arith.constant 7 : i32
    %2 = arith.minsi %1, %c7_i32 : i32
    %c0_i32 = arith.constant 0 : i32
    %c0_i32_0 = arith.constant 0 : i32
    %c0_i32_1 = arith.constant 0 : i32
    return %arg0, %2, %c0_i32, %c0_i32_0 : i32, i32, i32, i32
  }
  func.func @transform_3(%arg0: i32, %arg1: i32) -> (i32, i32) {
    %c0_i32 = arith.constant 0 : i32
    %c0_i32_0 = arith.constant 0 : i32
    %c0_i32_1 = arith.constant 0 : i32
    return %c0_i32, %c0_i32_0 : i32, i32
  }
  func.func @transform_4(%arg0: i32, %arg1: i32) -> (i32, i32) {
    %c0_i32 = arith.constant 0 : i32
    %c0_i32_0 = arith.constant 0 : i32
    %c0_i32_1 = arith.constant 0 : i32
    return %c0_i32, %c0_i32_0 : i32, i32
  }
  func.func @transform_5(%arg0: i32, %arg1: i32) -> (i32, i32) {
    %c0_i32 = arith.constant 0 : i32
    %c0_i32_0 = arith.constant 0 : i32
    %c0_i32_1 = arith.constant 0 : i32
    return %c0_i32, %c0_i32_0 : i32, i32
  }
  func.func @transform_6(%arg0: i32, %arg1: i32) -> (i32, i32) {
    %c0_i32 = arith.constant 0 : i32
    %c0_i32_0 = arith.constant 0 : i32
    %c0_i32_1 = arith.constant 0 : i32
    return %c0_i32, %c0_i32_0 : i32, i32
  }
  func.func @transform_7(%arg0: i32, %arg1: i32) -> (i32, i32) {
    %c0_i32 = arith.constant 0 : i32
    %c0_i32_0 = arith.constant 0 : i32
    %c0_i32_1 = arith.constant 0 : i32
    return %c0_i32, %c0_i32_0 : i32, i32
  }
  func.func @transform_8(%arg0: i32, %arg1: i32) -> (i32, i32) {
    %c0_i32 = arith.constant 0 : i32
    %c0_i32_0 = arith.constant 0 : i32
    %c0_i32_1 = arith.constant 0 : i32
    return %c0_i32, %c0_i32_0 : i32, i32
  }
  func.func @transform_9(%arg0: i32, %arg1: i32) -> (i32, i32) {
    %c0_i32 = arith.constant 0 : i32
    %c0_i32_0 = arith.constant 0 : i32
    %c0_i32_1 = arith.constant 0 : i32
    return %c0_i32, %c0_i32_0 : i32, i32
  }
  func.func @transform_10(%arg0: i32, %arg1: i32) -> (i32, i32, i32) {
    %c0_i32 = arith.constant 0 : i32
    %c0_i32_0 = arith.constant 0 : i32
    %c0_i32_1 = arith.constant 0 : i32
    return %arg1, %c0_i32, %c0_i32_0 : i32, i32, i32
  }
  func.func @transform_11(%arg0: i32, %arg1: i32) -> (i32, i32, i32) {
    %c0_i32 = arith.constant 0 : i32
    %c0_i32_0 = arith.constant 0 : i32
    return %arg0, %arg1, %c0_i32 : i32, i32, i32
  }
}

</mosaic_0001>

<llo_original>
// kernel: tpu_custom_call.1
$region0: #{tpu_custom_call.1}
  #allocation0 [shape = 'u32[]', space=smem, size = 0x4, offset = 0x4, fixed_abs, tag = 'smem constant byte address 0x4 - core index']
  #allocation1 [shape = 'u32[72,128]{1,0:T(1,128)}', space=vmem, size = 0x9000, scoped, tag = 'internal scratch']
  #allocation2 [shape = 'bf16[8,18,8]{2,1,0:T(8,128)(2,1)}', space=vmem, size = 0xc000, scoped, tag = 'scratch operand']
  #allocation3 [shape = 'bf16[6,16,72]{2,1,0:T(8,128)(2,1)}', space=vmem, size = 0x6000, scoped, tag = 'scratch operand']
  %s0 = inlined_call_operand.vmem [shape: f32[2,16,16,8], index: 0, kind: input, shape index: {}]
  %s1 = inlined_call_operand.vmem [shape: f32[2,16,16,8], index: 1, kind: input, shape index: {}]
  %s2 = inlined_call_operand.vmem [shape: f32[2,16,16,8], index: 2, kind: input, shape index: {}]
  %s3 = inlined_call_operand.vmem [shape: f32[1,8], index: 3, kind: input, shape index: {}]
  %s4 = inlined_call_operand.vmem [shape: f32[1,8], index: 4, kind: input, shape index: {}]
  %s5 = inlined_call_operand.vmem [shape: bf16[72,16], index: 5, kind: input, shape index: {}]
  %s6 = inlined_call_operand.vmem [shape: f32[1,16], index: 6, kind: input, shape index: {}]
  %s7 = inlined_call_operand.vmem [shape: f32[1,16], index: 7, kind: input, shape index: {}]
  %s8 = inlined_call_operand.vmem [shape: bf16[16,4], index: 8, kind: input, shape index: {}]
  %s9 = inlined_call_operand.vmem [shape: f32[1,4], index: 9, kind: input, shape index: {}]
  %s10 = inlined_call_operand.vmem [shape: bf16[4,8,6], index: 10, kind: input, shape index: {}]
  %s11 = inlined_call_operand.hbm [shape: f32[2,32,128], index: 11, kind: output, shape index: {}]
  %s12 = sld [smem:[#allocation0]]
  $region93: #{tpu_custom_call.1} parent=0
    _
  %s14 = ssub.s32 1, %s12
  %s15 = scalar_select 0, %s14, %s12
  $region1: #{tpu_custom_call.1} parent=0
    #allocation4 [shape = 'u8[8192]{0}', space=vmem, size = 0x2000, scoped, tag = 'output window, operand 0']
    #allocation5 [shape = 's32[2]{0}', space=sflag, size = 0x8, scoped, tag = 'scoped memory for tpu_custom_call.1']
    %16 = vsyncpa [#allocation5], 0
    %s17 = scalar_lea.sflag [#allocation5], 1
    %18 = vsyncpa %s17, 0
    loop: start=0, step=1, limit=10
    $region2: #{tpu_custom_call.1} parent=1 // loop_pre_header
      _
    $region3: #{tpu_custom_call.1} parent=1 // loop_header
      %s20 = sphi 0, %s24
      %p21 = scmp.ge.s32.totalorder %s20, 10
      %s27 = sphi 0, %s39
      %s28 = sphi 0, %s35
      %s29 = sphi 0, %s27
      %s30 = sphi 0, %s28
      %s31 = sphi 0, %s29
      %s32 = sphi 0, %s30
      %s44 = sphi 0, %s46
      %s47 = sphi 0, %s44
      %s48 = sphi 0, %s47
      %s64 = sphi 0, %s48
      %s80 = sphi 0, %s82
      %s83 = sphi 0, %s80
      %s84 = sphi 0, %s83
      %s100 = sphi 0, %s84
      %s116 = sphi 0, %s118
      %s119 = sphi 0, %s116
      %s120 = sphi 0, %s119
      %s136 = sphi 0, %s120
      %s140 = sphi 0, %s140
      %s142 = sphi 0, %s140
      %s143 = sphi 0, %s142
      %s157 = sphi 0, %s143
      %s161 = sphi 0, %s161
      %s163 = sphi 0, %s161
      %s164 = sphi 0, %s163
      %s178 = sphi 0, %s164
      %s182 = sphi 0, %s182
      %s184 = sphi 0, %s182
      %s185 = sphi 0, %s184
      %s199 = sphi 0, %s185
      %s203 = sphi 0, %s203
      %s205 = sphi 0, %s203
      %s206 = sphi 0, %s205
      %s220 = sphi 0, %s206
      %s224 = sphi 0, %s224
      %s226 = sphi 0, %s224
      %s227 = sphi 0, %s226
      %s241 = sphi 0, %s227
      %s245 = sphi 0, %s245
      %s247 = sphi 0, %s245
      %s248 = sphi 0, %s247
      %s262 = sphi 0, %s248
      %s266 = sphi 0, %s266
      %s268 = sphi 0, %s266
      %s269 = sphi 0, %s268
      %s283 = sphi 0, %s269
      %s289 = sphi 0, %s291
      %s292 = sphi 0, %s289
      %s293 = sphi 0, %s292
      %s309 = sphi 0, %s293
      %s317 = sphi 0, %s319
      %s320 = sphi 0, %s317
      %s321 = sphi 0, %s320
      %s337 = sphi 0, %s321
    $region4: #{tpu_custom_call.1} parent=1 // loop_header_branch
      %23 = sbr.rel (%p21) target = $region8
    $region5: #{tpu_custom_call.1} parent=1 // loop_body
      %s25 = ssub.s32 %s20, 1
      %s26 = ssub.s32 %s20, 2
      %s33 = sadd.s32 1, %s28
      %p34 = scmp.ge.s32.totalorder %s33, 4
      %s35 = scalar_select %p34, 0, %s33
      %s36 = sadd.s32 1, %s27
      %s37 = scalar_select %p34, %s36, %s27
      %p38 = scmp.ge.s32.totalorder %s37, 2
      %s39 = scalar_select %p38, 0, %s37
      %s40 = ssub.s32 %s27, %s39
      %s41 = ssub.s32 %s28, %s35
      %s42 = sor.u32 %s40, %s41
      %p43 = scmp.eq.s32.totalorder %s42, 0
      %s45 = sadd.s32 %s44, 1
      %s46 = scalar_select %p43, %s44, %s45
      %p49 = pneg %p43
      %p50 = scmp.eq.s32.totalorder %s20, 7
      %p51 = por %p49, %p50
      %p52 = scmp.ne.s32.totalorder %s44, %s47
      %p53 = scmp.eq.s32.totalorder %s20, 0
      %p54 = por %p52, %p53
      %p55 = scmp.ne.s32.totalorder %s44, %s47
      %p56 = scmp.eq.s32.totalorder %s25, 7
      %p57 = por %p55, %p56
      %p58 = scmp.ne.s32.totalorder %s47, %s48
      %p59 = scmp.eq.s32.totalorder %s25, 0
      %p60 = por %p58, %p59
      %p61 = scmp.ne.s32.totalorder %s47, %s48
      %p62 = scmp.eq.s32.totalorder %s26, 7
      %p63 = por %p61, %p62
      %p65 = scmp.ne.s32.totalorder %s48, %s64
      %p66 = scmp.eq.s32.totalorder %s26, 0
      %p67 = por %p65, %p66
      %s68 = smul.u32 %s28, 2
      %s69 = ssub.s32 %s68, 1
      %p70 = scmp.gt.s32.totalorder %s69, 0
      %s71 = scalar_select %p70, %s69, 0
      %s72 = smul.u32 %s35, 2
      %s73 = ssub.s32 %s72, 1
      %p74 = scmp.gt.s32.totalorder %s73, 0
      %s75 = scalar_select %p74, %s73, 0
      %s76 = ssub.s32 %s27, %s39
      %s77 = ssub.s32 %s71, %s75
      %s78 = sor.u32 %s76, %s77
      %p79 = scmp.eq.s32.totalorder %s78, 0
      %s81 = sadd.s32 %s80, 1
      %s82 = scalar_select %p79, %s80, %s81
      %p85 = pneg %p79
      %p86 = scmp.eq.s32.totalorder %s20, 7
      %p87 = por %p85, %p86
      %p88 = scmp.ne.s32.totalorder %s80, %s83
      %p89 = scmp.eq.s32.totalorder %s20, 0
      %p90 = por %p88, %p89
      %p91 = scmp.ne.s32.totalorder %s80, %s83
      %p92 = scmp.eq.s32.totalorder %s25, 7
      %p93 = por %p91, %p92
      %p94 = scmp.ne.s32.totalorder %s83, %s84
      %p95 = scmp.eq.s32.totalorder %s25, 0
      %p96 = por %p94, %p95
      %p97 = scmp.ne.s32.totalorder %s83, %s84
      %p98 = scmp.eq.s32.totalorder %s26, 7
      %p99 = por %p97, %p98
      %p101 = scmp.ne.s32.totalorder %s84, %s100
      %p102 = scmp.eq.s32.totalorder %s26, 0
      %p103 = por %p101, %p102
      %s104 = sadd.s32 %s28, 1
      %s105 = smul.u32 %s104, 2
      %p106 = scmp.lt.s32.totalorder %s105, 7
      %s107 = scalar_select %p106, %s105, 7
      %s108 = sadd.s32 %s35, 1
      %s109 = smul.u32 %s108, 2
      %p110 = scmp.lt.s32.totalorder %s109, 7
      %s111 = scalar_select %p110, %s109, 7
      %s112 = ssub.s32 %s27, %s39
      %s113 = ssub.s32 %s107, %s111
      %s114 = sor.u32 %s112, %s113
      %p115 = scmp.eq.s32.totalorder %s114, 0
      %s117 = sadd.s32 %s116, 1
      %s118 = scalar_select %p115, %s116, %s117
      %p121 = pneg %p115
      %p122 = scmp.eq.s32.totalorder %s20, 7
      %p123 = por %p121, %p122
      %p124 = scmp.ne.s32.totalorder %s116, %s119
      %p125 = scmp.eq.s32.totalorder %s20, 0
      %p126 = por %p124, %p125
      %p127 = scmp.ne.s32.totalorder %s116, %s119
      %p128 = scmp.eq.s32.totalorder %s25, 7
      %p129 = por %p127, %p128
      %p130 = scmp.ne.s32.totalorder %s119, %s120
      %p131 = scmp.eq.s32.totalorder %s25, 0
      %p132 = por %p130, %p131
      %p133 = scmp.ne.s32.totalorder %s119, %s120
      %p134 = scmp.eq.s32.totalorder %s26, 7
      %p135 = por %p133, %p134
      %p137 = scmp.ne.s32.totalorder %s120, %s136
      %p138 = scmp.eq.s32.totalorder %s26, 0
      %p139 = por %p137, %p138
      %s141 = sadd.s32 %s140, 1
      %p144 = scmp.eq.s32.totalorder %s20, 7
      %p145 = scmp.ne.s32.totalorder %s140, %s142
      %p146 = scmp.eq.s32.totalorder %s20, 0
      %p147 = por %p145, %p146
      %p148 = scmp.ne.s32.totalorder %s140, %s142
      %p149 = scmp.eq.s32.totalorder %s25, 7
      %p150 = por %p148, %p149
      %p151 = scmp.ne.s32.totalorder %s142, %s143
      %p152 = scmp.eq.s32.totalorder %s25, 0
      %p153 = por %p151, %p152
      %p154 = scmp.ne.s32.totalorder %s142, %s143
      %p155 = scmp.eq.s32.totalorder %s26, 7
      %p156 = por %p154, %p155
      %p158 = scmp.ne.s32.totalorder %s143, %s157
      %p159 = scmp.eq.s32.totalorder %s26, 0
      %p160 = por %p158, %p159
      %s162 = sadd.s32 %s161, 1
      %p165 = scmp.eq.s32.totalorder %s20, 7
      %p166 = scmp.ne.s32.totalorder %s161, %s163
      %p167 = scmp.eq.s32.totalorder %s20, 0
      %p168 = por %p166, %p167
      %p169 = scmp.ne.s32.totalorder %s161, %s163
      %p170 = scmp.eq.s32.totalorder %s25, 7
      %p171 = por %p169, %p170
      %p172 = scmp.ne.s32.totalorder %s163, %s164
      %p173 = scmp.eq.s32.totalorder %s25, 0
      %p174 = por %p172, %p173
      %p175 = scmp.ne.s32.totalorder %s163, %s164
      %p176 = scmp.eq.s32.totalorder %s26, 7
      %p177 = por %p175, %p176
      %p179 = scmp.ne.s32.totalorder %s164, %s178
      %p180 = scmp.eq.s32.totalorder %s26, 0
      %p181 = por %p179, %p180
      %s183 = sadd.s32 %s182, 1
      %p186 = scmp.eq.s32.totalorder %s20, 7
      %p187 = scmp.ne.s32.totalorder %s182, %s184
      %p188 = scmp.eq.s32.totalorder %s20, 0
      %p189 = por %p187, %p188
      %p190 = scmp.ne.s32.totalorder %s182, %s184
      %p191 = scmp.eq.s32.totalorder %s25, 7
      %p192 = por %p190, %p191
      %p193 = scmp.ne.s32.totalorder %s184, %s185
      %p194 = scmp.eq.s32.totalorder %s25, 0
      %p195 = por %p193, %p194
      %p196 = scmp.ne.s32.totalorder %s184, %s185
      %p197 = scmp.eq.s32.totalorder %s26, 7
      %p198 = por %p196, %p197
      %p200 = scmp.ne.s32.totalorder %s185, %s199
      %p201 = scmp.eq.s32.totalorder %s26, 0
      %p202 = por %p200, %p201
      %s204 = sadd.s32 %s203, 1
      %p207 = scmp.eq.s32.totalorder %s20, 7
      %p208 = scmp.ne.s32.totalorder %s203, %s205
      %p209 = scmp.eq.s32.totalorder %s20, 0
      %p210 = por %p208, %p209
      %p211 = scmp.ne.s32.totalorder %s203, %s205
      %p212 = scmp.eq.s32.totalorder %s25, 7
      %p213 = por %p211, %p212
      %p214 = scmp.ne.s32.totalorder %s205, %s206
      %p215 = scmp.eq.s32.totalorder %s25, 0
      %p216 = por %p214, %p215
      %p217 = scmp.ne.s32.totalorder %s205, %s206
      %p218 = scmp.eq.s32.totalorder %s26, 7
      %p219 = por %p217, %p218
      %p221 = scmp.ne.s32.totalorder %s206, %s220
      %p222 = scmp.eq.s32.totalorder %s26, 0
      %p223 = por %p221, %p222
      %s225 = sadd.s32 %s224, 1
      %p228 = scmp.eq.s32.totalorder %s20, 7
      %p229 = scmp.ne.s32.totalorder %s224, %s226
      %p230 = scmp.eq.s32.totalorder %s20, 0
      %p231 = por %p229, %p230
      %p232 = scmp.ne.s32.totalorder %s224, %s226
      %p233 = scmp.eq.s32.totalorder %s25, 7
      %p234 = por %p232, %p233
      %p235 = scmp.ne.s32.totalorder %s226, %s227
      %p236 = scmp.eq.s32.totalorder %s25, 0
      %p237 = por %p235, %p236
      %p238 = scmp.ne.s32.totalorder %s226, %s227
      %p239 = scmp.eq.s32.totalorder %s26, 7
      %p240 = por %p238, %p239
      %p242 = scmp.ne.s32.totalorder %s227, %s241
      %p243 = scmp.eq.s32.totalorder %s26, 0
      %p244 = por %p242, %p243
      %s246 = sadd.s32 %s245, 1
      %p249 = scmp.eq.s32.totalorder %s20, 7
      %p250 = scmp.ne.s32.totalorder %s245, %s247
      %p251 = scmp.eq.s32.totalorder %s20, 0
      %p252 = por %p250, %p251
      %p253 = scmp.ne.s32.totalorder %s245, %s247
      %p254 = scmp.eq.s32.totalorder %s25, 7
      %p255 = por %p253, %p254
      %p256 = scmp.ne.s32.totalorder %s247, %s248
      %p257 = scmp.eq.s32.totalorder %s25, 0
      %p258 = por %p256, %p257
      %p259 = scmp.ne.s32.totalorder %s247, %s248
      %p260 = scmp.eq.s32.totalorder %s26, 7
      %p261 = por %p259, %p260
      %p263 = scmp.ne.s32.totalorder %s248, %s262
      %p264 = scmp.eq.s32.totalorder %s26, 0
      %p265 = por %p263, %p264
      %s267 = sadd.s32 %s266, 1
      %p270 = scmp.eq.s32.totalorder %s20, 7
      %p271 = scmp.ne.s32.totalorder %s266, %s268
      %p272 = scmp.eq.s32.totalorder %s20, 0
      %p273 = por %p271, %p272
      %p274 = scmp.ne.s32.totalorder %s266, %s268
      %p275 = scmp.eq.s32.totalorder %s25, 7
      %p276 = por %p274, %p275
      %p277 = scmp.ne.s32.totalorder %s268, %s269
      %p278 = scmp.eq.s32.totalorder %s25, 0
      %p279 = por %p277, %p278
      %p280 = scmp.ne.s32.totalorder %s268, %s269
      %p281 = scmp.eq.s32.totalorder %s26, 7
      %p282 = por %p280, %p281
      %p284 = scmp.ne.s32.totalorder %s269, %s283
      %p285 = scmp.eq.s32.totalorder %s26, 0
      %p286 = por %p284, %p285
      %s287 = ssub.s32 %s28, %s35
      %p288 = scmp.eq.s32.totalorder %s287, 0
      %s290 = sadd.s32 %s289, 1
      %s291 = scalar_select %p288, %s289, %s290
      %p294 = pneg %p288
      %p295 = scmp.eq.s32.totalorder %s20, 7
      %p296 = por %p294, %p295
      %p297 = scmp.ne.s32.totalorder %s289, %s292
      %p298 = scmp.eq.s32.totalorder %s20, 0
      %p299 = por %p297, %p298
      %p300 = scmp.ne.s32.totalorder %s289, %s292
      %p301 = scmp.eq.s32.totalorder %s25, 7
      %p302 = por %p300, %p301
      %p303 = scmp.ne.s32.totalorder %s292, %s293
      %p304 = scmp.eq.s32.totalorder %s25, 0
      %p305 = por %p303, %p304
      %p306 = scmp.ne.s32.totalorder %s292, %s293
      %p307 = scmp.eq.s32.totalorder %s26, 7
      %p308 = por %p306, %p307
      %p310 = scmp.ne.s32.totalorder %s293, %s309
      %p311 = scmp.eq.s32.totalorder %s26, 0
      %p312 = por %p310, %p311
      %s313 = ssub.s32 %s27, %s39
      %s314 = ssub.s32 %s28, %s35
      %s315 = sor.u32 %s313, %s314
      %p316 = scmp.eq.s32.totalorder %s315, 0
      %s318 = sadd.s32 %s317, 1
      %s319 = scalar_select %p316, %s317, %s318
      %p322 = pneg %p316
      %p323 = scmp.eq.s32.totalorder %s20, 7
      %p324 = por %p322, %p323
      %p325 = scmp.ne.s32.totalorder %s317, %s320
      %p326 = scmp.eq.s32.totalorder %s20, 0
      %p327 = por %p325, %p326
      %p328 = scmp.ne.s32.totalorder %s317, %s320
      %p329 = scmp.eq.s32.totalorder %s25, 7
      %p330 = por %p328, %p329
      %p331 = scmp.ne.s32.totalorder %s320, %s321
      %p332 = scmp.eq.s32.totalorder %s25, 0
      %p333 = por %p331, %p332
      %p334 = scmp.ne.s32.totalorder %s320, %s321
      %p335 = scmp.eq.s32.totalorder %s26, 7
      %p336 = por %p334, %p335
      %p338 = scmp.ne.s32.totalorder %s321, %s337
      %p339 = scmp.eq.s32.totalorder %s26, 0
      %p340 = por %p338, %p339
      %p341 = scmp.le.s32.totalorder 1, %s20
      %p342 = scmp.lt.s32.totalorder %s20, 9
      %p343 = pnand %p341, %p342
      %p344 = pneg %p343
      // Predicated region
      $region9: #{tpu_custom_call.1} parent=5 // pred_check
        _
      $region10: #{tpu_custom_call.1} parent=5 // pred_check_branch
        %346 = sbr.rel (%p343) target = $region12
      $region11: #{tpu_custom_call.1} parent=5 // pred_region
        %s347 = ssub.s32 %s20, 1
        // Predicated region
        $region13: #{tpu_custom_call.1} parent=11 // pred_check
          %p348 = pneg %p153
        $region14: #{tpu_custom_call.1} parent=11 // pred_check_branch
          %350 = sbr.rel (%p348) target = $region16
        $region15: #{tpu_custom_call.1} parent=11 // pred_region
          _
        $region16: #{tpu_custom_call.1} parent=11 // pred_fallthru
          _
        // Predicated region
        $region17: #{tpu_custom_call.1} parent=11 // pred_check
          %p351 = pneg %p174
        $region18: #{tpu_custom_call.1} parent=11 // pred_check_branch
          %353 = sbr.rel (%p351) target = $region20
        $region19: #{tpu_custom_call.1} parent=11 // pred_region
          _
        $region20: #{tpu_custom_call.1} parent=11 // pred_fallthru
          _
        // Predicated region
        $region21: #{tpu_custom_call.1} parent=11 // pred_check
          %p354 = pneg %p195
        $region22: #{tpu_custom_call.1} parent=11 // pred_check_branch
          %356 = sbr.rel (%p354) target = $region24
        $region23: #{tpu_custom_call.1} parent=11 // pred_region
          _
        $region24: #{tpu_custom_call.1} parent=11 // pred_fallthru
          _
        // Predicated region
        $region25: #{tpu_custom_call.1} parent=11 // pred_check
          %p357 = pneg %p216
        $region26: #{tpu_custom_call.1} parent=11 // pred_check_branch
          %359 = sbr.rel (%p357) target = $region28
        $region27: #{tpu_custom_call.1} parent=11 // pred_region
          _
        $region28: #{tpu_custom_call.1} parent=11 // pred_fallthru
          _
        // Predicated region
        $region29: #{tpu_custom_call.1} parent=11 // pred_check
          %p360 = pneg %p237
        $region30: #{tpu_custom_call.1} parent=11 // pred_check_branch
          %362 = sbr.rel (%p360) target = $region32
        $region31: #{tpu_custom_call.1} parent=11 // pred_region
          _
        $region32: #{tpu_custom_call.1} parent=11 // pred_fallthru
          _
        // Predicated region
        $region33: #{tpu_custom_call.1} parent=11 // pred_check
          %p363 = pneg %p258
        $region34: #{tpu_custom_call.1} parent=11 // pred_check_branch
          %365 = sbr.rel (%p363) target = $region36
        $region35: #{tpu_custom_call.1} parent=11 // pred_region
          _
        $region36: #{tpu_custom_call.1} parent=11 // pred_fallthru
          _
        // Predicated region
        $region37: #{tpu_custom_call.1} parent=11 // pred_check
          %p366 = pneg %p279
        $region38: #{tpu_custom_call.1} parent=11 // pred_check_branch
          %368 = sbr.rel (%p366) target = $region40
        $region39: #{tpu_custom_call.1} parent=11 // pred_region
          _
        $region40: #{tpu_custom_call.1} parent=11 // pred_fallthru
          _
      $region12: #{tpu_custom_call.1} parent=5 // pred_fallthru
        _
      %p369 = scmp.lt.s32.totalorder %s20, 8
      // Predicated region
      $region41: #{tpu_custom_call.1} parent=5 // pred_check
        %p370 = pneg %p369
      $region42: #{tpu_custom_call.1} parent=5 // pred_check_branch
        %372 = sbr.rel (%p370) target = $region44
      $region43: #{tpu_custom_call.1} parent=5 // pred_region
        // Predicated region
        $region45: #{tpu_custom_call.1} parent=43 // pred_check
          %p373 = pneg %p54
        $region46: #{tpu_custom_call.1} parent=43 // pred_check_branch
          %375 = sbr.rel (%p373) target = $region48
        $region47: #{tpu_custom_call.1} parent=43 // pred_region
          %s376 = smul.u32 4, %s28
          %p377 = scmp.lt.s32.totalorder %s27, 1
          %s378 = scalar_select %p377, %s27, 1
          %p379 = scmp.lt.s32.totalorder %s376, 15
          %s380 = scalar_select %p379, %s376, 15
          %s381 = smul.addr %s380, 2
          %s382 = smul.addr %s378, 32
          %s383 = sadd.s32 %s381, %s382
          %s384 = smul.addr %s383, 8
          %s385 = scalar_lea.vmem %s0, %s384
          %s386 = smul.u32 4, %s28
        $region48: #{tpu_custom_call.1} parent=43 // pred_fallthru
          _
        // Predicated region
        $region49: #{tpu_custom_call.1} parent=43 // pred_check
          %p387 = pneg %p90
        $region50: #{tpu_custom_call.1} parent=43 // pred_check_branch
          %389 = sbr.rel (%p387) target = $region52
        $region51: #{tpu_custom_call.1} parent=43 // pred_region
          %s390 = smul.u32 %s28, 2
          %s391 = ssub.s32 %s390, 1
          %p392 = scmp.gt.s32.totalorder %s391, 0
          %s393 = scalar_select %p392, %s391, 0
          %s394 = smul.u32 2, %s393
          %p395 = scmp.lt.s32.totalorder %s27, 1
          %s396 = scalar_select %p395, %s27, 1
          %p397 = scmp.lt.s32.totalorder %s394, 15
          %s398 = scalar_select %p397, %s394, 15
          %s399 = smul.addr %s398, 2
          %s400 = smul.addr %s396, 32
          %s401 = sadd.s32 %s399, %s400
          %s402 = smul.addr %s401, 8
          %s403 = scalar_lea.vmem %s1, %s402
          %s404 = smul.u32 %s28, 2
          %s405 = ssub.s32 %s404, 1
          %p406 = scmp.gt.s32.totalorder %s405, 0
          %s407 = scalar_select %p406, %s405, 0
          %s408 = smul.u32 2, %s407
        $region52: #{tpu_custom_call.1} parent=43 // pred_fallthru
          _
        // Predicated region
        $region53: #{tpu_custom_call.1} parent=43 // pred_check
          %p409 = pneg %p126
        $region54: #{tpu_custom_call.1} parent=43 // pred_check_branch
          %411 = sbr.rel (%p409) target = $region56
        $region55: #{tpu_custom_call.1} parent=43 // pred_region
          %s412 = sadd.s32 %s28, 1
          %s413 = smul.u32 %s412, 2
          %p414 = scmp.lt.s32.totalorder %s413, 7
          %s415 = scalar_select %p414, %s413, 7
          %s416 = smul.u32 2, %s415
          %p417 = scmp.lt.s32.totalorder %s27, 1
          %s418 = scalar_select %p417, %s27, 1
          %p419 = scmp.lt.s32.totalorder %s416, 15
          %s420 = scalar_select %p419, %s416, 15
          %s421 = smul.addr %s420, 2
          %s422 = smul.addr %s418, 32
          %s423 = sadd.s32 %s421, %s422
          %s424 = smul.addr %s423, 8
          %s425 = scalar_lea.vmem %s2, %s424
          %s426 = sadd.s32 %s28, 1
          %s427 = smul.u32 %s426, 2
          %p428 = scmp.lt.s32.totalorder %s427, 7
          %s429 = scalar_select %p428, %s427, 7
          %s430 = smul.u32 2, %s429
        $region56: #{tpu_custom_call.1} parent=43 // pred_fallthru
          _
        // Predicated region
        $region57: #{tpu_custom_call.1} parent=43 // pred_check
          %p431 = pneg %p299
        $region58: #{tpu_custom_call.1} parent=43 // pred_check_branch
          %433 = sbr.rel (%p431) target = $region60
        $region59: #{tpu_custom_call.1} parent=43 // pred_region
          %p434 = scmp.lt.s32.totalorder %s28, 3
          %s435 = scalar_select %p434, %s28, 3
          %s436 = smul.addr %s435, 4
          %s437 = scalar_lea.vmem %s10, %s436
        $region60: #{tpu_custom_call.1} parent=43 // pred_fallthru
          _
      $region44: #{tpu_custom_call.1} parent=5 // pred_fallthru
        _
      %p438 = scmp.le.s32.totalorder 1, %s20
      %p439 = scmp.lt.s32.totalorder %s20, 9
      %p440 = pnand %p438, %p439
      %p441 = pneg %p440
      // Predicated region
      $region61: #{tpu_custom_call.1} parent=5 // pred_check
        _
      $region62: #{tpu_custom_call.1} parent=5 // pred_check_branch
        %443 = sbr.rel (%p440) target = $region64
      $region63: #{tpu_custom_call.1} parent=5 // pred_region
        %s444 = ssub.s32 %s20, 1
        %s445 = smul.u32 4, %s30
        %p446 = scmp.lt.s32.totalorder %s29, 1
        %s447 = scalar_select %p446, %s29, 1
        %p448 = scmp.lt.s32.totalorder %s445, 15
        %s449 = scalar_select %p448, %s445, 15
        %s450 = smul.addr %s449, 2
        %s451 = smul.addr %s447, 32
        %s452 = sadd.s32 %s450, %s451
        %s453 = smul.addr %s452, 8
        %s454 = scalar_lea.vmem %s0, %s453
        %p455 = pneg %p60
        %p456 = pneg %p57
        %s457 = smul.u32 %s30, 2
        %s458 = ssub.s32 %s457, 1
        %p459 = scmp.gt.s32.totalorder %s458, 0
        %s460 = scalar_select %p459, %s458, 0
        %s461 = smul.u32 2, %s460
        %p462 = scmp.lt.s32.totalorder %s29, 1
        %s463 = scalar_select %p462, %s29, 1
        %p464 = scmp.lt.s32.totalorder %s461, 15
        %s465 = scalar_select %p464, %s461, 15
        %s466 = smul.addr %s465, 2
        %s467 = smul.addr %s463, 32
        %s468 = sadd.s32 %s466, %s467
        %s469 = smul.addr %s468, 8
        %s470 = scalar_lea.vmem %s1, %s469
        %p471 = pneg %p96
        %p472 = pneg %p93
        %s473 = sadd.s32 %s30, 1
        %s474 = smul.u32 %s473, 2
        %p475 = scmp.lt.s32.totalorder %s474, 7
        %s476 = scalar_select %p475, %s474, 7
        %s477 = smul.u32 2, %s476
        %p478 = scmp.lt.s32.totalorder %s29, 1
        %s479 = scalar_select %p478, %s29, 1
        %p480 = scmp.lt.s32.totalorder %s477, 15
        %s481 = scalar_select %p480, %s477, 15
        %s482 = smul.addr %s481, 2
        %s483 = smul.addr %s479, 32
        %s484 = sadd.s32 %s482, %s483
        %s485 = smul.addr %s484, 8
        %s486 = scalar_lea.vmem %s2, %s485
        %p487 = pneg %p132
        %p488 = pneg %p129
        %p489 = pneg %p153
        %p490 = pneg %p150
        %p491 = pneg %p174
        %p492 = pneg %p171
        %p493 = pneg %p195
        %p494 = pneg %p192
        %p495 = pneg %p216
        %p496 = pneg %p213
        %p497 = pneg %p237
        %p498 = pneg %p234
        %p499 = pneg %p258
        %p500 = pneg %p255
        %p501 = pneg %p279
        %p502 = pneg %p276
        %p503 = scmp.lt.s32.totalorder %s30, 3
        %s504 = scalar_select %p503, %s30, 3
        %s505 = smul.addr %s504, 4
        %s506 = scalar_lea.vmem %s10, %s505
        %p507 = pneg %p305
        %p508 = pneg %p302
        %p509 = pneg %p333
        %p510 = pneg %p330
        %s511 = sand.u32 %s320, 1
        %s512 = scalar_lea.sflag [#allocation5], %s511
        %s513 = sand.u32 %s320, 1
        %s514 = smul.addr %s513, 8
        %s515 = scalar_lea.vmem [#allocation4], %s514
        %s516 = smul.u32 4, %s30
        %p517 = scmp.lt.s32.totalorder %s29, 1
        %s518 = scalar_select %p517, %s29, 1
        %p519 = scmp.lt.s32.totalorder %s516, 15
        %s520 = scalar_select %p519, %s516, 15
        %s521 = smul.addr %s520, 2
        %s522 = smul.addr %s518, 32
        %s523 = sadd.s32 %s521, %s522
        %s524 = smul.addr %s523, 8
        %s525 = scalar_lea.vmem %s0, %s524
        %s526 = smul.u32 4, %s30
        %s527 = smul.u32 %s30, 2
        %s528 = ssub.s32 %s527, 1
        %p529 = scmp.gt.s32.totalorder %s528, 0
        %s530 = scalar_select %p529, %s528, 0
        %s531 = smul.u32 2, %s530
        %p532 = scmp.lt.s32.totalorder %s29, 1
        %s533 = scalar_select %p532, %s29, 1
        %p534 = scmp.lt.s32.totalorder %s531, 15
        %s535 = scalar_select %p534, %s531, 15
        %s536 = smul.addr %s535, 2
        %s537 = smul.addr %s533, 32
        %s538 = sadd.s32 %s536, %s537
        %s539 = smul.addr %s538, 8
        %s540 = scalar_lea.vmem %s1, %s539
        %s541 = smul.u32 %s30, 2
        %s542 = ssub.s32 %s541, 1
        %p543 = scmp.gt.s32.totalorder %s542, 0
        %s544 = scalar_select %p543, %s542, 0
        %s545 = smul.u32 2, %s544
        %s546 = sadd.s32 %s30, 1
        %s547 = smul.u32 %s546, 2
        %p548 = scmp.lt.s32.totalorder %s547, 7
        %s549 = scalar_select %p548, %s547, 7
        %s550 = smul.u32 2, %s549
        %p551 = scmp.lt.s32.totalorder %s29, 1
        %s552 = scalar_select %p551, %s29, 1
        %p553 = scmp.lt.s32.totalorder %s550, 15
        %s554 = scalar_select %p553, %s550, 15
        %s555 = smul.addr %s554, 2
        %s556 = smul.addr %s552, 32
        %s557 = sadd.s32 %s555, %s556
        %s558 = smul.addr %s557, 8
        %s559 = scalar_lea.vmem %s2, %s558
        %s560 = sadd.s32 %s30, 1
        %s561 = smul.u32 %s560, 2
        %p562 = scmp.lt.s32.totalorder %s561, 7
        %s563 = scalar_select %p562, %s561, 7
        %s564 = smul.u32 2, %s563
        %p565 = scmp.lt.s32.totalorder %s30, 3
        %s566 = scalar_select %p565, %s30, 3
        %s567 = smul.addr %s566, 4
        %s568 = scalar_lea.vmem %s10, %s567
        %vm570 = vcmask 57344
        %vm571 = vsmask.f32 256
        %vm572 = vmand %vm570, %vm571
        %v573 = vld [vmem:[#allocation2] sm:$0x1]
        %v574 = vsel %vm572, 0, %v573
        %575 = vst [vmem:[#allocation2] sm:$0x1] %v574
        %v576 = vld [vmem:[#allocation2 + $0xc] sm:$0x1]
        %v577 = vsel %vm572, 0, %v576
        %578 = vst [vmem:[#allocation2 + $0xc] sm:$0x1] %v577
        %v579 = vld [vmem:[#allocation2 + $0x18] sm:$0x1]
        %v580 = vsel %vm572, 0, %v579
        %581 = vst [vmem:[#allocation2 + $0x18] sm:$0x1] %v580
        %v582 = vld [vmem:[#allocation2 + $0x24] sm:$0x1]
        %v583 = vsel %vm572, 0, %v582
        %584 = vst [vmem:[#allocation2 + $0x24] sm:$0x1] %v583
        %v585 = vld [vmem:[#allocation2 + $0x30] sm:$0x1]
        %v586 = vsel %vm572, 0, %v585
        %587 = vst [vmem:[#allocation2 + $0x30] sm:$0x1] %v586
        %v588 = vld [vmem:[#allocation2 + $0x3c] sm:$0x1]
        %v589 = vsel %vm572, 0, %v588
        %590 = vst [vmem:[#allocation2 + $0x3c] sm:$0x1] %v589
        %v591 = vld [vmem:[#allocation2 + $0x48] sm:$0x1]
        %v592 = vsel %vm572, 0, %v591
        %593 = vst [vmem:[#allocation2 + $0x48] sm:$0x1] %v592
        %v594 = vld [vmem:[#allocation2 + $0x54] sm:$0x1]
        %v595 = vsel %vm572, 0, %v594
        %596 = vst [vmem:[#allocation2 + $0x54] sm:$0x1] %v595
        %vm597 = vsmask.f32 7938
        %vm598 = vmand %vm570, %vm597
        %v599 = vld [vmem:[#allocation2 + $0x8] sm:$0x1]
        %v600 = vsel %vm598, 0, %v599
        %601 = vst [vmem:[#allocation2 + $0x8] sm:$0x1] %v600
        %v602 = vld [vmem:[#allocation2 + $0x14] sm:$0x1]
        %v603 = vsel %vm598, 0, %v602
        %604 = vst [vmem:[#allocation2 + $0x14] sm:$0x1] %v603
        %v605 = vld [vmem:[#allocation2 + $0x20] sm:$0x1]
        %v606 = vsel %vm598, 0, %v605
        %607 = vst [vmem:[#allocation2 + $0x20] sm:$0x1] %v606
        %v608 = vld [vmem:[#allocation2 + $0x2c] sm:$0x1]
        %v609 = vsel %vm598, 0, %v608
        %610 = vst [vmem:[#allocation2 + $0x2c] sm:$0x1] %v609
        %v611 = vld [vmem:[#allocation2 + $0x38] sm:$0x1]
        %v612 = vsel %vm598, 0, %v611
        %613 = vst [vmem:[#allocation2 + $0x38] sm:$0x1] %v612
        %v614 = vld [vmem:[#allocation2 + $0x44] sm:$0x1]
        %v615 = vsel %vm598, 0, %v614
        %616 = vst [vmem:[#allocation2 + $0x44] sm:$0x1] %v615
        %v617 = vld [vmem:[#allocation2 + $0x50] sm:$0x1]
        %v618 = vsel %vm598, 0, %v617
        %619 = vst [vmem:[#allocation2 + $0x50] sm:$0x1] %v618
        %v620 = vld [vmem:[#allocation2 + $0x5c] sm:$0x1]
        %v621 = vsel %vm598, 0, %v620
        %622 = vst [vmem:[#allocation2 + $0x5c] sm:$0x1] %v621
        %v623 = vld [vmem:[%s525] sm:$0xff]
        %v624 = vld [vmem:[%s525 + $0x8] sm:$0xff]
        %v625 = vld [vmem:[%s525 + $0x10] sm:$0xff]
        %v626 = vld [vmem:[%s525 + $0x18] sm:$0xff]
        %v627 = vld [vmem:[%s525 + $0x20] sm:$0xff]
        %v628 = vld [vmem:[%s525 + $0x28] sm:$0xff]
        %v629 = vld [vmem:[%s525 + $0x30] sm:$0xff]
        %v630 = vld [vmem:[%s525 + $0x38] sm:$0xff]
        %v631 = vld [vmem:[%s3] sm:$0x1]
        %v633 = vperm.slane %v631, 0
        %v635 = vmul.f32 %v623, %v633
        %v636 = vmul.f32 %v624, %v633
        %v637 = vmul.f32 %v625, %v633
        %v638 = vmul.f32 %v626, %v633
        %v639 = vmul.f32 %v627, %v633
        %v640 = vmul.f32 %v628, %v633
        %v641 = vmul.f32 %v629, %v633
        %v642 = vmul.f32 %v630, %v633
        %v643 = vld [vmem:[%s4] sm:$0x1]
        %v645 = vperm.slane %v643, 0
        %v647 = vadd.f32 %v635, %v645
        %v648 = vadd.f32 %v636, %v645
        %v649 = vadd.f32 %v637, %v645
        %v650 = vadd.f32 %v638, %v645
        %v651 = vadd.f32 %v639, %v645
        %v652 = vadd.f32 %v640, %v645
        %v653 = vadd.f32 %v641, %v645
        %v654 = vadd.f32 %v642, %v645
        %v655 = vmax.f32 %v647, 0.0
        %v656 = vmax.f32 %v648, 0.0
        %v657 = vmax.f32 %v649, 0.0
        %v658 = vmax.f32 %v650, 0.0
        %v659 = vmax.f32 %v651, 0.0
        %v660 = vmax.f32 %v652, 0.0
        %v661 = vmax.f32 %v653, 0.0
        %v662 = vmax.f32 %v654, 0.0
        %v663 = vpack.c.bf16 %v655, %v655
        %v664 = vpack.c.bf16 %v656, %v656
        %v665 = vpack.c.bf16 %v657, %v657
        %v666 = vpack.c.bf16 %v658, %v658
        %v667 = vpack.c.bf16 %v659, %v659
        %v668 = vpack.c.bf16 %v660, %v660
        %v669 = vpack.c.bf16 %v661, %v661
        %v670 = vpack.c.bf16 %v662, %v662
        %vm671 = vsmask.f32 4368
        %vm672 = vmor %vm571, %vm671
        %v674 = vshrl.u32 %v663, 16
        %v676 = vrot.slane %v674, 7
        %v677 = vshll.u32 %v663, 16
        %v679 = vor.u32 %v676, %v677
        %v680 = vrot.slane %v676, 4
        %v682 = vshrl.u32 %v664, 16
        %v684 = vrot.slane %v682, 7
        %v685 = vshll.u32 %v664, 16
        %v687 = vor.u32 %v684, %v685
        %v688 = vsel %vm672, %v680, %v687
        %v689 = vrot.slane %v684, 4
        %v691 = vshrl.u32 %v665, 16
        %v693 = vrot.slane %v691, 7
        %v694 = vshll.u32 %v665, 16
        %v696 = vor.u32 %v693, %v694
        %v697 = vrot.slane %v693, 4
        %v699 = vshrl.u32 %v666, 16
        %v701 = vrot.slane %v699, 7
        %v702 = vshll.u32 %v666, 16
        %v704 = vor.u32 %v701, %v702
        %v705 = vsel %vm672, %v697, %v704
        %v706 = vrot.slane %v701, 4
        %v708 = vshrl.u32 %v667, 16
        %v710 = vrot.slane %v708, 7
        %v711 = vshll.u32 %v667, 16
        %v713 = vor.u32 %v710, %v711
        %v714 = vrot.slane %v710, 4
        %v716 = vshrl.u32 %v668, 16
        %v718 = vrot.slane %v716, 7
        %v719 = vshll.u32 %v668, 16
        %v721 = vor.u32 %v718, %v719
        %v722 = vsel %vm672, %v714, %v721
        %v723 = vrot.slane %v718, 4
        %v725 = vshrl.u32 %v669, 16
        %v727 = vrot.slane %v725, 7
        %v728 = vshll.u32 %v669, 16
        %v730 = vor.u32 %v727, %v728
        %v731 = vrot.slane %v727, 4
        %v733 = vshrl.u32 %v670, 16
        %v735 = vrot.slane %v733, 7
        %v736 = vshll.u32 %v670, 16
        %v738 = vor.u32 %v735, %v736
        %v739 = vsel %vm672, %v731, %v738
        %v740 = vrot.slane %v735, 4
        %s753 = scalar_lea.vmem [#allocation2], 24
        %vm754 = vcmask 60416
        %vm755 = vmand %vm754, %vm597
        %v756 = vld [vmem:[%s753] sm:$0xf]
        %v757 = vsel %vm755, %v679, %v756
        %758 = vst [vmem:[%s753] sm:$0xf] %v757
        %vm759 = vcmask 60416
        %760 = vst.msk [vmem:[%s753 + $0x4] sm:$0xf] %vm759, %v688
        %v761 = vld [vmem:[%s753 + $0x8] sm:$0x1]
        %v762 = vsel %vm572, %v689, %v761
        %763 = vst [vmem:[%s753 + $0x8] sm:$0x1] %v762
        %v764 = vld [vmem:[%s753 + $0xc] sm:$0xf]
        %v765 = vsel %vm755, %v696, %v764
        %766 = vst [vmem:[%s753 + $0xc] sm:$0xf] %v765
        %767 = vst.msk [vmem:[%s753 + $0x10] sm:$0xf] %vm759, %v705
        %v768 = vld [vmem:[%s753 + $0x14] sm:$0x1]
        %v769 = vsel %vm572, %v706, %v768
        %770 = vst [vmem:[%s753 + $0x14] sm:$0x1] %v769
        %v771 = vld [vmem:[%s753 + $0x18] sm:$0xf]
        %v772 = vsel %vm755, %v713, %v771
        %773 = vst [vmem:[%s753 + $0x18] sm:$0xf] %v772
        %774 = vst.msk [vmem:[%s753 + $0x1c] sm:$0xf] %vm759, %v722
        %v775 = vld [vmem:[%s753 + $0x20] sm:$0x1]
        %v776 = vsel %vm572, %v723, %v775
        %777 = vst [vmem:[%s753 + $0x20] sm:$0x1] %v776
        %v778 = vld [vmem:[%s753 + $0x24] sm:$0xf]
        %v779 = vsel %vm755, %v730, %v778
        %780 = vst [vmem:[%s753 + $0x24] sm:$0xf] %v779
        %781 = vst.msk [vmem:[%s753 + $0x28] sm:$0xf] %vm759, %v739
        %v782 = vld [vmem:[%s753 + $0x2c] sm:$0x1]
        %v783 = vsel %vm572, %v740, %v782
        %784 = vst [vmem:[%s753 + $0x2c] sm:$0x1] %v783
        %p785 = scmp.eq.s32.totalorder %s30, 0
        // Predicated region
        $region65: #{tpu_custom_call.1} parent=63 // pred_check
          %p786 = pneg %p785
        $region66: #{tpu_custom_call.1} parent=63 // pred_check_branch
          %788 = sbr.rel (%p786) target = $region68
        $region67: #{tpu_custom_call.1} parent=63 // pred_region
          %v789 = vld [vmem:[#allocation2] sm:$0xf]
          %v790 = vsel %vm755, 0, %v789
          %791 = vst [vmem:[#allocation2] sm:$0xf] %v790
          %792 = vst.msk [vmem:[#allocation2 + $0x4] sm:$0xf] %vm759, 0
          %v793 = vld [vmem:[#allocation2 + $0x8] sm:$0x1]
          %v794 = vsel %vm572, 0, %v793
          %795 = vst [vmem:[#allocation2 + $0x8] sm:$0x1] %v794
          %v796 = vld [vmem:[#allocation2 + $0xc] sm:$0xf]
          %v797 = vsel %vm755, 0, %v796
          %798 = vst [vmem:[#allocation2 + $0xc] sm:$0xf] %v797
          %799 = vst.msk [vmem:[#allocation2 + $0x10] sm:$0xf] %vm759, 0
          %v800 = vld [vmem:[#allocation2 + $0x14] sm:$0x1]
          %v801 = vsel %vm572, 0, %v800
          %802 = vst [vmem:[#allocation2 + $0x14] sm:$0x1] %v801
        $region68: #{tpu_custom_call.1} parent=63 // pred_fallthru
          _
        %p803 = scmp.gt.s32.totalorder %s30, 0
        // Predicated region
        $region69: #{tpu_custom_call.1} parent=63 // pred_check
          %p804 = pneg %p803
        $region70: #{tpu_custom_call.1} parent=63 // pred_check_branch
          %806 = sbr.rel (%p804) target = $region72
        $region71: #{tpu_custom_call.1} parent=63 // pred_region
          %v807 = vld [vmem:[%s540] sm:$0xff]
          %v808 = vld [vmem:[%s540 + $0x8] sm:$0xff]
          %v809 = vld [vmem:[%s540 + $0x10] sm:$0xff]
          %v810 = vld [vmem:[%s540 + $0x18] sm:$0xff]
          %v811 = vld [vmem:[%s3] sm:$0x1]
          %v813 = vperm.slane %v811, 0
          %v815 = vmul.f32 %v807, %v813
          %v816 = vmul.f32 %v808, %v813
          %v817 = vmul.f32 %v809, %v813
          %v818 = vmul.f32 %v810, %v813
          %v819 = vld [vmem:[%s4] sm:$0x1]
          %v821 = vperm.slane %v819, 0
          %v823 = vadd.f32 %v815, %v821
          %v824 = vadd.f32 %v816, %v821
          %v825 = vadd.f32 %v817, %v821
          %v826 = vadd.f32 %v818, %v821
          %v827 = vmax.f32 %v823, 0.0
          %v828 = vmax.f32 %v824, 0.0
          %v829 = vmax.f32 %v825, 0.0
          %v830 = vmax.f32 %v826, 0.0
          %v831 = vpack.c.bf16 %v827, %v827
          %v832 = vpack.c.bf16 %v828, %v828
          %v833 = vpack.c.bf16 %v829, %v829
          %v834 = vpack.c.bf16 %v830, %v830
          %v836 = vshrl.u32 %v831, 16
          %v838 = vrot.slane %v836, 7
          %v839 = vshll.u32 %v831, 16
          %v841 = vor.u32 %v838, %v839
          %v842 = vrot.slane %v838, 4
          %v844 = vshrl.u32 %v832, 16
          %v846 = vrot.slane %v844, 7
          %v847 = vshll.u32 %v832, 16
          %v849 = vor.u32 %v846, %v847
          %v850 = vsel %vm672, %v842, %v849
          %v851 = vrot.slane %v846, 4
          %v853 = vshrl.u32 %v833, 16
          %v855 = vrot.slane %v853, 7
          %v856 = vshll.u32 %v833, 16
          %v858 = vor.u32 %v855, %v856
          %v859 = vrot.slane %v855, 4
          %v861 = vshrl.u32 %v834, 16
          %v863 = vrot.slane %v861, 7
          %v864 = vshll.u32 %v834, 16
          %v866 = vor.u32 %v863, %v864
          %v867 = vsel %vm672, %v859, %v866
          %v868 = vrot.slane %v863, 4
          %v875 = vld [vmem:[#allocation2] sm:$0xf]
          %v876 = vsel %vm755, %v841, %v875
          %877 = vst [vmem:[#allocation2] sm:$0xf] %v876
          %878 = vst.msk [vmem:[#allocation2 + $0x4] sm:$0xf] %vm759, %v850
          %v879 = vld [vmem:[#allocation2 + $0x8] sm:$0x1]
          %v880 = vsel %vm572, %v851, %v879
          %881 = vst [vmem:[#allocation2 + $0x8] sm:$0x1] %v880
          %v882 = vld [vmem:[#allocation2 + $0xc] sm:$0xf]
          %v883 = vsel %vm755, %v858, %v882
          %884 = vst [vmem:[#allocation2 + $0xc] sm:$0xf] %v883
          %885 = vst.msk [vmem:[#allocation2 + $0x10] sm:$0xf] %vm759, %v867
          %v886 = vld [vmem:[#allocation2 + $0x14] sm:$0x1]
          %v887 = vsel %vm572, %v868, %v886
          %888 = vst [vmem:[#allocation2 + $0x14] sm:$0x1] %v887
        $region72: #{tpu_custom_call.1} parent=63 // pred_fallthru
          _
        %p889 = scmp.eq.s32.totalorder %s30, 3
        // Predicated region
        $region73: #{tpu_custom_call.1} parent=63 // pred_check
          %p890 = pneg %p889
        $region74: #{tpu_custom_call.1} parent=63 // pred_check_branch
          %892 = sbr.rel (%p890) target = $region76
        $region75: #{tpu_custom_call.1} parent=63 // pred_region
          %s893 = scalar_lea.vmem [#allocation2], 72
          %v894 = vld [vmem:[%s893] sm:$0xf]
          %v895 = vsel %vm755, 0, %v894
          %896 = vst [vmem:[%s893] sm:$0xf] %v895
          %897 = vst.msk [vmem:[%s893 + $0x4] sm:$0xf] %vm759, 0
          %v898 = vld [vmem:[%s893 + $0x8] sm:$0x1]
          %v899 = vsel %vm572, 0, %v898
          %900 = vst [vmem:[%s893 + $0x8] sm:$0x1] %v899
          %v901 = vld [vmem:[%s893 + $0xc] sm:$0xf]
          %v902 = vsel %vm755, 0, %v901
          %903 = vst [vmem:[%s893 + $0xc] sm:$0xf] %v902
          %904 = vst.msk [vmem:[%s893 + $0x10] sm:$0xf] %vm759, 0
          %v905 = vld [vmem:[%s893 + $0x14] sm:$0x1]
          %v906 = vsel %vm572, 0, %v905
          %907 = vst [vmem:[%s893 + $0x14] sm:$0x1] %v906
        $region76: #{tpu_custom_call.1} parent=63 // pred_fallthru
          _
        %p908 = scmp.lt.s32.totalorder %s30, 3
        // Predicated region
        $region77: #{tpu_custom_call.1} parent=63 // pred_check
          %p909 = pneg %p908
        $region78: #{tpu_custom_call.1} parent=63 // pred_check_branch
          %911 = sbr.rel (%p909) target = $region80
        $region79: #{tpu_custom_call.1} parent=63 // pred_region
          %v912 = vld [vmem:[%s559] sm:$0xff]
          %v913 = vld [vmem:[%s559 + $0x8] sm:$0xff]
          %v914 = vld [vmem:[%s559 + $0x10] sm:$0xff]
          %v915 = vld [vmem:[%s559 + $0x18] sm:$0xff]
          %v916 = vld [vmem:[%s3] sm:$0x1]
          %v918 = vperm.slane %v916, 0
          %v920 = vmul.f32 %v912, %v918
          %v921 = vmul.f32 %v913, %v918
          %v922 = vmul.f32 %v914, %v918
          %v923 = vmul.f32 %v915, %v918
          %v924 = vld [vmem:[%s4] sm:$0x1]
          %v926 = vperm.slane %v924, 0
          %v928 = vadd.f32 %v920, %v926
          %v929 = vadd.f32 %v921, %v926
          %v930 = vadd.f32 %v922, %v926
          %v931 = vadd.f32 %v923, %v926
          %v932 = vmax.f32 %v928, 0.0
          %v933 = vmax.f32 %v929, 0.0
          %v934 = vmax.f32 %v930, 0.0
          %v935 = vmax.f32 %v931, 0.0
          %v936 = vpack.c.bf16 %v932, %v932
          %v937 = vpack.c.bf16 %v933, %v933
          %v938 = vpack.c.bf16 %v934, %v934
          %v939 = vpack.c.bf16 %v935, %v935
          %v941 = vshrl.u32 %v936, 16
          %v943 = vrot.slane %v941, 7
          %v944 = vshll.u32 %v936, 16
          %v946 = vor.u32 %v943, %v944
          %v947 = vrot.slane %v943, 4
          %v949 = vshrl.u32 %v937, 16
          %v951 = vrot.slane %v949, 7
          %v952 = vshll.u32 %v937, 16
          %v954 = vor.u32 %v951, %v952
          %v955 = vsel %vm672, %v947, %v954
          %v956 = vrot.slane %v951, 4
          %v958 = vshrl.u32 %v938, 16
          %v960 = vrot.slane %v958, 7
          %v961 = vshll.u32 %v938, 16
          %v963 = vor.u32 %v960, %v961
          %v964 = vrot.slane %v960, 4
          %v966 = vshrl.u32 %v939, 16
          %v968 = vrot.slane %v966, 7
          %v969 = vshll.u32 %v939, 16
          %v971 = vor.u32 %v968, %v969
          %v972 = vsel %vm672, %v964, %v971
          %v973 = vrot.slane %v968, 4
          %s980 = scalar_lea.vmem [#allocation2], 72
          %v981 = vld [vmem:[%s980] sm:$0xf]
          %v982 = vsel %vm755, %v946, %v981
          %983 = vst [vmem:[%s980] sm:$0xf] %v982
          %984 = vst.msk [vmem:[%s980 + $0x4] sm:$0xf] %vm759, %v955
          %v985 = vld [vmem:[%s980 + $0x8] sm:$0x1]
          %v986 = vsel %vm572, %v956, %v985
          %987 = vst [vmem:[%s980 + $0x8] sm:$0x1] %v986
          %v988 = vld [vmem:[%s980 + $0xc] sm:$0xf]
          %v989 = vsel %vm755, %v963, %v988
          %990 = vst [vmem:[%s980 + $0xc] sm:$0xf] %v989
          %991 = vst.msk [vmem:[%s980 + $0x10] sm:$0xf] %vm759, %v972
          %v992 = vld [vmem:[%s980 + $0x14] sm:$0x1]
          %v993 = vsel %vm572, %v973, %v992
          %994 = vst [vmem:[%s980 + $0x14] sm:$0x1] %v993
        $region80: #{tpu_custom_call.1} parent=63 // pred_fallthru
          _
        %v995 = vld [vmem:[#allocation2] sm:$0xf]
        %v996 = vld [vmem:[#allocation2 + $0x4] sm:$0xf]
        %v997 = vld [vmem:[#allocation2 + $0xc] sm:$0xf]
        %v998 = vld [vmem:[#allocation2 + $0x10] sm:$0xf]
        %v999 = vld [vmem:[#allocation2 + $0x18] sm:$0xf]
        %v1000 = vld [vmem:[#allocation2 + $0x1c] sm:$0xf]
        %v1001 = vld [vmem:[#allocation2 + $0x24] sm:$0xf]
        %v1002 = vld [vmem:[#allocation2 + $0x28] sm:$0xf]
        %v1003 = vld [vmem:[#allocation2 + $0x30] sm:$0xf]
        %v1004 = vld [vmem:[#allocation2 + $0x34] sm:$0xf]
        %v1005 = vld [vmem:[#allocation2 + $0x3c] sm:$0xf]
        %v1006 = vld [vmem:[#allocation2 + $0x40] sm:$0xf]
        %1007 = vst.msk [vmem:[#allocation3] sm:$0xf] %vm759, %v995
        %1008 = vst.msk [vmem:[#allocation3 + $0x4] sm:$0xf] %vm759, %v996
        %1009 = vst.msk [vmem:[#allocation3 + $0x8] sm:$0xf] %vm759, %v997
        %1010 = vst.msk [vmem:[#allocation3 + $0xc] sm:$0xf] %vm759, %v998
        %1011 = vst.msk [vmem:[#allocation3 + $0x10] sm:$0xf] %vm759, %v999
        %1012 = vst.msk [vmem:[#allocation3 + $0x14] sm:$0xf] %vm759, %v1000
        %1013 = vst.msk [vmem:[#allocation3 + $0x18] sm:$0xf] %vm759, %v1001
        %1014 = vst.msk [vmem:[#allocation3 + $0x1c] sm:$0xf] %vm759, %v1002
        %1015 = vst.msk [vmem:[#allocation3 + $0x20] sm:$0xf] %vm759, %v1003
        %1016 = vst.msk [vmem:[#allocation3 + $0x24] sm:$0xf] %vm759, %v1004
        %1017 = vst.msk [vmem:[#allocation3 + $0x28] sm:$0xf] %vm759, %v1005
        %1018 = vst.msk [vmem:[#allocation3 + $0x2c] sm:$0xf] %vm759, %v1006
        %v1019 = vld [vmem:[#allocation2] sm:$0xf]
        %v1020 = vld [vmem:[#allocation2 + $0x4] sm:$0xf]
        %v1021 = vld [vmem:[#allocation2 + $0x8] sm:$0x1]
        %v1022 = vld [vmem:[#allocation2 + $0xc] sm:$0xf]
        %v1023 = vld [vmem:[#allocation2 + $0x10] sm:$0xf]
        %v1024 = vld [vmem:[#allocation2 + $0x14] sm:$0x1]
        %v1025 = vld [vmem:[#allocation2 + $0x18] sm:$0xf]
        %v1026 = vld [vmem:[#allocation2 + $0x1c] sm:$0xf]
        %v1027 = vld [vmem:[#allocation2 + $0x20] sm:$0x1]
        %v1028 = vld [vmem:[#allocation2 + $0x24] sm:$0xf]
        %v1029 = vld [vmem:[#allocation2 + $0x28] sm:$0xf]
        %v1030 = vld [vmem:[#allocation2 + $0x2c] sm:$0x1]
        %v1031 = vld [vmem:[#allocation2 + $0x30] sm:$0xf]
        %v1032 = vld [vmem:[#allocation2 + $0x34] sm:$0xf]
        %v1033 = vld [vmem:[#allocation2 + $0x38] sm:$0x1]
        %v1034 = vld [vmem:[#allocation2 + $0x3c] sm:$0xf]
        %v1035 = vld [vmem:[#allocation2 + $0x40] sm:$0xf]
        %v1036 = vld [vmem:[#allocation2 + $0x44] sm:$0x1]
        %vm1037 = vsmask.f32 3328
        %vm1038 = vsmask.f32 7440
        %vm1039 = vmor %vm1037, %vm1038
        %v1041 = vshrl.u32 %v1019, 16
        %v1043 = vrot.slane %v1041, 4
        %v1044 = vshll.u32 %v1019, 16
        %v1046 = vrot.slane %v1044, 5
        %v1047 = vor.u32 %v1043, %v1046
        %v1048 = vrot.slane %v1047, 4
        %v1050 = vshll.u32 %v1020, 16
        %v1052 = vrot.slane %v1050, 5
        %v1053 = vsel %vm1039, %v1048, %v1052
        %v1054 = vshrl.u32 %v1020, 16
        %v1056 = vrot.slane %v1054, 4
        %v1057 = vor.u32 %v1056, %v1052
        %v1058 = vrot.slane %v1057, 4
        %v1060 = vshll.u32 %v1021, 16
        %v1062 = vrot.slane %v1060, 5
        %v1063 = vsel %vm1039, %v1058, %v1062
        %v1065 = vshrl.u32 %v1022, 16
        %v1067 = vrot.slane %v1065, 4
        %v1068 = vshll.u32 %v1022, 16
        %v1070 = vrot.slane %v1068, 5
        %v1071 = vor.u32 %v1067, %v1070
        %v1072 = vrot.slane %v1071, 4
        %v1074 = vshll.u32 %v1023, 16
        %v1076 = vrot.slane %v1074, 5
        %v1077 = vsel %vm1039, %v1072, %v1076
        %v1078 = vshrl.u32 %v1023, 16
        %v1080 = vrot.slane %v1078, 4
        %v1081 = vor.u32 %v1080, %v1076
        %v1082 = vrot.slane %v1081, 4
        %v1084 = vshll.u32 %v1024, 16
        %v1086 = vrot.slane %v1084, 5
        %v1087 = vsel %vm1039, %v1082, %v1086
        %v1089 = vshrl.u32 %v1025, 16
        %v1091 = vrot.slane %v1089, 4
        %v1092 = vshll.u32 %v1025, 16
        %v1094 = vrot.slane %v1092, 5
        %v1095 = vor.u32 %v1091, %v1094
        %v1096 = vrot.slane %v1095, 4
        %v1098 = vshll.u32 %v1026, 16
        %v1100 = vrot.slane %v1098, 5
        %v1101 = vsel %vm1039, %v1096, %v1100
        %v1102 = vshrl.u32 %v1026, 16
        %v1104 = vrot.slane %v1102, 4
        %v1105 = vor.u32 %v1104, %v1100
        %v1106 = vrot.slane %v1105, 4
        %v1108 = vshll.u32 %v1027, 16
        %v1110 = vrot.slane %v1108, 5
        %v1111 = vsel %vm1039, %v1106, %v1110
        %v1113 = vshrl.u32 %v1028, 16
        %v1115 = vrot.slane %v1113, 4
        %v1116 = vshll.u32 %v1028, 16
        %v1118 = vrot.slane %v1116, 5
        %v1119 = vor.u32 %v1115, %v1118
        %v1120 = vrot.slane %v1119, 4
        %v1122 = vshll.u32 %v1029, 16
        %v1124 = vrot.slane %v1122, 5
        %v1125 = vsel %vm1039, %v1120, %v1124
        %v1126 = vshrl.u32 %v1029, 16
        %v1128 = vrot.slane %v1126, 4
        %v1129 = vor.u32 %v1128, %v1124
        %v1130 = vrot.slane %v1129, 4
        %v1132 = vshll.u32 %v1030, 16
        %v1134 = vrot.slane %v1132, 5
        %v1135 = vsel %vm1039, %v1130, %v1134
        %v1137 = vshrl.u32 %v1031, 16
        %v1139 = vrot.slane %v1137, 4
        %v1140 = vshll.u32 %v1031, 16
        %v1142 = vrot.slane %v1140, 5
        %v1143 = vor.u32 %v1139, %v1142
        %v1144 = vrot.slane %v1143, 4
        %v1146 = vshll.u32 %v1032, 16
        %v1148 = vrot.slane %v1146, 5
        %v1149 = vsel %vm1039, %v1144, %v1148
        %v1150 = vshrl.u32 %v1032, 16
        %v1152 = vrot.slane %v1150, 4
        %v1153 = vor.u32 %v1152, %v1148
        %v1154 = vrot.slane %v1153, 4
        %v1156 = vshll.u32 %v1033, 16
        %v1158 = vrot.slane %v1156, 5
        %v1159 = vsel %vm1039, %v1154, %v1158
        %v1161 = vshrl.u32 %v1034, 16
        %v1163 = vrot.slane %v1161, 4
        %v1164 = vshll.u32 %v1034, 16
        %v1166 = vrot.slane %v1164, 5
        %v1167 = vor.u32 %v1163, %v1166
        %v1168 = vrot.slane %v1167, 4
        %v1170 = vshll.u32 %v1035, 16
        %v1172 = vrot.slane %v1170, 5
        %v1173 = vsel %vm1039, %v1168, %v1172
        %v1174 = vshrl.u32 %v1035, 16
        %v1176 = vrot.slane %v1174, 4
        %v1177 = vor.u32 %v1176, %v1172
        %v1178 = vrot.slane %v1177, 4
        %v1180 = vshll.u32 %v1036, 16
        %v1182 = vrot.slane %v1180, 5
        %v1183 = vsel %vm1039, %v1178, %v1182
        %1184 = vrot.lane.b32.xlu0 %v1053, 8
        %v1185 = vpop.permute.xlu0 %1184
        %1186 = vrot.lane.b32.xlu0 %v1063, 8
        %v1187 = vpop.permute.xlu0 %1186
        %1188 = vrot.lane.b32.xlu0 %v1077, 8
        %v1189 = vpop.permute.xlu0 %1188
        %1190 = vrot.lane.b32.xlu0 %v1087, 8
        %v1191 = vpop.permute.xlu0 %1190
        %1192 = vrot.lane.b32.xlu0 %v1101, 8
        %v1193 = vpop.permute.xlu0 %1192
        %1194 = vrot.lane.b32.xlu0 %v1111, 8
        %v1195 = vpop.permute.xlu0 %1194
        %1196 = vrot.lane.b32.xlu0 %v1125, 8
        %v1197 = vpop.permute.xlu0 %1196
        %1198 = vrot.lane.b32.xlu0 %v1135, 8
        %v1199 = vpop.permute.xlu0 %1198
        %1200 = vrot.lane.b32.xlu0 %v1149, 8
        %v1201 = vpop.permute.xlu0 %1200
        %1202 = vrot.lane.b32.xlu0 %v1159, 8
        %v1203 = vpop.permute.xlu0 %1202
        %1204 = vrot.lane.b32.xlu0 %v1173, 8
        %v1205 = vpop.permute.xlu0 %1204
        %1206 = vrot.lane.b32.xlu0 %v1183, 8
        %v1207 = vpop.permute.xlu0 %1206
        %vm1220 = vcmask 126016
        %1221 = vst.msk [vmem:[#allocation3] sm:$0xf] %vm1220, %v1185
        %1222 = vst.msk [vmem:[#allocation3 + $0x4] sm:$0xf] %vm1220, %v1187
        %1223 = vst.msk [vmem:[#allocation3 + $0x8] sm:$0xf] %vm1220, %v1189
        %1224 = vst.msk [vmem:[#allocation3 + $0xc] sm:$0xf] %vm1220, %v1191
        %1225 = vst.msk [vmem:[#allocation3 + $0x10] sm:$0xf] %vm1220, %v1193
        %1226 = vst.msk [vmem:[#allocation3 + $0x14] sm:$0xf] %vm1220, %v1195
        %1227 = vst.msk [vmem:[#allocation3 + $0x18] sm:$0xf] %vm1220, %v1197
        %1228 = vst.msk [vmem:[#allocation3 + $0x1c] sm:$0xf] %vm1220, %v1199
        %1229 = vst.msk [vmem:[#allocation3 + $0x20] sm:$0xf] %vm1220, %v1201
        %1230 = vst.msk [vmem:[#allocation3 + $0x24] sm:$0xf] %vm1220, %v1203
        %1231 = vst.msk [vmem:[#allocation3 + $0x28] sm:$0xf] %vm1220, %v1205
        %1232 = vst.msk [vmem:[#allocation3 + $0x2c] sm:$0xf] %vm1220, %v1207
        %v1233 = vld [vmem:[#allocation2] sm:$0xe]
        %v1234 = vld [vmem:[#allocation2 + $0x4] sm:$0xf]
        %v1235 = vld [vmem:[#allocation2 + $0x8] sm:$0x1]
        %v1236 = vld [vmem:[#allocation2 + $0xc] sm:$0xe]
        %v1237 = vld [vmem:[#allocation2 + $0x10] sm:$0xf]
        %v1238 = vld [vmem:[#allocation2 + $0x14] sm:$0x1]
        %v1239 = vld [vmem:[#allocation2 + $0x18] sm:$0xe]
        %v1240 = vld [vmem:[#allocation2 + $0x1c] sm:$0xf]
        %v1241 = vld [vmem:[#allocation2 + $0x20] sm:$0x1]
        %v1242 = vld [vmem:[#allocation2 + $0x24] sm:$0xe]
        %v1243 = vld [vmem:[#allocation2 + $0x28] sm:$0xf]
        %v1244 = vld [vmem:[#allocation2 + $0x2c] sm:$0x1]
        %v1245 = vld [vmem:[#allocation2 + $0x30] sm:$0xe]
        %v1246 = vld [vmem:[#allocation2 + $0x34] sm:$0xf]
        %v1247 = vld [vmem:[#allocation2 + $0x38] sm:$0x1]
        %v1248 = vld [vmem:[#allocation2 + $0x3c] sm:$0xe]
        %v1249 = vld [vmem:[#allocation2 + $0x40] sm:$0xf]
        %v1250 = vld [vmem:[#allocation2 + $0x44] sm:$0x1]
        %vm1269 = vcmask 1042432
        %vm1270 = vcmask 1046532
        %vm1271 = vmor %vm1269, %vm1270
        %v1272 = vrot.slane %v1233, 5
        %v1273 = vrot.slane %v1272, 4
        %v1274 = vrot.slane %v1234, 5
        %v1275 = vsel %vm1271, %v1273, %v1274
        %v1276 = vrot.slane %v1274, 4
        %v1277 = vrot.slane %v1235, 5
        %v1278 = vsel %vm1271, %v1276, %v1277
        %v1279 = vrot.slane %v1236, 5
        %v1280 = vrot.slane %v1279, 4
        %v1281 = vrot.slane %v1237, 5
        %v1282 = vsel %vm1271, %v1280, %v1281
        %v1283 = vrot.slane %v1281, 4
        %v1284 = vrot.slane %v1238, 5
        %v1285 = vsel %vm1271, %v1283, %v1284
        %v1286 = vrot.slane %v1239, 5
        %v1287 = vrot.slane %v1286, 4
        %v1288 = vrot.slane %v1240, 5
        %v1289 = vsel %vm1271, %v1287, %v1288
        %v1290 = vrot.slane %v1288, 4
        %v1291 = vrot.slane %v1241, 5
        %v1292 = vsel %vm1271, %v1290, %v1291
        %v1293 = vrot.slane %v1242, 5
        %v1294 = vrot.slane %v1293, 4
        %v1295 = vrot.slane %v1243, 5
        %v1296 = vsel %vm1271, %v1294, %v1295
        %v1297 = vrot.slane %v1295, 4
        %v1298 = vrot.slane %v1244, 5
        %v1299 = vsel %vm1271, %v1297, %v1298
        %v1300 = vrot.slane %v1245, 5
        %v1301 = vrot.slane %v1300, 4
        %v1302 = vrot.slane %v1246, 5
        %v1303 = vsel %vm1271, %v1301, %v1302
        %v1304 = vrot.slane %v1302, 4
        %v1305 = vrot.slane %v1247, 5
        %v1306 = vsel %vm1271, %v1304, %v1305
        %v1307 = vrot.slane %v1248, 5
        %v1308 = vrot.slane %v1307, 4
        %v1309 = vrot.slane %v1249, 5
        %v1310 = vsel %vm1271, %v1308, %v1309
        %v1311 = vrot.slane %v1309, 4
        %v1312 = vrot.slane %v1250, 5
        %v1313 = vsel %vm1271, %v1311, %v1312
        %1314 = vrot.lane.b32.xlu0 %v1275, 16
        %v1315 = vpop.permute.xlu0 %1314
        %1316 = vrot.lane.b32.xlu0 %v1278, 16
        %v1317 = vpop.permute.xlu0 %1316
        %1318 = vrot.lane.b32.xlu0 %v1282, 16
        %v1319 = vpop.permute.xlu0 %1318
        %1320 = vrot.lane.b32.xlu0 %v1285, 16
        %v1321 = vpop.permute.xlu0 %1320
        %1322 = vrot.lane.b32.xlu0 %v1289, 16
        %v1323 = vpop.permute.xlu0 %1322
        %1324 = vrot.lane.b32.xlu0 %v1292, 16
        %v1325 = vpop.permute.xlu0 %1324
        %1326 = vrot.lane.b32.xlu0 %v1296, 16
        %v1327 = vpop.permute.xlu0 %1326
        %1328 = vrot.lane.b32.xlu0 %v1299, 16
        %v1329 = vpop.permute.xlu0 %1328
        %1330 = vrot.lane.b32.xlu0 %v1303, 16
        %v1331 = vpop.permute.xlu0 %1330
        %1332 = vrot.lane.b32.xlu0 %v1306, 16
        %v1333 = vpop.permute.xlu0 %1332
        %1334 = vrot.lane.b32.xlu0 %v1310, 16
        %v1335 = vpop.permute.xlu0 %1334
        %1336 = vrot.lane.b32.xlu0 %v1313, 16
        %v1337 = vpop.permute.xlu0 %1336
        %vm1350 = vcmask 191616
        %1351 = vst.msk [vmem:[#allocation3] sm:$0xf] %vm1350, %v1315
        %1352 = vst.msk [vmem:[#allocation3 + $0x4] sm:$0xf] %vm1350, %v1317
        %1353 = vst.msk [vmem:[#allocation3 + $0x8] sm:$0xf] %vm1350, %v1319
        %1354 = vst.msk [vmem:[#allocation3 + $0xc] sm:$0xf] %vm1350, %v1321
        %1355 = vst.msk [vmem:[#allocation3 + $0x10] sm:$0xf] %vm1350, %v1323
        %1356 = vst.msk [vmem:[#allocation3 + $0x14] sm:$0xf] %vm1350, %v1325
        %1357 = vst.msk [vmem:[#allocation3 + $0x18] sm:$0xf] %vm1350, %v1327
        %1358 = vst.msk [vmem:[#allocation3 + $0x1c] sm:$0xf] %vm1350, %v1329
        %1359 = vst.msk [vmem:[#allocation3 + $0x20] sm:$0xf] %vm1350, %v1331
        %1360 = vst.msk [vmem:[#allocation3 + $0x24] sm:$0xf] %vm1350, %v1333
        %1361 = vst.msk [vmem:[#allocation3 + $0x28] sm:$0xf] %vm1350, %v1335
        %1362 = vst.msk [vmem:[#allocation3 + $0x2c] sm:$0xf] %vm1350, %v1337
        %s1363 = scalar_lea.vmem [#allocation2], 12
        %v1364 = vld [vmem:[%s1363] sm:$0xf]
        %v1365 = vld [vmem:[%s1363 + $0x4] sm:$0xf]
        %v1366 = vld [vmem:[%s1363 + $0xc] sm:$0xf]
        %v1367 = vld [vmem:[%s1363 + $0x10] sm:$0xf]
        %v1368 = vld [vmem:[%s1363 + $0x18] sm:$0xf]
        %v1369 = vld [vmem:[%s1363 + $0x1c] sm:$0xf]
        %v1370 = vld [vmem:[%s1363 + $0x24] sm:$0xf]
        %v1371 = vld [vmem:[%s1363 + $0x28] sm:$0xf]
        %v1372 = vld [vmem:[%s1363 + $0x30] sm:$0xf]
        %v1373 = vld [vmem:[%s1363 + $0x34] sm:$0xf]
        %v1374 = vld [vmem:[%s1363 + $0x3c] sm:$0xf]
        %v1375 = vld [vmem:[%s1363 + $0x40] sm:$0xf]
        %1388 = vrot.lane.b32.xlu0 %v1364, 24
        %v1389 = vpop.permute.xlu0 %1388
        %1390 = vrot.lane.b32.xlu0 %v1365, 24
        %v1391 = vpop.permute.xlu0 %1390
        %1392 = vrot.lane.b32.xlu0 %v1366, 24
        %v1393 = vpop.permute.xlu0 %1392
        %1394 = vrot.lane.b32.xlu0 %v1367, 24
        %v1395 = vpop.permute.xlu0 %1394
        %1396 = vrot.lane.b32.xlu0 %v1368, 24
        %v1397 = vpop.permute.xlu0 %1396
        %1398 = vrot.lane.b32.xlu0 %v1369, 24
        %v1399 = vpop.permute.xlu0 %1398
        %1400 = vrot.lane.b32.xlu0 %v1370, 24
        %v1401 = vpop.permute.xlu0 %1400
        %1402 = vrot.lane.b32.xlu0 %v1371, 24
        %v1403 = vpop.permute.xlu0 %1402
        %1404 = vrot.lane.b32.xlu0 %v1372, 24
        %v1405 = vpop.permute.xlu0 %1404
        %1406 = vrot.lane.b32.xlu0 %v1373, 24
        %v1407 = vpop.permute.xlu0 %1406
        %1408 = vrot.lane.b32.xlu0 %v1374, 24
        %v1409 = vpop.permute.xlu0 %1408
        %1410 = vrot.lane.b32.xlu0 %v1375, 24
        %v1411 = vpop.permute.xlu0 %1410
        %vm1424 = vcmask 257216
        %1425 = vst.msk [vmem:[#allocation3] sm:$0xf] %vm1424, %v1389
        %1426 = vst.msk [vmem:[#allocation3 + $0x4] sm:$0xf] %vm1424, %v1391
        %1427 = vst.msk [vmem:[#allocation3 + $0x8] sm:$0xf] %vm1424, %v1393
        %1428 = vst.msk [vmem:[#allocation3 + $0xc] sm:$0xf] %vm1424, %v1395
        %1429 = vst.msk [vmem:[#allocation3 + $0x10] sm:$0xf] %vm1424, %v1397
        %1430 = vst.msk [vmem:[#allocation3 + $0x14] sm:$0xf] %vm1424, %v1399
        %1431 = vst.msk [vmem:[#allocation3 + $0x18] sm:$0xf] %vm1424, %v1401
        %1432 = vst.msk [vmem:[#allocation3 + $0x1c] sm:$0xf] %vm1424, %v1403
        %1433 = vst.msk [vmem:[#allocation3 + $0x20] sm:$0xf] %vm1424, %v1405
        %1434 = vst.msk [vmem:[#allocation3 + $0x24] sm:$0xf] %vm1424, %v1407
        %1435 = vst.msk [vmem:[#allocation3 + $0x28] sm:$0xf] %vm1424, %v1409
        %1436 = vst.msk [vmem:[#allocation3 + $0x2c] sm:$0xf] %vm1424, %v1411
        %v1437 = vld [vmem:[%s1363] sm:$0xf]
        %v1438 = vld [vmem:[%s1363 + $0x4] sm:$0xf]
        %v1439 = vld [vmem:[%s1363 + $0x8] sm:$0x1]
        %v1440 = vld [vmem:[%s1363 + $0xc] sm:$0xf]
        %v1441 = vld [vmem:[%s1363 + $0x10] sm:$0xf]
        %v1442 = vld [vmem:[%s1363 + $0x14] sm:$0x1]
        %v1443 = vld [vmem:[%s1363 + $0x18] sm:$0xf]
        %v1444 = vld [vmem:[%s1363 + $0x1c] sm:$0xf]
        %v1445 = vld [vmem:[%s1363 + $0x20] sm:$0x1]
        %v1446 = vld [vmem:[%s1363 + $0x24] sm:$0xf]
        %v1447 = vld [vmem:[%s1363 + $0x28] sm:$0xf]
        %v1448 = vld [vmem:[%s1363 + $0x2c] sm:$0x1]
        %v1449 = vld [vmem:[%s1363 + $0x30] sm:$0xf]
        %v1450 = vld [vmem:[%s1363 + $0x34] sm:$0xf]
        %v1451 = vld [vmem:[%s1363 + $0x38] sm:$0x1]
        %v1452 = vld [vmem:[%s1363 + $0x3c] sm:$0xf]
        %v1453 = vld [vmem:[%s1363 + $0x40] sm:$0xf]
        %v1454 = vld [vmem:[%s1363 + $0x44] sm:$0x1]
        %v1456 = vshrl.u32 %v1437, 16
        %v1458 = vrot.slane %v1456, 4
        %v1459 = vshll.u32 %v1437, 16
        %v1461 = vrot.slane %v1459, 5
        %v1462 = vor.u32 %v1458, %v1461
        %v1463 = vrot.slane %v1462, 4
        %v1465 = vshll.u32 %v1438, 16
        %v1467 = vrot.slane %v1465, 5
        %v1468 = vsel %vm1039, %v1463, %v1467
        %v1469 = vshrl.u32 %v1438, 16
        %v1471 = vrot.slane %v1469, 4
        %v1472 = vor.u32 %v1471, %v1467
        %v1473 = vrot.slane %v1472, 4
        %v1475 = vshll.u32 %v1439, 16
        %v1477 = vrot.slane %v1475, 5
        %v1478 = vsel %vm1039, %v1473, %v1477
        %v1480 = vshrl.u32 %v1440, 16
        %v1482 = vrot.slane %v1480, 4
        %v1483 = vshll.u32 %v1440, 16
        %v1485 = vrot.slane %v1483, 5
        %v1486 = vor.u32 %v1482, %v1485
        %v1487 = vrot.slane %v1486, 4
        %v1489 = vshll.u32 %v1441, 16
        %v1491 = vrot.slane %v1489, 5
        %v1492 = vsel %vm1039, %v1487, %v1491
        %v1493 = vshrl.u32 %v1441, 16
        %v1495 = vrot.slane %v1493, 4
        %v1496 = vor.u32 %v1495, %v1491
        %v1497 = vrot.slane %v1496, 4
        %v1499 = vshll.u32 %v1442, 16
        %v1501 = vrot.slane %v1499, 5
        %v1502 = vsel %vm1039, %v1497, %v1501
        %v1504 = vshrl.u32 %v1443, 16
        %v1506 = vrot.slane %v1504, 4
        %v1507 = vshll.u32 %v1443, 16
        %v1509 = vrot.slane %v1507, 5
        %v1510 = vor.u32 %v1506, %v1509
        %v1511 = vrot.slane %v1510, 4
        %v1513 = vshll.u32 %v1444, 16
        %v1515 = vrot.slane %v1513, 5
        %v1516 = vsel %vm1039, %v1511, %v1515
        %v1517 = vshrl.u32 %v1444, 16
        %v1519 = vrot.slane %v1517, 4
        %v1520 = vor.u32 %v1519, %v1515
        %v1521 = vrot.slane %v1520, 4
        %v1523 = vshll.u32 %v1445, 16
        %v1525 = vrot.slane %v1523, 5
        %v1526 = vsel %vm1039, %v1521, %v1525
        %v1528 = vshrl.u32 %v1446, 16
        %v1530 = vrot.slane %v1528, 4
        %v1531 = vshll.u32 %v1446, 16
        %v1533 = vrot.slane %v1531, 5
        %v1534 = vor.u32 %v1530, %v1533
        %v1535 = vrot.slane %v1534, 4
        %v1537 = vshll.u32 %v1447, 16
        %v1539 = vrot.slane %v1537, 5
        %v1540 = vsel %vm1039, %v1535, %v1539
        %v1541 = vshrl.u32 %v1447, 16
        %v1543 = vrot.slane %v1541, 4
        %v1544 = vor.u32 %v1543, %v1539
        %v1545 = vrot.slane %v1544, 4
        %v1547 = vshll.u32 %v1448, 16
        %v1549 = vrot.slane %v1547, 5
        %v1550 = vsel %vm1039, %v1545, %v1549
        %v1552 = vshrl.u32 %v1449, 16
        %v1554 = vrot.slane %v1552, 4
        %v1555 = vshll.u32 %v1449, 16
        %v1557 = vrot.slane %v1555, 5
        %v1558 = vor.u32 %v1554, %v1557
        %v1559 = vrot.slane %v1558, 4
        %v1561 = vshll.u32 %v1450, 16
        %v1563 = vrot.slane %v1561, 5
        %v1564 = vsel %vm1039, %v1559, %v1563
        %v1565 = vshrl.u32 %v1450, 16
        %v1567 = vrot.slane %v1565, 4
        %v1568 = vor.u32 %v1567, %v1563
        %v1569 = vrot.slane %v1568, 4
        %v1571 = vshll.u32 %v1451, 16
        %v1573 = vrot.slane %v1571, 5
        %v1574 = vsel %vm1039, %v1569, %v1573
        %v1576 = vshrl.u32 %v1452, 16
        %v1578 = vrot.slane %v1576, 4
        %v1579 = vshll.u32 %v1452, 16
        %v1581 = vrot.slane %v1579, 5
        %v1582 = vor.u32 %v1578, %v1581
        %v1583 = vrot.slane %v1582, 4
        %v1585 = vshll.u32 %v1453, 16
        %v1587 = vrot.slane %v1585, 5
        %v1588 = vsel %vm1039, %v1583, %v1587
        %v1589 = vshrl.u32 %v1453, 16
        %v1591 = vrot.slane %v1589, 4
        %v1592 = vor.u32 %v1591, %v1587
        %v1593 = vrot.slane %v1592, 4
        %v1595 = vshll.u32 %v1454, 16
        %v1597 = vrot.slane %v1595, 5
        %v1598 = vsel %vm1039, %v1593, %v1597
        %1599 = vrot.lane.b32.xlu0 %v1468, 32
        %v1600 = vpop.permute.xlu0 %1599
        %1601 = vrot.lane.b32.xlu0 %v1478, 32
        %v1602 = vpop.permute.xlu0 %1601
        %1603 = vrot.lane.b32.xlu0 %v1492, 32
        %v1604 = vpop.permute.xlu0 %1603
        %1605 = vrot.lane.b32.xlu0 %v1502, 32
        %v1606 = vpop.permute.xlu0 %1605
        %1607 = vrot.lane.b32.xlu0 %v1516, 32
        %v1608 = vpop.permute.xlu0 %1607
        %1609 = vrot.lane.b32.xlu0 %v1526, 32
        %v1610 = vpop.permute.xlu0 %1609
        %1611 = vrot.lane.b32.xlu0 %v1540, 32
        %v1612 = vpop.permute.xlu0 %1611
        %1613 = vrot.lane.b32.xlu0 %v1550, 32
        %v1614 = vpop.permute.xlu0 %1613
        %1615 = vrot.lane.b32.xlu0 %v1564, 32
        %v1616 = vpop.permute.xlu0 %1615
        %1617 = vrot.lane.b32.xlu0 %v1574, 32
        %v1618 = vpop.permute.xlu0 %1617
        %1619 = vrot.lane.b32.xlu0 %v1588, 32
        %v1620 = vpop.permute.xlu0 %1619
        %1621 = vrot.lane.b32.xlu0 %v1598, 32
        %v1622 = vpop.permute.xlu0 %1621
        %vm1635 = vcmask 322816
        %1636 = vst.msk [vmem:[#allocation3] sm:$0xf] %vm1635, %v1600
        %1637 = vst.msk [vmem:[#allocation3 + $0x4] sm:$0xf] %vm1635, %v1602
        %1638 = vst.msk [vmem:[#allocation3 + $0x8] sm:$0xf] %vm1635, %v1604
        %1639 = vst.msk [vmem:[#allocation3 + $0xc] sm:$0xf] %vm1635, %v1606
        %1640 = vst.msk [vmem:[#allocation3 + $0x10] sm:$0xf] %vm1635, %v1608
        %1641 = vst.msk [vmem:[#allocation3 + $0x14] sm:$0xf] %vm1635, %v1610
        %1642 = vst.msk [vmem:[#allocation3 + $0x18] sm:$0xf] %vm1635, %v1612
        %1643 = vst.msk [vmem:[#allocation3 + $0x1c] sm:$0xf] %vm1635, %v1614
        %1644 = vst.msk [vmem:[#allocation3 + $0x20] sm:$0xf] %vm1635, %v1616
        %1645 = vst.msk [vmem:[#allocation3 + $0x24] sm:$0xf] %vm1635, %v1618
        %1646 = vst.msk [vmem:[#allocation3 + $0x28] sm:$0xf] %vm1635, %v1620
        %1647 = vst.msk [vmem:[#allocation3 + $0x2c] sm:$0xf] %vm1635, %v1622
        %v1648 = vld [vmem:[%s1363] sm:$0xe]
        %v1649 = vld [vmem:[%s1363 + $0x4] sm:$0xf]
        %v1650 = vld [vmem:[%s1363 + $0x8] sm:$0x1]
        %v1651 = vld [vmem:[%s1363 + $0xc] sm:$0xe]
        %v1652 = vld [vmem:[%s1363 + $0x10] sm:$0xf]
        %v1653 = vld [vmem:[%s1363 + $0x14] sm:$0x1]
        %v1654 = vld [vmem:[%s1363 + $0x18] sm:$0xe]
        %v1655 = vld [vmem:[%s1363 + $0x1c] sm:$0xf]
        %v1656 = vld [vmem:[%s1363 + $0x20] sm:$0x1]
        %v1657 = vld [vmem:[%s1363 + $0x24] sm:$0xe]
        %v1658 = vld [vmem:[%s1363 + $0x28] sm:$0xf]
        %v1659 = vld [vmem:[%s1363 + $0x2c] sm:$0x1]
        %v1660 = vld [vmem:[%s1363 + $0x30] sm:$0xe]
        %v1661 = vld [vmem:[%s1363 + $0x34] sm:$0xf]
        %v1662 = vld [vmem:[%s1363 + $0x38] sm:$0x1]
        %v1663 = vld [vmem:[%s1363 + $0x3c] sm:$0xe]
        %v1664 = vld [vmem:[%s1363 + $0x40] sm:$0xf]
        %v1665 = vld [vmem:[%s1363 + $0x44] sm:$0x1]
        %v1684 = vrot.slane %v1648, 5
        %v1685 = vrot.slane %v1684, 4
        %v1686 = vrot.slane %v1649, 5
        %v1687 = vsel %vm1271, %v1685, %v1686
        %v1688 = vrot.slane %v1686, 4
        %v1689 = vrot.slane %v1650, 5
        %v1690 = vsel %vm1271, %v1688, %v1689
        %v1691 = vrot.slane %v1651, 5
        %v1692 = vrot.slane %v1691, 4
        %v1693 = vrot.slane %v1652, 5
        %v1694 = vsel %vm1271, %v1692, %v1693
        %v1695 = vrot.slane %v1693, 4
        %v1696 = vrot.slane %v1653, 5
        %v1697 = vsel %vm1271, %v1695, %v1696
        %v1698 = vrot.slane %v1654, 5
        %v1699 = vrot.slane %v1698, 4
        %v1700 = vrot.slane %v1655, 5
        %v1701 = vsel %vm1271, %v1699, %v1700
        %v1702 = vrot.slane %v1700, 4
        %v1703 = vrot.slane %v1656, 5
        %v1704 = vsel %vm1271, %v1702, %v1703
        %v1705 = vrot.slane %v1657, 5
        %v1706 = vrot.slane %v1705, 4
        %v1707 = vrot.slane %v1658, 5
        %v1708 = vsel %vm1271, %v1706, %v1707
        %v1709 = vrot.slane %v1707, 4
        %v1710 = vrot.slane %v1659, 5
        %v1711 = vsel %vm1271, %v1709, %v1710
        %v1712 = vrot.slane %v1660, 5
        %v1713 = vrot.slane %v1712, 4
        %v1714 = vrot.slane %v1661, 5
        %v1715 = vsel %vm1271, %v1713, %v1714
        %v1716 = vrot.slane %v1714, 4
        %v1717 = vrot.slane %v1662, 5
        %v1718 = vsel %vm1271, %v1716, %v1717
        %v1719 = vrot.slane %v1663, 5
        %v1720 = vrot.slane %v1719, 4
        %v1721 = vrot.slane %v1664, 5
        %v1722 = vsel %vm1271, %v1720, %v1721
        %v1723 = vrot.slane %v1721, 4
        %v1724 = vrot.slane %v1665, 5
        %v1725 = vsel %vm1271, %v1723, %v1724
        %1726 = vrot.lane.b32.xlu0 %v1687, 40
        %v1727 = vpop.permute.xlu0 %1726
        %1728 = vrot.lane.b32.xlu0 %v1690, 40
        %v1729 = vpop.permute.xlu0 %1728
        %1730 = vrot.lane.b32.xlu0 %v1694, 40
        %v1731 = vpop.permute.xlu0 %1730
        %1732 = vrot.lane.b32.xlu0 %v1697, 40
        %v1733 = vpop.permute.xlu0 %1732
        %1734 = vrot.lane.b32.xlu0 %v1701, 40
        %v1735 = vpop.permute.xlu0 %1734
        %1736 = vrot.lane.b32.xlu0 %v1704, 40
        %v1737 = vpop.permute.xlu0 %1736
        %1738 = vrot.lane.b32.xlu0 %v1708, 40
        %v1739 = vpop.permute.xlu0 %1738
        %1740 = vrot.lane.b32.xlu0 %v1711, 40
        %v1741 = vpop.permute.xlu0 %1740
        %1742 = vrot.lane.b32.xlu0 %v1715, 40
        %v1743 = vpop.permute.xlu0 %1742
        %1744 = vrot.lane.b32.xlu0 %v1718, 40
        %v1745 = vpop.permute.xlu0 %1744
        %1746 = vrot.lane.b32.xlu0 %v1722, 40
        %v1747 = vpop.permute.xlu0 %1746
        %1748 = vrot.lane.b32.xlu0 %v1725, 40
        %v1749 = vpop.permute.xlu0 %1748
        %vm1762 = vcmask 388416
        %1763 = vst.msk [vmem:[#allocation3] sm:$0xf] %vm1762, %v1727
        %1764 = vst.msk [vmem:[#allocation3 + $0x4] sm:$0xf] %vm1762, %v1729
        %1765 = vst.msk [vmem:[#allocation3 + $0x8] sm:$0xf] %vm1762, %v1731
        %1766 = vst.msk [vmem:[#allocation3 + $0xc] sm:$0xf] %vm1762, %v1733
        %1767 = vst.msk [vmem:[#allocation3 + $0x10] sm:$0xf] %vm1762, %v1735
        %1768 = vst.msk [vmem:[#allocation3 + $0x14] sm:$0xf] %vm1762, %v1737
        %1769 = vst.msk [vmem:[#allocation3 + $0x18] sm:$0xf] %vm1762, %v1739
        %1770 = vst.msk [vmem:[#allocation3 + $0x1c] sm:$0xf] %vm1762, %v1741
        %1771 = vst.msk [vmem:[#allocation3 + $0x20] sm:$0xf] %vm1762, %v1743
        %1772 = vst.msk [vmem:[#allocation3 + $0x24] sm:$0xf] %vm1762, %v1745
        %1773 = vst.msk [vmem:[#allocation3 + $0x28] sm:$0xf] %vm1762, %v1747
        %1774 = vst.msk [vmem:[#allocation3 + $0x2c] sm:$0xf] %vm1762, %v1749
        %v1775 = vld [vmem:[%s753] sm:$0xf]
        %v1776 = vld [vmem:[%s753 + $0x4] sm:$0xf]
        %v1777 = vld [vmem:[%s753 + $0xc] sm:$0xf]
        %v1778 = vld [vmem:[%s753 + $0x10] sm:$0xf]
        %v1779 = vld [vmem:[%s753 + $0x18] sm:$0xf]
        %v1780 = vld [vmem:[%s753 + $0x1c] sm:$0xf]
        %v1781 = vld [vmem:[%s753 + $0x24] sm:$0xf]
        %v1782 = vld [vmem:[%s753 + $0x28] sm:$0xf]
        %v1783 = vld [vmem:[%s753 + $0x30] sm:$0xf]
        %v1784 = vld [vmem:[%s753 + $0x34] sm:$0xf]
        %v1785 = vld [vmem:[%s753 + $0x3c] sm:$0xf]
        %v1786 = vld [vmem:[%s753 + $0x40] sm:$0xf]
        %1799 = vrot.lane.b32.xlu0 %v1775, 48
        %v1800 = vpop.permute.xlu0 %1799
        %1801 = vrot.lane.b32.xlu0 %v1776, 48
        %v1802 = vpop.permute.xlu0 %1801
        %1803 = vrot.lane.b32.xlu0 %v1777, 48
        %v1804 = vpop.permute.xlu0 %1803
        %1805 = vrot.lane.b32.xlu0 %v1778, 48
        %v1806 = vpop.permute.xlu0 %1805
        %1807 = vrot.lane.b32.xlu0 %v1779, 48
        %v1808 = vpop.permute.xlu0 %1807
        %1809 = vrot.lane.b32.xlu0 %v1780, 48
        %v1810 = vpop.permute.xlu0 %1809
        %1811 = vrot.lane.b32.xlu0 %v1781, 48
        %v1812 = vpop.permute.xlu0 %1811
        %1813 = vrot.lane.b32.xlu0 %v1782, 48
        %v1814 = vpop.permute.xlu0 %1813
        %1815 = vrot.lane.b32.xlu0 %v1783, 48
        %v1816 = vpop.permute.xlu0 %1815
        %1817 = vrot.lane.b32.xlu0 %v1784, 48
        %v1818 = vpop.permute.xlu0 %1817
        %1819 = vrot.lane.b32.xlu0 %v1785, 48
        %v1820 = vpop.permute.xlu0 %1819
        %1821 = vrot.lane.b32.xlu0 %v1786, 48
        %v1822 = vpop.permute.xlu0 %1821
        %vm1835 = vcmask 454016
        %1836 = vst.msk [vmem:[#allocation3] sm:$0xf] %vm1835, %v1800
        %1837 = vst.msk [vmem:[#allocation3 + $0x4] sm:$0xf] %vm1835, %v1802
        %1838 = vst.msk [vmem:[#allocation3 + $0x8] sm:$0xf] %vm1835, %v1804
        %1839 = vst.msk [vmem:[#allocation3 + $0xc] sm:$0xf] %vm1835, %v1806
        %1840 = vst.msk [vmem:[#allocation3 + $0x10] sm:$0xf] %vm1835, %v1808
        %1841 = vst.msk [vmem:[#allocation3 + $0x14] sm:$0xf] %vm1835, %v1810
        %1842 = vst.msk [vmem:[#allocation3 + $0x18] sm:$0xf] %vm1835, %v1812
        %1843 = vst.msk [vmem:[#allocation3 + $0x1c] sm:$0xf] %vm1835, %v1814
        %1844 = vst.msk [vmem:[#allocation3 + $0x20] sm:$0xf] %vm1835, %v1816
        %1845 = vst.msk [vmem:[#allocation3 + $0x24] sm:$0xf] %vm1835, %v1818
        %1846 = vst.msk [vmem:[#allocation3 + $0x28] sm:$0xf] %vm1835, %v1820
        %1847 = vst.msk [vmem:[#allocation3 + $0x2c] sm:$0xf] %vm1835, %v1822
        %v1848 = vld [vmem:[%s753] sm:$0xf]
        %v1849 = vld [vmem:[%s753 + $0x4] sm:$0xf]
        %v1850 = vld [vmem:[%s753 + $0x8] sm:$0x1]
        %v1851 = vld [vmem:[%s753 + $0xc] sm:$0xf]
        %v1852 = vld [vmem:[%s753 + $0x10] sm:$0xf]
        %v1853 = vld [vmem:[%s753 + $0x14] sm:$0x1]
        %v1854 = vld [vmem:[%s753 + $0x18] sm:$0xf]
        %v1855 = vld [vmem:[%s753 + $0x1c] sm:$0xf]
        %v1856 = vld [vmem:[%s753 + $0x20] sm:$0x1]
        %v1857 = vld [vmem:[%s753 + $0x24] sm:$0xf]
        %v1858 = vld [vmem:[%s753 + $0x28] sm:$0xf]
        %v1859 = vld [vmem:[%s753 + $0x2c] sm:$0x1]
        %v1860 = vld [vmem:[%s753 + $0x30] sm:$0xf]
        %v1861 = vld [vmem:[%s753 + $0x34] sm:$0xf]
        %v1862 = vld [vmem:[%s753 + $0x38] sm:$0x1]
        %v1863 = vld [vmem:[%s753 + $0x3c] sm:$0xf]
        %v1864 = vld [vmem:[%s753 + $0x40] sm:$0xf]
        %v1865 = vld [vmem:[%s753 + $0x44] sm:$0x1]
        %v1867 = vshrl.u32 %v1848, 16
        %v1869 = vrot.slane %v1867, 4
        %v1870 = vshll.u32 %v1848, 16
        %v1872 = vrot.slane %v1870, 5
        %v1873 = vor.u32 %v1869, %v1872
        %v1874 = vrot.slane %v1873, 4
        %v1876 = vshll.u32 %v1849, 16
        %v1878 = vrot.slane %v1876, 5
        %v1879 = vsel %vm1039, %v1874, %v1878
        %v1880 = vshrl.u32 %v1849, 16
        %v1882 = vrot.slane %v1880, 4
        %v1883 = vor.u32 %v1882, %v1878
        %v1884 = vrot.slane %v1883, 4
        %v1886 = vshll.u32 %v1850, 16
        %v1888 = vrot.slane %v1886, 5
        %v1889 = vsel %vm1039, %v1884, %v1888
        %v1891 = vshrl.u32 %v1851, 16
        %v1893 = vrot.slane %v1891, 4
        %v1894 = vshll.u32 %v1851, 16
        %v1896 = vrot.slane %v1894, 5
        %v1897 = vor.u32 %v1893, %v1896
        %v1898 = vrot.slane %v1897, 4
        %v1900 = vshll.u32 %v1852, 16
        %v1902 = vrot.slane %v1900, 5
        %v1903 = vsel %vm1039, %v1898, %v1902
        %v1904 = vshrl.u32 %v1852, 16
        %v1906 = vrot.slane %v1904, 4
        %v1907 = vor.u32 %v1906, %v1902
        %v1908 = vrot.slane %v1907, 4
        %v1910 = vshll.u32 %v1853, 16
        %v1912 = vrot.slane %v1910, 5
        %v1913 = vsel %vm1039, %v1908, %v1912
        %v1915 = vshrl.u32 %v1854, 16
        %v1917 = vrot.slane %v1915, 4
        %v1918 = vshll.u32 %v1854, 16
        %v1920 = vrot.slane %v1918, 5
        %v1921 = vor.u32 %v1917, %v1920
        %v1922 = vrot.slane %v1921, 4
        %v1924 = vshll.u32 %v1855, 16
        %v1926 = vrot.slane %v1924, 5
        %v1927 = vsel %vm1039, %v1922, %v1926
        %v1928 = vshrl.u32 %v1855, 16
        %v1930 = vrot.slane %v1928, 4
        %v1931 = vor.u32 %v1930, %v1926
        %v1932 = vrot.slane %v1931, 4
        %v1934 = vshll.u32 %v1856, 16
        %v1936 = vrot.slane %v1934, 5
        %v1937 = vsel %vm1039, %v1932, %v1936
        %v1939 = vshrl.u32 %v1857, 16
        %v1941 = vrot.slane %v1939, 4
        %v1942 = vshll.u32 %v1857, 16
        %v1944 = vrot.slane %v1942, 5
        %v1945 = vor.u32 %v1941, %v1944
        %v1946 = vrot.slane %v1945, 4
        %v1948 = vshll.u32 %v1858, 16
        %v1950 = vrot.slane %v1948, 5
        %v1951 = vsel %vm1039, %v1946, %v1950
        %v1952 = vshrl.u32 %v1858, 16
        %v1954 = vrot.slane %v1952, 4
        %v1955 = vor.u32 %v1954, %v1950
        %v1956 = vrot.slane %v1955, 4
        %v1958 = vshll.u32 %v1859, 16
        %v1960 = vrot.slane %v1958, 5
        %v1961 = vsel %vm1039, %v1956, %v1960
        %v1963 = vshrl.u32 %v1860, 16
        %v1965 = vrot.slane %v1963, 4
        %v1966 = vshll.u32 %v1860, 16
        %v1968 = vrot.slane %v1966, 5
        %v1969 = vor.u32 %v1965, %v1968
        %v1970 = vrot.slane %v1969, 4
        %v1972 = vshll.u32 %v1861, 16
        %v1974 = vrot.slane %v1972, 5
        %v1975 = vsel %vm1039, %v1970, %v1974
        %v1976 = vshrl.u32 %v1861, 16
        %v1978 = vrot.slane %v1976, 4
        %v1979 = vor.u32 %v1978, %v1974
        %v1980 = vrot.slane %v1979, 4
        %v1982 = vshll.u32 %v1862, 16
        %v1984 = vrot.slane %v1982, 5
        %v1985 = vsel %vm1039, %v1980, %v1984
        %v1987 = vshrl.u32 %v1863, 16
        %v1989 = vrot.slane %v1987, 4
        %v1990 = vshll.u32 %v1863, 16
        %v1992 = vrot.slane %v1990, 5
        %v1993 = vor.u32 %v1989, %v1992
        %v1994 = vrot.slane %v1993, 4
        %v1996 = vshll.u32 %v1864, 16
        %v1998 = vrot.slane %v1996, 5
        %v1999 = vsel %vm1039, %v1994, %v1998
        %v2000 = vshrl.u32 %v1864, 16
        %v2002 = vrot.slane %v2000, 4
        %v2003 = vor.u32 %v2002, %v1998
        %v2004 = vrot.slane %v2003, 4
        %v2006 = vshll.u32 %v1865, 16
        %v2008 = vrot.slane %v2006, 5
        %v2009 = vsel %vm1039, %v2004, %v2008
        %2010 = vrot.lane.b32.xlu0 %v1879, 56
        %v2011 = vpop.permute.xlu0 %2010
        %2012 = vrot.lane.b32.xlu0 %v1889, 56
        %v2013 = vpop.permute.xlu0 %2012
        %2014 = vrot.lane.b32.xlu0 %v1903, 56
        %v2015 = vpop.permute.xlu0 %2014
        %2016 = vrot.lane.b32.xlu0 %v1913, 56
        %v2017 = vpop.permute.xlu0 %2016
        %2018 = vrot.lane.b32.xlu0 %v1927, 56
        %v2019 = vpop.permute.xlu0 %2018
        %2020 = vrot.lane.b32.xlu0 %v1937, 56
        %v2021 = vpop.permute.xlu0 %2020
        %2022 = vrot.lane.b32.xlu0 %v1951, 56
        %v2023 = vpop.permute.xlu0 %2022
        %2024 = vrot.lane.b32.xlu0 %v1961, 56
        %v2025 = vpop.permute.xlu0 %2024
        %2026 = vrot.lane.b32.xlu0 %v1975, 56
        %v2027 = vpop.permute.xlu0 %2026
        %2028 = vrot.lane.b32.xlu0 %v1985, 56
        %v2029 = vpop.permute.xlu0 %2028
        %2030 = vrot.lane.b32.xlu0 %v1999, 56
        %v2031 = vpop.permute.xlu0 %2030
        %2032 = vrot.lane.b32.xlu0 %v2009, 56
        %v2033 = vpop.permute.xlu0 %2032
        %vm2046 = vcmask 519616
        %2047 = vst.msk [vmem:[#allocation3] sm:$0xf] %vm2046, %v2011
        %2048 = vst.msk [vmem:[#allocation3 + $0x4] sm:$0xf] %vm2046, %v2013
        %2049 = vst.msk [vmem:[#allocation3 + $0x8] sm:$0xf] %vm2046, %v2015
        %2050 = vst.msk [vmem:[#allocation3 + $0xc] sm:$0xf] %vm2046, %v2017
        %2051 = vst.msk [vmem:[#allocation3 + $0x10] sm:$0xf] %vm2046, %v2019
        %2052 = vst.msk [vmem:[#allocation3 + $0x14] sm:$0xf] %vm2046, %v2021
        %2053 = vst.msk [vmem:[#allocation3 + $0x18] sm:$0xf] %vm2046, %v2023
        %2054 = vst.msk [vmem:[#allocation3 + $0x1c] sm:$0xf] %vm2046, %v2025
        %2055 = vst.msk [vmem:[#allocation3 + $0x20] sm:$0xf] %vm2046, %v2027
        %2056 = vst.msk [vmem:[#allocation3 + $0x24] sm:$0xf] %vm2046, %v2029
        %2057 = vst.msk [vmem:[#allocation3 + $0x28] sm:$0xf] %vm2046, %v2031
        %2058 = vst.msk [vmem:[#allocation3 + $0x2c] sm:$0xf] %vm2046, %v2033
        %v2059 = vld [vmem:[%s753] sm:$0xe]
        %v2060 = vld [vmem:[%s753 + $0x4] sm:$0xf]
        %v2061 = vld [vmem:[%s753 + $0x8] sm:$0x1]
        %v2062 = vld [vmem:[%s753 + $0xc] sm:$0xe]
        %v2063 = vld [vmem:[%s753 + $0x10] sm:$0xf]
        %v2064 = vld [vmem:[%s753 + $0x14] sm:$0x1]
        %v2065 = vld [vmem:[%s753 + $0x18] sm:$0xe]
        %v2066 = vld [vmem:[%s753 + $0x1c] sm:$0xf]
        %v2067 = vld [vmem:[%s753 + $0x20] sm:$0x1]
        %v2068 = vld [vmem:[%s753 + $0x24] sm:$0xe]
        %v2069 = vld [vmem:[%s753 + $0x28] sm:$0xf]
        %v2070 = vld [vmem:[%s753 + $0x2c] sm:$0x1]
        %v2071 = vld [vmem:[%s753 + $0x30] sm:$0xe]
        %v2072 = vld [vmem:[%s753 + $0x34] sm:$0xf]
        %v2073 = vld [vmem:[%s753 + $0x38] sm:$0x1]
        %v2074 = vld [vmem:[%s753 + $0x3c] sm:$0xe]
        %v2075 = vld [vmem:[%s753 + $0x40] sm:$0xf]
        %v2076 = vld [vmem:[%s753 + $0x44] sm:$0x1]
        %v2095 = vrot.slane %v2059, 5
        %v2096 = vrot.slane %v2095, 4
        %v2097 = vrot.slane %v2060, 5
        %v2098 = vsel %vm1271, %v2096, %v2097
        %v2099 = vrot.slane %v2097, 4
        %v2100 = vrot.slane %v2061, 5
        %v2101 = vsel %vm1271, %v2099, %v2100
        %v2102 = vrot.slane %v2062, 5
        %v2103 = vrot.slane %v2102, 4
        %v2104 = vrot.slane %v2063, 5
        %v2105 = vsel %vm1271, %v2103, %v2104
        %v2106 = vrot.slane %v2104, 4
        %v2107 = vrot.slane %v2064, 5
        %v2108 = vsel %vm1271, %v2106, %v2107
        %v2109 = vrot.slane %v2065, 5
        %v2110 = vrot.slane %v2109, 4
        %v2111 = vrot.slane %v2066, 5
        %v2112 = vsel %vm1271, %v2110, %v2111
        %v2113 = vrot.slane %v2111, 4
        %v2114 = vrot.slane %v2067, 5
        %v2115 = vsel %vm1271, %v2113, %v2114
        %v2116 = vrot.slane %v2068, 5
        %v2117 = vrot.slane %v2116, 4
        %v2118 = vrot.slane %v2069, 5
        %v2119 = vsel %vm1271, %v2117, %v2118
        %v2120 = vrot.slane %v2118, 4
        %v2121 = vrot.slane %v2070, 5
        %v2122 = vsel %vm1271, %v2120, %v2121
        %v2123 = vrot.slane %v2071, 5
        %v2124 = vrot.slane %v2123, 4
        %v2125 = vrot.slane %v2072, 5
        %v2126 = vsel %vm1271, %v2124, %v2125
        %v2127 = vrot.slane %v2125, 4
        %v2128 = vrot.slane %v2073, 5
        %v2129 = vsel %vm1271, %v2127, %v2128
        %v2130 = vrot.slane %v2074, 5
        %v2131 = vrot.slane %v2130, 4
        %v2132 = vrot.slane %v2075, 5
        %v2133 = vsel %vm1271, %v2131, %v2132
        %v2134 = vrot.slane %v2132, 4
        %v2135 = vrot.slane %v2076, 5
        %v2136 = vsel %vm1271, %v2134, %v2135
        %2137 = vrot.lane.b32.xlu0 %v2098, 64
        %v2138 = vpop.permute.xlu0 %2137
        %2139 = vrot.lane.b32.xlu0 %v2101, 64
        %v2140 = vpop.permute.xlu0 %2139
        %2141 = vrot.lane.b32.xlu0 %v2105, 64
        %v2142 = vpop.permute.xlu0 %2141
        %2143 = vrot.lane.b32.xlu0 %v2108, 64
        %v2144 = vpop.permute.xlu0 %2143
        %2145 = vrot.lane.b32.xlu0 %v2112, 64
        %v2146 = vpop.permute.xlu0 %2145
        %2147 = vrot.lane.b32.xlu0 %v2115, 64
        %v2148 = vpop.permute.xlu0 %2147
        %2149 = vrot.lane.b32.xlu0 %v2119, 64
        %v2150 = vpop.permute.xlu0 %2149
        %2151 = vrot.lane.b32.xlu0 %v2122, 64
        %v2152 = vpop.permute.xlu0 %2151
        %2153 = vrot.lane.b32.xlu0 %v2126, 64
        %v2154 = vpop.permute.xlu0 %2153
        %2155 = vrot.lane.b32.xlu0 %v2129, 64
        %v2156 = vpop.permute.xlu0 %2155
        %2157 = vrot.lane.b32.xlu0 %v2133, 64
        %v2158 = vpop.permute.xlu0 %2157
        %2159 = vrot.lane.b32.xlu0 %v2136, 64
        %v2160 = vpop.permute.xlu0 %2159
        %vm2173 = vcmask 585216
        %2174 = vst.msk [vmem:[#allocation3] sm:$0xf] %vm2173, %v2138
        %2175 = vst.msk [vmem:[#allocation3 + $0x4] sm:$0xf] %vm2173, %v2140
        %2176 = vst.msk [vmem:[#allocation3 + $0x8] sm:$0xf] %vm2173, %v2142
        %2177 = vst.msk [vmem:[#allocation3 + $0xc] sm:$0xf] %vm2173, %v2144
        %2178 = vst.msk [vmem:[#allocation3 + $0x10] sm:$0xf] %vm2173, %v2146
        %2179 = vst.msk [vmem:[#allocation3 + $0x14] sm:$0xf] %vm2173, %v2148
        %2180 = vst.msk [vmem:[#allocation3 + $0x18] sm:$0xf] %vm2173, %v2150
        %2181 = vst.msk [vmem:[#allocation3 + $0x1c] sm:$0xf] %vm2173, %v2152
        %2182 = vst.msk [vmem:[#allocation3 + $0x20] sm:$0xf] %vm2173, %v2154
        %2183 = vst.msk [vmem:[#allocation3 + $0x24] sm:$0xf] %vm2173, %v2156
        %2184 = vst.msk [vmem:[#allocation3 + $0x28] sm:$0xf] %vm2173, %v2158
        %2185 = vst.msk [vmem:[#allocation3 + $0x2c] sm:$0xf] %vm2173, %v2160
        %v2186 = vld [vmem:[#allocation3] sm:$0xf]
        %v2187 = vld [vmem:[#allocation3 + $0x4] sm:$0xf]
        %v2188 = vld [vmem:[#allocation3 + $0x8] sm:$0xf]
        %v2189 = vld [vmem:[#allocation3 + $0xc] sm:$0xf]
        %v2190 = vld [vmem:[#allocation3 + $0x10] sm:$0xf]
        %v2191 = vld [vmem:[#allocation3 + $0x14] sm:$0xf]
        %v2192 = vld [vmem:[#allocation3 + $0x18] sm:$0xf]
        %v2193 = vld [vmem:[#allocation3 + $0x1c] sm:$0xf]
        %v2194 = vld [vmem:[#allocation3 + $0x20] sm:$0xf]
        %v2195 = vld [vmem:[#allocation3 + $0x24] sm:$0xf]
        %v2196 = vld [vmem:[#allocation3 + $0x28] sm:$0xf]
        %v2197 = vld [vmem:[#allocation3 + $0x2c] sm:$0xf]
        %v2198 = vld [vmem:[%s5] sm:$0xf]
        %v2199 = vld [vmem:[%s5 + $0x4] sm:$0xf]
        %v2200 = vld [vmem:[%s5 + $0x8] sm:$0xf]
        %v2201 = vld [vmem:[%s5 + $0xc] sm:$0xf]
        %v2202 = vld [vmem:[%s5 + $0x10] sm:$0xf]
        %v2203 = vld [vmem:[%s5 + $0x14] sm:$0xf]
        %v2204 = vld [vmem:[%s5 + $0x18] sm:$0xf]
        %v2205 = vld [vmem:[%s5 + $0x1c] sm:$0xf]
        %v2206 = vld [vmem:[%s5 + $0x20] sm:$0xf]
        %v2219 = vunpack.c.l.b16 %v2186
        %v2220 = vunpack.c.l.b16 %v2187
        %v2221 = vunpack.c.l.b16 %v2188
        %v2222 = vunpack.c.l.b16 %v2189
        %v2223 = vunpack.c.l.b16 %v2190
        %v2224 = vunpack.c.l.b16 %v2191
        %v2225 = vunpack.c.l.b16 %v2192
        %v2226 = vunpack.c.l.b16 %v2193
        %v2227 = vunpack.c.l.b16 %v2194
        %v2228 = vunpack.c.l.b16 %v2195
        %v2229 = vunpack.c.l.b16 %v2196
        %v2230 = vunpack.c.l.b16 %v2197
        %v2231 = vpack.c.b16 %v2220, %v2219
        %v2232 = vpack.c.b16 %v2222, %v2221
        %v2233 = vpack.c.b16 %v2224, %v2223
        %v2234 = vpack.c.b16 %v2226, %v2225
        %v2235 = vpack.c.b16 %v2228, %v2227
        %v2236 = vpack.c.b16 %v2230, %v2229
        %v2246 = vunpack.c.l.b16 %v2198
        %v2247 = vunpack.c.l.b16 %v2199
        %v2248 = vunpack.c.l.b16 %v2200
        %v2249 = vunpack.c.l.b16 %v2201
        %v2250 = vunpack.c.l.b16 %v2202
        %v2251 = vunpack.c.l.b16 %v2203
        %v2252 = vunpack.c.l.b16 %v2204
        %v2253 = vunpack.c.l.b16 %v2205
        %v2254 = vunpack.c.l.b16 %v2206
        %v2255 = vpack.c.b16 %v2247, %v2246
        %v2256 = vpack.c.b16 %v2249, %v2248
        %v2257 = vpack.c.b16 %v2251, %v2250
        %v2258 = vpack.c.b16 %v2253, %v2252
        %v2259 = vpack.c.b16 %v2254, %v2254
        %vm2264 = vcmask 588800
        %v2266 = vsel %vm2264, %v2231, 0
        %v2269 = vsel %vm2264, %v2232, 0
        %v2272 = vsel %vm2264, %v2233, 0
        %v2275 = vsel %vm2264, %v2234, 0
        %v2278 = vsel %vm2264, %v2235, 0
        %v2281 = vsel %vm2264, %v2236, 0
        %vm2283 = vcmask 1043456
        %v2285 = vsel %vm2283, %v2259, 0
        %2287 = vmatpush.bf16.msra.mxu0 0
        %2288 = vmatpush.bf16.msra.mxu0 0
        %2289 = vmatpush.bf16.msra.mxu0 0
        %2290 = vmatpush.bf16.msra.mxu0 %v2285
        %2291 = vmatpush.bf16.msra.mxu0 %v2258
        %2292 = vmatpush.bf16.msra.mxu0 %v2257
        %2293 = vmatpush.bf16.msra.mxu0 %v2256
        %2294 = vmatpush.bf16.msra.mxu0 %v2255
        %2295 = vmatmul.bf16.gmra.mxu0 %v2266
        %v2296 = vpop.f32.mrf.mxu0
        %v2297 = vadd.f32 0.0, %v2296
        %v2298 = vpop.f32.mrf.mxu0
        %v2299 = vadd.f32 0.0, %v2298
        %2300 = vmatmul.bf16.gmra.mxu0 %v2269
        %v2301 = vpop.f32.mrf.mxu0
        %v2302 = vadd.f32 0.0, %v2301
        %v2303 = vpop.f32.mrf.mxu0
        %v2304 = vadd.f32 0.0, %v2303
        %2305 = vmatmul.bf16.gmra.mxu0 %v2272
        %v2306 = vpop.f32.mrf.mxu0
        %v2307 = vadd.f32 0.0, %v2306
        %v2308 = vpop.f32.mrf.mxu0
        %v2309 = vadd.f32 0.0, %v2308
        %2310 = vmatmul.bf16.gmra.mxu0 %v2275
        %v2311 = vpop.f32.mrf.mxu0
        %v2312 = vadd.f32 0.0, %v2311
        %v2313 = vpop.f32.mrf.mxu0
        %v2314 = vadd.f32 0.0, %v2313
        %2315 = vmatmul.bf16.gmra.mxu0 %v2278
        %v2316 = vpop.f32.mrf.mxu0
        %v2317 = vadd.f32 0.0, %v2316
        %v2318 = vpop.f32.mrf.mxu0
        %v2319 = vadd.f32 0.0, %v2318
        %2320 = vmatmul.bf16.gmra.mxu0 %v2281
        %v2321 = vpop.f32.mrf.mxu0
        %v2322 = vadd.f32 0.0, %v2321
        %v2323 = vpop.f32.mrf.mxu0
        %v2324 = vadd.f32 0.0, %v2323
        %2325 = vdwg.mxu0
        %v2326 = vld [vmem:[%s6] sm:$0x1]
        %v2328 = vperm.slane %v2326, 0
        %v2330 = vmul.f32 %v2297, %v2328
        %v2331 = vmul.f32 %v2299, %v2328
        %v2332 = vmul.f32 %v2302, %v2328
        %v2333 = vmul.f32 %v2304, %v2328
        %v2334 = vmul.f32 %v2307, %v2328
        %v2335 = vmul.f32 %v2309, %v2328
        %v2336 = vmul.f32 %v2312, %v2328
        %v2337 = vmul.f32 %v2314, %v2328
        %v2338 = vmul.f32 %v2317, %v2328
        %v2339 = vmul.f32 %v2319, %v2328
        %v2340 = vmul.f32 %v2322, %v2328
        %v2341 = vmul.f32 %v2324, %v2328
        %v2342 = vld [vmem:[%s7] sm:$0x1]
        %v2344 = vperm.slane %v2342, 0
        %v2346 = vadd.f32 %v2330, %v2344
        %v2347 = vadd.f32 %v2331, %v2344
        %v2348 = vadd.f32 %v2332, %v2344
        %v2349 = vadd.f32 %v2333, %v2344
        %v2350 = vadd.f32 %v2334, %v2344
        %v2351 = vadd.f32 %v2335, %v2344
        %v2352 = vadd.f32 %v2336, %v2344
        %v2353 = vadd.f32 %v2337, %v2344
        %v2354 = vadd.f32 %v2338, %v2344
        %v2355 = vadd.f32 %v2339, %v2344
        %v2356 = vadd.f32 %v2340, %v2344
        %v2357 = vadd.f32 %v2341, %v2344
        %v2358 = vmax.f32 %v2346, 0.0
        %v2359 = vmax.f32 %v2347, 0.0
        %v2360 = vmax.f32 %v2348, 0.0
        %v2361 = vmax.f32 %v2349, 0.0
        %v2362 = vmax.f32 %v2350, 0.0
        %v2363 = vmax.f32 %v2351, 0.0
        %v2364 = vmax.f32 %v2352, 0.0
        %v2365 = vmax.f32 %v2353, 0.0
        %v2366 = vmax.f32 %v2354, 0.0
        %v2367 = vmax.f32 %v2355, 0.0
        %v2368 = vmax.f32 %v2356, 0.0
        %v2369 = vmax.f32 %v2357, 0.0
        %v2370 = vpack.c.bf16 %v2359, %v2358
        %v2371 = vpack.c.bf16 %v2361, %v2360
        %v2372 = vpack.c.bf16 %v2363, %v2362
        %v2373 = vpack.c.bf16 %v2365, %v2364
        %v2374 = vpack.c.bf16 %v2367, %v2366
        %v2375 = vpack.c.bf16 %v2369, %v2368
        %v2376 = vld [vmem:[%s8] sm:$0xf]
        %v2377 = vld [vmem:[%s8 + $0x4] sm:$0xf]
        %v2378 = vld [vmem:[%s9] sm:$0x1]
        %v2380 = vperm.slane %v2378, 0
        %v2384 = vunpack.c.l.b16 %v2376
        %v2385 = vunpack.c.l.b16 %v2377
        %v2386 = vpack.c.b16 %v2385, %v2384
        %vm2388 = vcmask 130048
        %v2390 = vsel %vm2388, %v2370, 0
        %v2393 = vsel %vm2388, %v2371, 0
        %v2396 = vsel %vm2388, %v2372, 0
        %v2399 = vsel %vm2388, %v2373, 0
        %v2402 = vsel %vm2388, %v2374, 0
        %v2405 = vsel %vm2388, %v2375, 0
        %2407 = vmatpush.bf16.msra.mxu0 0
        %2408 = vmatpush.bf16.msra.mxu0 0
        %2409 = vmatpush.bf16.msra.mxu0 0
        %2410 = vmatpush.bf16.msra.mxu0 0
        %2411 = vmatpush.bf16.msra.mxu0 0
        %2412 = vmatpush.bf16.msra.mxu0 0
        %2413 = vmatpush.bf16.msra.mxu0 0
        %2414 = vmatpush.bf16.msra.mxu0 %v2386
        %2415 = vmatmul.bf16.gmra.mxu0 %v2390
        %v2416 = vpop.f32.mrf.mxu0
        %v2417 = vadd.f32 %v2380, %v2416
        %v2418 = vpop.f32.mrf.mxu0
        %v2419 = vadd.f32 %v2380, %v2418
        %2420 = vmatmul.bf16.gmra.mxu0 %v2393
        %v2421 = vpop.f32.mrf.mxu0
        %v2422 = vadd.f32 %v2380, %v2421
        %v2423 = vpop.f32.mrf.mxu0
        %v2424 = vadd.f32 %v2380, %v2423
        %2425 = vmatmul.bf16.gmra.mxu0 %v2396
        %v2426 = vpop.f32.mrf.mxu0
        %v2427 = vadd.f32 %v2380, %v2426
        %v2428 = vpop.f32.mrf.mxu0
        %v2429 = vadd.f32 %v2380, %v2428
        %2430 = vmatmul.bf16.gmra.mxu0 %v2399
        %v2431 = vpop.f32.mrf.mxu0
        %v2432 = vadd.f32 %v2380, %v2431
        %v2433 = vpop.f32.mrf.mxu0
        %v2434 = vadd.f32 %v2380, %v2433
        %2435 = vmatmul.bf16.gmra.mxu0 %v2402
        %v2436 = vpop.f32.mrf.mxu0
        %v2437 = vadd.f32 %v2380, %v2436
        %v2438 = vpop.f32.mrf.mxu0
        %v2439 = vadd.f32 %v2380, %v2438
        %2440 = vmatmul.bf16.gmra.mxu0 %v2405
        %v2441 = vpop.f32.mrf.mxu0
        %v2442 = vadd.f32 %v2380, %v2441
        %v2443 = vpop.f32.mrf.mxu0
        %v2444 = vadd.f32 %v2380, %v2443
        %2445 = vdwg.mxu0
        %vm2458 = vcmask 1040384
        %v2459 = vrot.slane %v2417, 7
        %v2460 = vrot.slane %v2419, 7
        %v2461 = vsel %vm2458, %v2459, %v2460
        %v2462 = vrot.slane %v2422, 7
        %v2463 = vrot.slane %v2424, 7
        %v2464 = vsel %vm2458, %v2462, %v2463
        %v2465 = vrot.slane %v2427, 7
        %v2466 = vrot.slane %v2429, 7
        %v2467 = vsel %vm2458, %v2465, %v2466
        %v2468 = vrot.slane %v2432, 7
        %v2469 = vrot.slane %v2434, 7
        %v2470 = vsel %vm2458, %v2468, %v2469
        %v2471 = vrot.slane %v2437, 7
        %v2472 = vrot.slane %v2439, 7
        %v2473 = vsel %vm2458, %v2471, %v2472
        %v2474 = vrot.slane %v2442, 7
        %v2475 = vrot.slane %v2444, 7
        %v2476 = vsel %vm2458, %v2474, %v2475
        %v2489 = vsel %vm2458, %v2417, %v2459
        %v2490 = vsel %vm2458, %v2422, %v2462
        %v2491 = vsel %vm2458, %v2427, %v2465
        %v2492 = vsel %vm2458, %v2432, %v2468
        %v2493 = vsel %vm2458, %v2437, %v2471
        %v2494 = vsel %vm2458, %v2442, %v2474
        %vm2495 = vcmask 1046528
        %v2496 = vrot.slane %v2417, 1
        %v2497 = vrot.slane %v2419, 1
        %v2498 = vsel %vm2495, %v2496, %v2497
        %v2499 = vrot.slane %v2422, 1
        %v2500 = vrot.slane %v2424, 1
        %v2501 = vsel %vm2495, %v2499, %v2500
        %v2502 = vrot.slane %v2427, 1
        %v2503 = vrot.slane %v2429, 1
        %v2504 = vsel %vm2495, %v2502, %v2503
        %v2505 = vrot.slane %v2432, 1
        %v2506 = vrot.slane %v2434, 1
        %v2507 = vsel %vm2495, %v2505, %v2506
        %v2508 = vrot.slane %v2437, 1
        %v2509 = vrot.slane %v2439, 1
        %v2510 = vsel %vm2495, %v2508, %v2509
        %v2511 = vrot.slane %v2442, 1
        %v2512 = vrot.slane %v2444, 1
        %v2513 = vsel %vm2495, %v2511, %v2512
        %v2526 = vsel %vm2495, %v2497, %v2419
        %v2527 = vsel %vm2495, %v2500, %v2424
        %v2528 = vsel %vm2495, %v2503, %v2429
        %v2529 = vsel %vm2495, %v2506, %v2434
        %v2530 = vsel %vm2495, %v2509, %v2439
        %v2531 = vsel %vm2495, %v2512, %v2444
        %v2532 = vmul.f32 %v2489, 0.25
        %v2533 = vmul.f32 %v2461, 0.25
        %v2534 = vmul.f32 %v2490, 0.25
        %v2535 = vmul.f32 %v2464, 0.25
        %v2536 = vmul.f32 %v2491, 0.25
        %v2537 = vmul.f32 %v2467, 0.25
        %v2538 = vmul.f32 %v2492, 0.25
        %v2539 = vmul.f32 %v2470, 0.25
        %v2540 = vmul.f32 %v2493, 0.25
        %v2541 = vmul.f32 %v2473, 0.25
        %v2542 = vmul.f32 %v2494, 0.25
        %v2543 = vmul.f32 %v2476, 0.25
        %v2544 = vmul.f32 %v2417, 0.75
        %v2545 = vmul.f32 %v2419, 0.75
        %v2546 = vmul.f32 %v2422, 0.75
        %v2547 = vmul.f32 %v2424, 0.75
        %v2548 = vmul.f32 %v2427, 0.75
        %v2549 = vmul.f32 %v2429, 0.75
        %v2550 = vmul.f32 %v2432, 0.75
        %v2551 = vmul.f32 %v2434, 0.75
        %v2552 = vmul.f32 %v2437, 0.75
        %v2553 = vmul.f32 %v2439, 0.75
        %v2554 = vmul.f32 %v2442, 0.75
        %v2555 = vmul.f32 %v2444, 0.75
        %v2556 = vadd.f32 %v2532, %v2544
        %v2557 = vadd.f32 %v2533, %v2545
        %v2558 = vadd.f32 %v2534, %v2546
        %v2559 = vadd.f32 %v2535, %v2547
        %v2560 = vadd.f32 %v2536, %v2548
        %v2561 = vadd.f32 %v2537, %v2549
        %v2562 = vadd.f32 %v2538, %v2550
        %v2563 = vadd.f32 %v2539, %v2551
        %v2564 = vadd.f32 %v2540, %v2552
        %v2565 = vadd.f32 %v2541, %v2553
        %v2566 = vadd.f32 %v2542, %v2554
        %v2567 = vadd.f32 %v2543, %v2555
        %v2568 = vmul.f32 %v2498, 0.25
        %v2569 = vmul.f32 %v2526, 0.25
        %v2570 = vmul.f32 %v2501, 0.25
        %v2571 = vmul.f32 %v2527, 0.25
        %v2572 = vmul.f32 %v2504, 0.25
        %v2573 = vmul.f32 %v2528, 0.25
        %v2574 = vmul.f32 %v2507, 0.25
        %v2575 = vmul.f32 %v2529, 0.25
        %v2576 = vmul.f32 %v2510, 0.25
        %v2577 = vmul.f32 %v2530, 0.25
        %v2578 = vmul.f32 %v2513, 0.25
        %v2579 = vmul.f32 %v2531, 0.25
        %v2580 = vadd.f32 %v2544, %v2568
        %v2581 = vadd.f32 %v2545, %v2569
        %v2582 = vadd.f32 %v2546, %v2570
        %v2583 = vadd.f32 %v2547, %v2571
        %v2584 = vadd.f32 %v2548, %v2572
        %v2585 = vadd.f32 %v2549, %v2573
        %v2586 = vadd.f32 %v2550, %v2574
        %v2587 = vadd.f32 %v2551, %v2575
        %v2588 = vadd.f32 %v2552, %v2576
        %v2589 = vadd.f32 %v2553, %v2577
        %v2590 = vadd.f32 %v2554, %v2578
        %v2591 = vadd.f32 %v2555, %v2579
        %2604 = vrot.lane.b32.xlu0 %v2580, 4
        %v2605 = vpop.permute.xlu0 %2604
        %2606 = vrot.lane.b32.xlu0 %v2581, 4
        %v2607 = vpop.permute.xlu0 %2606
        %2608 = vrot.lane.b32.xlu0 %v2582, 4
        %v2609 = vpop.permute.xlu0 %2608
        %2610 = vrot.lane.b32.xlu0 %v2583, 4
        %v2611 = vpop.permute.xlu0 %2610
        %2612 = vrot.lane.b32.xlu0 %v2584, 4
        %v2613 = vpop.permute.xlu0 %2612
        %2614 = vrot.lane.b32.xlu0 %v2585, 4
        %v2615 = vpop.permute.xlu0 %2614
        %2616 = vrot.lane.b32.xlu0 %v2586, 4
        %v2617 = vpop.permute.xlu0 %2616
        %2618 = vrot.lane.b32.xlu0 %v2587, 4
        %v2619 = vpop.permute.xlu0 %2618
        %2620 = vrot.lane.b32.xlu0 %v2588, 4
        %v2621 = vpop.permute.xlu0 %2620
        %2622 = vrot.lane.b32.xlu0 %v2589, 4
        %v2623 = vpop.permute.xlu0 %2622
        %2624 = vrot.lane.b32.xlu0 %v2590, 4
        %v2625 = vpop.permute.xlu0 %2624
        %2626 = vrot.lane.b32.xlu0 %v2591, 4
        %v2627 = vpop.permute.xlu0 %2626
        %vm2640 = vcmask 31744
        %v2641 = vsel %vm2640, %v2556, %v2605
        %v2642 = vsel %vm2640, %v2557, %v2607
        %v2643 = vsel %vm2640, %v2558, %v2609
        %v2644 = vsel %vm2640, %v2559, %v2611
        %v2645 = vsel %vm2640, %v2560, %v2613
        %v2646 = vsel %vm2640, %v2561, %v2615
        %v2647 = vsel %vm2640, %v2562, %v2617
        %v2648 = vsel %vm2640, %v2563, %v2619
        %v2649 = vsel %vm2640, %v2564, %v2621
        %v2650 = vsel %vm2640, %v2565, %v2623
        %v2651 = vsel %vm2640, %v2566, %v2625
        %v2652 = vsel %vm2640, %v2567, %v2627
        %v2653 = vrot.slane %v2645, 4
        %vm2654 = vcmask 1047556
        %v2655 = vsel %vm2654, %v2653, %v2641
        %v2656 = vrot.slane %v2641, 4
        %v2657 = vsel %vm2654, %v2645, %v2656
        %v2659 = vunpack.c.l.s4 1983009808
        %v2660 = vunpack.c.0.s8 %v2659
        %v2661 = vperm.slane %v2655, %v2660
        %v2663 = vunpack.c.l.s4 1983009808
        %v2664 = vunpack.c.0.s8 %v2663
        %v2665 = vperm.slane %v2657, %v2664
        %v2666 = vrot.slane %v2647, 4
        %v2667 = vsel %vm2654, %v2666, %v2643
        %v2668 = vrot.slane %v2643, 4
        %v2669 = vsel %vm2654, %v2647, %v2668
        %v2671 = vunpack.c.l.s4 1983009808
        %v2672 = vunpack.c.0.s8 %v2671
        %v2673 = vperm.slane %v2667, %v2672
        %v2675 = vunpack.c.l.s4 1983009808
        %v2676 = vunpack.c.0.s8 %v2675
        %v2677 = vperm.slane %v2669, %v2676
        %v2678 = vrot.slane %v2649, 4
        %v2679 = vsel %vm2654, 0.0, %v2678
        %v2681 = vunpack.c.l.s4 1983009808
        %v2682 = vunpack.c.0.s8 %v2681
        %v2683 = vperm.slane %v2649, %v2682
        %v2685 = vunpack.c.l.s4 1983009808
        %v2686 = vunpack.c.0.s8 %v2685
        %v2687 = vperm.slane %v2679, %v2686
        %v2688 = vrot.slane %v2651, 4
        %v2689 = vsel %vm2654, 0.0, %v2688
        %v2691 = vunpack.c.l.s4 1983009808
        %v2692 = vunpack.c.0.s8 %v2691
        %v2693 = vperm.slane %v2651, %v2692
        %v2695 = vunpack.c.l.s4 1983009808
        %v2696 = vunpack.c.0.s8 %v2695
        %v2697 = vperm.slane %v2689, %v2696
        %v2698 = vrot.slane %v2673, 4
        %v2699 = vsel %vm2654, %v2698, %v2661
        %v2700 = vrot.slane %v2661, 4
        %v2701 = vsel %vm2654, %v2673, %v2700
        %v2703 = vunpack.c.l.s4 1934713408
        %v2704 = vunpack.c.0.s8 %v2703
        %v2705 = vperm.slane %v2699, %v2704
        %v2707 = vunpack.c.l.s4 1934713408
        %v2708 = vunpack.c.0.s8 %v2707
        %v2709 = vperm.slane %v2701, %v2708
        %v2710 = vrot.slane %v2677, 4
        %v2711 = vsel %vm2654, %v2710, %v2665
        %v2712 = vrot.slane %v2665, 4
        %v2713 = vsel %vm2654, %v2677, %v2712
        %v2715 = vunpack.c.l.s4 1934713408
        %v2716 = vunpack.c.0.s8 %v2715
        %v2717 = vperm.slane %v2711, %v2716
        %v2719 = vunpack.c.l.s4 1934713408
        %v2720 = vunpack.c.0.s8 %v2719
        %v2721 = vperm.slane %v2713, %v2720
        %v2722 = vrot.slane %v2693, 4
        %v2723 = vsel %vm2654, %v2722, %v2683
        %v2724 = vrot.slane %v2683, 4
        %v2725 = vsel %vm2654, %v2693, %v2724
        %v2727 = vunpack.c.l.s4 1934713408
        %v2728 = vunpack.c.0.s8 %v2727
        %v2729 = vperm.slane %v2723, %v2728
        %v2731 = vunpack.c.l.s4 1934713408
        %v2732 = vunpack.c.0.s8 %v2731
        %v2733 = vperm.slane %v2725, %v2732
        %v2734 = vrot.slane %v2697, 4
        %v2735 = vsel %vm2654, %v2734, %v2687
        %v2736 = vrot.slane %v2687, 4
        %v2737 = vsel %vm2654, %v2697, %v2736
        %v2739 = vunpack.c.l.s4 1934713408
        %v2740 = vunpack.c.0.s8 %v2739
        %v2741 = vperm.slane %v2735, %v2740
        %v2743 = vunpack.c.l.s4 1934713408
        %v2744 = vunpack.c.0.s8 %v2743
        %v2745 = vperm.slane %v2737, %v2744
        %v2746 = vrot.slane %v2729, 4
        %v2747 = vsel %vm2654, %v2746, %v2705
        %v2748 = vrot.slane %v2705, 4
        %v2749 = vsel %vm2654, %v2729, %v2748
        %v2750 = vrot.slane %v2733, 4
        %v2751 = vsel %vm2654, %v2750, %v2709
        %v2752 = vrot.slane %v2709, 4
        %v2753 = vsel %vm2654, %v2733, %v2752
        %v2754 = vrot.slane %v2741, 4
        %v2755 = vsel %vm2654, %v2754, %v2717
        %v2756 = vrot.slane %v2717, 4
        %v2757 = vsel %vm2654, %v2741, %v2756
        %v2758 = vrot.slane %v2745, 4
        %v2759 = vsel %vm2654, %v2758, %v2721
        %v2760 = vrot.slane %v2721, 4
        %v2761 = vsel %vm2654, %v2745, %v2760
        %v2762 = vrot.slane %v2646, 4
        %v2763 = vsel %vm2654, %v2762, %v2642
        %v2764 = vrot.slane %v2642, 4
        %v2765 = vsel %vm2654, %v2646, %v2764
        %v2767 = vunpack.c.l.s4 1983009808
        %v2768 = vunpack.c.0.s8 %v2767
        %v2769 = vperm.slane %v2763, %v2768
        %v2771 = vunpack.c.l.s4 1983009808
        %v2772 = vunpack.c.0.s8 %v2771
        %v2773 = vperm.slane %v2765, %v2772
        %v2774 = vrot.slane %v2648, 4
        %v2775 = vsel %vm2654, %v2774, %v2644
        %v2776 = vrot.slane %v2644, 4
        %v2777 = vsel %vm2654, %v2648, %v2776
        %v2779 = vunpack.c.l.s4 1983009808
        %v2780 = vunpack.c.0.s8 %v2779
        %v2781 = vperm.slane %v2775, %v2780
        %v2783 = vunpack.c.l.s4 1983009808
        %v2784 = vunpack.c.0.s8 %v2783
        %v2785 = vperm.slane %v2777, %v2784
        %v2786 = vrot.slane %v2650, 4
        %v2787 = vsel %vm2654, 0.0, %v2786
        %v2789 = vunpack.c.l.s4 1983009808
        %v2790 = vunpack.c.0.s8 %v2789
        %v2791 = vperm.slane %v2650, %v2790
        %v2793 = vunpack.c.l.s4 1983009808
        %v2794 = vunpack.c.0.s8 %v2793
        %v2795 = vperm.slane %v2787, %v2794
        %v2796 = vrot.slane %v2652, 4
        %v2797 = vsel %vm2654, 0.0, %v2796
        %v2799 = vunpack.c.l.s4 1983009808
        %v2800 = vunpack.c.0.s8 %v2799
        %v2801 = vperm.slane %v2652, %v2800
        %v2803 = vunpack.c.l.s4 1983009808
        %v2804 = vunpack.c.0.s8 %v2803
        %v2805 = vperm.slane %v2797, %v2804
        %v2806 = vrot.slane %v2781, 4
        %v2807 = vsel %vm2654, %v2806, %v2769
        %v2808 = vrot.slane %v2769, 4
        %v2809 = vsel %vm2654, %v2781, %v2808
        %v2811 = vunpack.c.l.s4 1934713408
        %v2812 = vunpack.c.0.s8 %v2811
        %v2813 = vperm.slane %v2807, %v2812
        %v2815 = vunpack.c.l.s4 1934713408
        %v2816 = vunpack.c.0.s8 %v2815
        %v2817 = vperm.slane %v2809, %v2816
        %v2818 = vrot.slane %v2785, 4
        %v2819 = vsel %vm2654, %v2818, %v2773
        %v2820 = vrot.slane %v2773, 4
        %v2821 = vsel %vm2654, %v2785, %v2820
        %v2823 = vunpack.c.l.s4 1934713408
        %v2824 = vunpack.c.0.s8 %v2823
        %v2825 = vperm.slane %v2819, %v2824
        %v2827 = vunpack.c.l.s4 1934713408
        %v2828 = vunpack.c.0.s8 %v2827
        %v2829 = vperm.slane %v2821, %v2828
        %v2830 = vrot.slane %v2801, 4
        %v2831 = vsel %vm2654, %v2830, %v2791
        %v2832 = vrot.slane %v2791, 4
        %v2833 = vsel %vm2654, %v2801, %v2832
        %v2835 = vunpack.c.l.s4 1934713408
        %v2836 = vunpack.c.0.s8 %v2835
        %v2837 = vperm.slane %v2831, %v2836
        %v2839 = vunpack.c.l.s4 1934713408
        %v2840 = vunpack.c.0.s8 %v2839
        %v2841 = vperm.slane %v2833, %v2840
        %v2842 = vrot.slane %v2805, 4
        %v2843 = vsel %vm2654, %v2842, %v2795
        %v2844 = vrot.slane %v2795, 4
        %v2845 = vsel %vm2654, %v2805, %v2844
        %v2847 = vunpack.c.l.s4 1934713408
        %v2848 = vunpack.c.0.s8 %v2847
        %v2849 = vperm.slane %v2843, %v2848
        %v2851 = vunpack.c.l.s4 1934713408
        %v2852 = vunpack.c.0.s8 %v2851
        %v2853 = vperm.slane %v2845, %v2852
        %v2854 = vrot.slane %v2837, 4
        %v2855 = vsel %vm2654, %v2854, %v2813
        %v2856 = vrot.slane %v2813, 4
        %v2857 = vsel %vm2654, %v2837, %v2856
        %v2858 = vrot.slane %v2841, 4
        %v2859 = vsel %vm2654, %v2858, %v2817
        %v2860 = vrot.slane %v2817, 4
        %v2861 = vsel %vm2654, %v2841, %v2860
        %v2862 = vrot.slane %v2849, 4
        %v2863 = vsel %vm2654, %v2862, %v2825
        %v2864 = vrot.slane %v2825, 4
        %v2865 = vsel %vm2654, %v2849, %v2864
        %v2866 = vrot.slane %v2853, 4
        %v2867 = vsel %vm2654, %v2866, %v2829
        %v2868 = vrot.slane %v2829, 4
        %v2869 = vsel %vm2654, %v2853, %v2868
        %2871 = vrot.lane.b32.xlu0 %v2749, 8
        %v2872 = vpop.permute.xlu0 %2871
        %2875 = vrot.lane.b32.xlu0 %v2751, 16
        %v2876 = vpop.permute.xlu0 %2875
        %2879 = vrot.lane.b32.xlu0 %v2753, 24
        %v2880 = vpop.permute.xlu0 %2879
        %2883 = vrot.lane.b32.xlu0 %v2755, 32
        %v2884 = vpop.permute.xlu0 %2883
        %2887 = vrot.lane.b32.xlu0 %v2757, 40
        %v2888 = vpop.permute.xlu0 %2887
        %2891 = vrot.lane.b32.xlu0 %v2759, 48
        %v2892 = vpop.permute.xlu0 %2891
        %2895 = vrot.lane.b32.xlu0 %v2761, 56
        %v2896 = vpop.permute.xlu0 %2895
        %2899 = vrot.lane.b32.xlu0 %v2855, 64
        %v2900 = vpop.permute.xlu0 %2899
        %2903 = vrot.lane.b32.xlu0 %v2857, 72
        %v2904 = vpop.permute.xlu0 %2903
        %2907 = vrot.lane.b32.xlu0 %v2859, 80
        %v2908 = vpop.permute.xlu0 %2907
        %2911 = vrot.lane.b32.xlu0 %v2861, 88
        %v2912 = vpop.permute.xlu0 %2911
        %2915 = vrot.lane.b32.xlu0 %v2863, 96
        %v2916 = vpop.permute.xlu0 %2915
        %2919 = vrot.lane.b32.xlu0 %v2865, 104
        %v2920 = vpop.permute.xlu0 %2919
        %2923 = vrot.lane.b32.xlu0 %v2867, 112
        %v2924 = vpop.permute.xlu0 %2923
        %2927 = vrot.lane.b32.xlu0 %v2869, 120
        %v2928 = vpop.permute.xlu0 %2927
        %vm2930 = vcmask 64512
        %v2931 = vsel %vm2930, %v2747, %v2872
        %v2932 = vsel %vm2388, %v2931, %v2876
        %vm2933 = vcmask 195584
        %v2934 = vsel %vm2933, %v2932, %v2880
        %vm2935 = vcmask 261120
        %v2936 = vsel %vm2935, %v2934, %v2884
        %vm2937 = vcmask 326656
        %v2938 = vsel %vm2937, %v2936, %v2888
        %vm2939 = vcmask 392192
        %v2940 = vsel %vm2939, %v2938, %v2892
        %vm2941 = vcmask 457728
        %v2942 = vsel %vm2941, %v2940, %v2896
        %vm2943 = vcmask 523264
        %v2944 = vsel %vm2943, %v2942, %v2900
        %v2945 = vsel %vm2264, %v2944, %v2904
        %vm2946 = vcmask 654336
        %v2947 = vsel %vm2946, %v2945, %v2908
        %vm2948 = vcmask 719872
        %v2949 = vsel %vm2948, %v2947, %v2912
        %vm2950 = vcmask 785408
        %v2951 = vsel %vm2950, %v2949, %v2916
        %vm2952 = vcmask 850944
        %v2953 = vsel %vm2952, %v2951, %v2920
        %vm2954 = vcmask 916480
        %v2955 = vsel %vm2954, %v2953, %v2924
        %vm2956 = vcmask 982016
        %v2957 = vsel %vm2956, %v2955, %v2928
        %v2958 = vld [vmem:[%s568] sm:$0xf]
        %v2959 = vpack.c.bf16 %v2957, %v2957
        %vm2960 = vcmask 48128
        %v2962 = vsel %vm2960, %v2958, 0
        %vm2964 = vcmask 1042432
        %v2966 = vsel %vm2964, %v2959, 0
        %2968 = vmatpush.bf16.msra.mxu0 0
        %2969 = vmatpush.bf16.msra.mxu0 0
        %2970 = vmatpush.bf16.msra.mxu0 0
        %2971 = vmatpush.bf16.msra.mxu0 0
        %2972 = vmatpush.bf16.msra.mxu0 0
        %2973 = vmatpush.bf16.msra.mxu0 0
        %2974 = vmatpush.bf16.msra.mxu0 0
        %2975 = vmatpush.bf16.msra.mxu0 %v2966
        %2976 = vmatmul.bf16.gmra.mxu0 %v2962
        %v2977 = vpop.f32.mrf.mxu0
        %v2978 = vadd.f32 0.0, %v2977
        %v2979 = vpop.f32.mrf.mxu0
        %2980 = vdwg.mxu0
        %2981 = vst [vmem:[%s515] sm:$0xff] %v2978
        %s2982 = sand.u32 %s320, 1
        %s2983 = scalar_lea.sflag [#allocation5], %s2982
        %s2984 = sand.u32 %s320, 1
        %s2985 = smul.addr %s2984, 8
        %s2986 = scalar_lea.vmem [#allocation4], %s2985
        // Predicated region
        $region81: #{tpu_custom_call.1} parent=63 // pred_check
          %p2987 = pneg %p330
        $region82: #{tpu_custom_call.1} parent=63 // pred_check_branch
          %2989 = sbr.rel (%p2987) target = $region84
        $region83: #{tpu_custom_call.1} parent=63 // pred_region
          %2991 = vsyncadd %s2983, 0
          %s2992 = smul.addr %s29, 4
          %s2993 = sadd.s32 %s30, %s2992
          %s2994 = smul.addr %s2993, 8
          %s2995 = scalar_lea.hbm %s11, %s2994
          %s2997 = sshll.u32 %s2986, 4
          %s2998 = int_to_ptr.vmem [resolvable:$true] %s2997
          %s2999 = sshll.u32 %s2995, 4
          %s3000 = int_to_ptr.hbm [resolvable:$true] %s2999
          %3002 = dma.vmem_to_hbm [thread:$0]  %s2998, 128, %s3000, %s2983
        $region84: #{tpu_custom_call.1} parent=63 // pred_fallthru
          _
      $region64: #{tpu_custom_call.1} parent=5 // pred_fallthru
        _
      %p3003 = scmp.le.s32.totalorder 2, %s20
      // Predicated region
      $region85: #{tpu_custom_call.1} parent=5 // pred_check
        %p3004 = pneg %p3003
      $region86: #{tpu_custom_call.1} parent=5 // pred_check_branch
        %3006 = sbr.rel (%p3004) target = $region88
      $region87: #{tpu_custom_call.1} parent=5 // pred_region
        %s3007 = ssub.s32 %s20, 2
        // Predicated region
        $region89: #{tpu_custom_call.1} parent=87 // pred_check
          %p3008 = pneg %p336
        $region90: #{tpu_custom_call.1} parent=87 // pred_check_branch
          %3010 = sbr.rel (%p3008) target = $region92
        $region91: #{tpu_custom_call.1} parent=87 // pred_region
          %s3011 = sand.u32 %s321, 1
          %s3012 = scalar_lea.sflag [#allocation5], %s3011
          %s3013 = sand.u32 %s321, 1
          %s3014 = smul.addr %s3013, 8
          %s3015 = scalar_lea.vmem [#allocation4], %s3014
          %3017 = dma.done %s3012, 128
        $region92: #{tpu_custom_call.1} parent=87 // pred_fallthru
          _
      $region88: #{tpu_custom_call.1} parent=5 // pred_fallthru
        _
    $region6: #{tpu_custom_call.1} parent=1 // loop_footer
      %s24 = sadd.s32 1, %s20
    $region7: #{tpu_custom_call.1} parent=1 // loop_footer_branch
      %19 = sbr.rel target = $region3
    $region8: #{tpu_custom_call.1} parent=1 // loop_exit
      _
    %3018 = vsyncpa [#allocation5], 1
    %s3019 = scalar_lea.sflag [#allocation5], 1
    %3020 = vsyncpa %s3019, 1

</llo_original>
